<compile_context>
chip_gen: v7x
topology: tpu7x:2x2x1
jax: 0.10.0
libtpu: 0.0.40
codegen_flags: <defaults>
</compile_context>

<pallas_src>
import functools

import jax
import jax.numpy as jnp
from jax.experimental import pallas as pl
from jax.experimental.pallas import tpu as pltpu

_LANE = 128
_CHUNK_ROWS = 64               # strip-mine chunk: (64,128) f32 = 8 vregs / quantity
_TARGET_BLOCK_ROWS = 2048      # ~1 MiB f32 per input per grid step
_MIN_KERNEL_ELEMS = 64 * 1024  # below this a pallas_call is pure launch overhead


def _num_tensorcores():
    """Best-effort TensorCores-per-chip query; defaults to 1 (v5e/v6e)."""
    try:
        info = pltpu.get_tpu_info()
    except Exception:
        return 1
    for attr in ("num_cores", "core_count", "num_tensorcores",
                 "tensorcore_count", "cores_per_chip", "num_cores_per_chip"):
        v = getattr(info, attr, None)
        if isinstance(v, int) and v >= 1:
            return v
    return 1


def _sums_kernel(p_ref, t_ref, out_ref, *, gamma, block_rows):
    """Accumulates four per-lane (8,128) partial sums into out_ref:
       rows  0: 7  -> sum(bce)
       rows  8:15 -> sum(|sigmoid(p)-t|^gamma)
       rows 16:23 -> sum(sigmoid(p)^2)
       rows 24:31 -> sum(t^2)"""
    i = pl.program_id(1)   # block index along the reduction ("arbitrary") axis

    @pl.when(i == 0)
    def _():
        out_ref[...] = jnp.zeros_like(out_ref)

    n_chunks = block_rows // _CHUNK_ROWS

    def chunk_sums(c):
        x = p_ref[pl.ds(c * _CHUNK_ROWS, _CHUNK_ROWS), :].astype(jnp.float32)
        t = t_ref[pl.ds(c * _CHUNK_ROWS, _CHUNK_ROWS), :].astype(jnp.float32)
        e = jnp.exp(-jnp.abs(x))                      # single shared EUP exp
        # numerically stable BCEWithLogits: max(x,0) - x*t + log(1+exp(-|x|))
        bce = jnp.maximum(x, 0.0) - x * t + jnp.log1p(e)
        inv = pl.reciprocal(1.0 + e, approx=True)     # EUP; keeps VALU free
        s = jnp.where(x >= 0.0, inv, e * inv)         # sigmoid(x) from same e
        diff = jnp.abs(s - t)
        if gamma == 1.5:
            powed = diff * jnp.sqrt(diff)             # |.|**1.5, guard-free
        else:
            powed = jnp.where(
                diff > 0.0,
                jnp.exp(gamma * jnp.log(jnp.maximum(diff, 1e-30))),
                0.0)

        def s8(v):  # (chunk,128) -> (8,128) via whole-vreg VPU adds
            return jnp.sum(v.reshape(_CHUNK_ROWS // 8, 8, _LANE), axis=0)

        return s8(bce), s8(powed), s8(s * s), s8(t * t)

    def body(c, carry):
        b, pw, ss, tt = carry
        cb, cp, cs, ct = chunk_sums(c)
        return b + cb, pw + cp, ss + cs, tt + ct

    z = jnp.zeros((8, _LANE), jnp.float32)
    acc_b, acc_p, acc_s, acc_t = jax.lax.fori_loop(
        0, n_chunks, body, (z, z, z, z), unroll=True)

    # output block index is constant across i -> VMEM-resident accumulator
    out_ref[0:8, :] += acc_b
    out_ref[8:16, :] += acc_p
    out_ref[16:24, :] += acc_s
    out_ref[24:32, :] += acc_t


def _jax_sums(pred_flat, target_flat, gamma):
    """Fused pure-JAX fallback for tiny pairs and block-unaligned tails.
       Returns [sum(bce), sum(|s-t|^gamma), sum(s^2), sum(t^2)]."""
    x = pred_flat.astype(jnp.float32)
    t = target_flat.astype(jnp.float32)
    bce = jnp.maximum(x, 0.0) - x * t + jnp.log1p(jnp.exp(-jnp.abs(x)))
    s = jax.nn.sigmoid(x)
    diff = jnp.abs(s - t)
    powed = diff * jnp.sqrt(diff) if gamma == 1.5 else jnp.power(diff, gamma)
    return jnp.stack(
        [jnp.sum(bce), jnp.sum(powed), jnp.sum(s * s), jnp.sum(t * t)])


def _pair_sums(pred, target, gamma):
    """Returns (sums[4], n_elements) for one (pred, target) pair."""
    p = pred.reshape(-1)          # native dtype; upcast happens after the DMA
    t = target.reshape(-1)
    n = p.shape[0]

    if n < _MIN_KERNEL_ELEMS:     # tiny scales: skip the launch entirely
        return _jax_sums(p, t, gamma), n

    rows = n // _LANE
    if rows * _LANE == n:
        p2 = p.reshape(rows, _LANE)        # free bitcast reshape, no copy
        t2 = t.reshape(rows, _LANE)
    else:
        # TODO(synk): non-128-multiple sizes pay one prefix-slice copy.
        p2 = jax.lax.slice(p, (0,), (rows * _LANE,)).reshape(rows, _LANE)
        t2 = jax.lax.slice(t, (0,), (rows * _LANE,)).reshape(rows, _LANE)

    nblocks = pl.cdiv(rows, _TARGET_BLOCK_ROWS)
    n_tc = _num_tensorcores()
    splits = n_tc if (n_tc > 1 and nblocks >= 4) else 1
    if splits > 1:
        nblocks = pl.cdiv(nblocks, splits) * splits
    block_rows = (rows // nblocks // _CHUNK_ROWS) * _CHUNK_ROWS
    if block_rows == 0:                    # defensive; shouldn't happen
        return _jax_sums(p, t, gamma), n
    blocks_per_core = nblocks // splits
    kernel_rows = nblocks * block_rows     # block-aligned prefix handled in-kernel

    kernel = functools.partial(_sums_kernel, gamma=gamma, block_rows=block_rows)
    idx_map = lambda c, i, bpc=blocks_per_core: (c * bpc + i, 0)

    per_core = pl.pallas_call(
        kernel,
        out_shape=jax.ShapeDtypeStruct((splits * 32, _LANE), jnp.float32),
        grid_spec=pltpu.PrefetchScalarGridSpec(
            num_scalar_prefetch=0,
            grid=(splits, blocks_per_core),
            in_specs=[
                pl.BlockSpec((block_rows, _LANE), idx_map),
                pl.BlockSpec((block_rows, _LANE), idx_map),
            ],
            out_specs=pl.BlockSpec((32, _LANE), lambda c, i: (c, 0)),
        ),
        compiler_params=pltpu.CompilerParams(
            dimension_semantics=("parallel", "arbitrary")),
    )(p2, t2)

    # tiny glue reduce: (splits*32,128) -> (4,)
    sums = jnp.sum(per_core.reshape(splits, 4, 8, _LANE), axis=(0, 2, 3))

    kernel_elems = kernel_rows * _LANE
    if kernel_elems < n:                   # block-unaligned tail in JAX glue
        sums = sums + _jax_sums(p[kernel_elems:], t[kernel_elems:], gamma)
    return sums, n


def _pair_loss(pred, target, *, gamma, epsilon, bce_weight, dice_weight):
    sums, n = _pair_sums(pred, target, gamma)
    bce = sums[0] / n                                # BCEWithLogitsLoss (mean)
    dice = sums[1] / (sums[2] + sums[3] + epsilon)   # noise-robust dice
    return bce_weight * bce + dice_weight * dice


def _nearest_resize_nchw(x, out_h, out_w):
    """F.interpolate(mode='nearest') on NCHW via integer index math."""
    _, _, H, W = x.shape
    hi = (jnp.arange(out_h) * H) // out_h
    wi = (jnp.arange(out_w) * W) // out_w
    return x[:, :, hi[:, None], wi[None, :]]


def mssdmpa_loss(outputs, targets, *, gamma=1.5, epsilon=1e-5,
                 bce_weight=1.0, dice_weight=1.0,
                 final_weight=1.0, multiscale_weight=1.0):
    final_output = outputs[0]
    probability_maps = outputs[1:]

    final_loss = _pair_loss(final_output, targets, gamma=gamma, epsilon=epsilon,
                            bce_weight=bce_weight, dice_weight=dice_weight)
    total_loss = final_weight * final_loss

    multiscale_loss = 0.0
    for pred_map in probability_maps:
        th, tw = pred_map.shape[2], pred_map.shape[3]
        target_map = _nearest_resize_nchw(targets, th, tw)
        multiscale_loss = multiscale_loss + _pair_loss(
            pred_map, target_map, gamma=gamma, epsilon=epsilon,
            bce_weight=bce_weight, dice_weight=dice_weight)

    total_loss = total_loss + multiscale_weight * multiscale_loss
    return total_loss


# ---------------- pure-JAX reference (correctness sanity check) -------------

def _ref_pair_loss(pred, target, gamma, epsilon):
    x = pred.reshape(-1).astype(jnp.float32)
    t = target.reshape(-1).astype(jnp.float32)
    bce = jnp.mean(jnp.maximum(x, 0.0) - x * t + jnp.log1p(jnp.exp(-jnp.abs(x))))
    s = jax.nn.sigmoid(x)
    num = jnp.sum(jnp.abs(s - t) ** gamma)
    den = jnp.sum(s * s) + jnp.sum(t * t) + epsilon
    return bce + num / den


def _ref_loss(outputs, targets, gamma=1.5, epsilon=1e-5):
    total = _ref_pair_loss(outputs[0], targets, gamma, epsilon)
    for pm in outputs[1:]:
        tm = _nearest_resize_nchw(targets, pm.shape[2], pm.shape[3])
        total = total + _ref_pair_loss(pm, tm, gamma, epsilon)
    return total


if __name__ == "__main__":
    key = jax.random.PRNGKey(0)
    keys = jax.random.split(key, 12)

    # --- 1) multi-scale test at small shapes (matches the module) -----------
    N, C, H, W = 2, 1, 16, 16
    targets = (jax.random.uniform(keys[0], (N, C, H, W)) > 0.5).astype(jnp.float32)
    final_out = jax.random.normal(keys[1], (N, C, H, W), jnp.float32)
    pmap1 = jax.random.normal(keys[2], (N, C, 8, 8), jnp.float32)
    pmap2 = jax.random.normal(keys[3], (N, C, 4, 4), jnp.float32)
    outputs = [final_out, pmap1, pmap2]

    loss = jax.block_until_ready(mssdmpa_loss(outputs, targets))
    ref = jax.block_until_ready(_ref_loss(outputs, targets))
    assert jnp.isfinite(loss), "loss is not finite"
    assert jnp.allclose(loss, ref, rtol=1e-3, atol=1e-4), (loss, ref)

    # --- 2) end-to-end multi-scale with a kernel-path final scale ------------
    #     184x184 -> 529 full lane rows: 512-row block in-kernel + JAX tail.
    Hb = Wb = 184
    tgt_b = (jax.random.uniform(keys[4], (2, 1, Hb, Wb)) > 0.5).astype(jnp.float32)
    out_b = jax.random.normal(keys[5], (2, 1, Hb, Wb), jnp.float32)
    pm_b = jax.random.normal(keys[6], (2, 1, Hb // 2, Wb // 2), jnp.float32)
    loss_b = jax.block_until_ready(mssdmpa_loss([out_b, pm_b], tgt_b))
    ref_b = jax.block_until_ready(_ref_loss([out_b, pm_b], tgt_b))
    assert jnp.isfinite(loss_b), "medium loss is not finite"
    assert jnp.allclose(loss_b, ref_b, rtol=1e-3, atol=1e-4), (loss_b, ref_b)

    # --- 3) multi-block (and splits-eligible) kernel path --------------------
    #     2*1*640*640 = 819200 elements = 6400 rows -> 4 blocks of 1600 rows.
    Hc = Wc = 640
    tgt_c = (jax.random.uniform(keys[7], (2, 1, Hc, Wc)) > 0.5).astype(jnp.float32)
    out_c = jax.random.normal(keys[8], (2, 1, Hc, Wc), jnp.float32)
    pl_big = jax.block_until_ready(
        _pair_loss(out_c, tgt_c, gamma=1.5, epsilon=1e-5,
                   bce_weight=1.0, dice_weight=1.0))
    ref_big = jax.block_until_ready(_ref_pair_loss(out_c, tgt_c, 1.5, 1e-5))
    assert jnp.isfinite(pl_big), "big-pair loss is not finite"
    assert jnp.allclose(pl_big, ref_big, rtol=1e-3, atol=1e-4), (pl_big, ref_big)

    print("KERNEL_OK")
</pallas_src>

<mosaic_0001>
module attributes {stable_mosaic.version = 11 : i64} {
  func.func @_sums_kernel(%arg0: i32, %arg1: i32, %arg2: memref<512x128xf32, #tpu.memory_space<vmem>>, %arg3: memref<512x128xf32, #tpu.memory_space<vmem>>, %arg4: memref<32x128xf32, #tpu.memory_space<vmem>>) attributes {dimension_semantics = [#tpu.dimension_semantics<parallel>, #tpu.dimension_semantics<arbitrary>], iteration_bounds = array<i64: 1, 1>, scalar_prefetch = 0 : i64, scratch_operands = 0 : i64, tpu.core_type = #tpu.core_type<tc>, window_params = [{transform_indices = @transform_0, window_bounds = array<i64: 512, 128>}, {transform_indices = @transform_1, window_bounds = array<i64: 512, 128>}, {transform_indices = @transform_2, window_bounds = array<i64: 32, 128>}]} {
    %c0_i32 = arith.constant 0 : i32
    %0 = arith.cmpi eq, %arg1, %c0_i32 : i32
    %1 = arith.extui %0 : i1 to i32
    %c0_i32_0 = arith.constant 0 : i32
    %2 = arith.cmpi ne, %1, %c0_i32_0 : i32
    scf.if %2 {
      %cst_109 = arith.constant 0.000000e+00 : f32
      %344 = vector.broadcast %cst_109 : f32 to vector<32x128xf32>
      %c0_110 = arith.constant 0 : index
      %c0_111 = arith.constant 0 : index
      %345 = vector.load %arg4[%c0_110, %c0_111] : memref<32x128xf32, #tpu.memory_space<vmem>>, vector<32x128xf32>
      tpu.vector_store %arg4[%c0_110, %c0_111], %344 {strides = array<i32>} : memref<32x128xf32, #tpu.memory_space<vmem>>, vector<32x128xf32>,
    } else {
    }
    %cst = arith.constant 0.000000e+00 : f32
    %3 = vector.broadcast %cst : f32 to vector<8x128xf32>
    %c0_i32_1 = arith.constant 0 : i32
    %c64_i32 = arith.constant 64 : i32
    %4 = arith.muli %c0_i32_1, %c64_i32 : i32
    %5 = arith.index_cast %4 : i32 to index
    %c0 = arith.constant 0 : index
    %6 = vector.load %arg2[%5, %c0] : memref<512x128xf32, #tpu.memory_space<vmem>>, vector<64x128xf32>
    %c64_i32_2 = arith.constant 64 : i32
    %7 = arith.muli %c0_i32_1, %c64_i32_2 : i32
    %8 = arith.index_cast %7 : i32 to index
    %c0_3 = arith.constant 0 : index
    %9 = vector.load %arg3[%8, %c0_3] : memref<512x128xf32, #tpu.memory_space<vmem>>, vector<64x128xf32>
    %10 = math.absf %6 : vector<64x128xf32>
    %cst_4 = arith.constant 0.000000e+00 : f32
    %11 = vector.broadcast %cst_4 : f32 to vector<64x128xf32>
    %12 = arith.subf %11, %10 : vector<64x128xf32>
    %13 = math.exp %12 : vector<64x128xf32>
    %cst_5 = arith.constant 0.000000e+00 : f32
    %14 = vector.broadcast %cst_5 : f32 to vector<64x128xf32>
    %15 = arith.maximumf %6, %14 : vector<64x128xf32>
    %16 = arith.mulf %6, %9 : vector<64x128xf32>
    %17 = arith.subf %15, %16 : vector<64x128xf32>
    %18 = math.log1p %13 : vector<64x128xf32>
    %19 = arith.addf %17, %18 : vector<64x128xf32>
    %cst_6 = arith.constant 1.000000e+00 : f32
    %20 = vector.broadcast %cst_6 : f32 to vector<64x128xf32>
    %21 = arith.addf %20, %13 : vector<64x128xf32>
    %22 = tpu.reciprocal %21 {approx = true} : vector<64x128xf32> -> vector<64x128xf32>
    %cst_7 = arith.constant 0.000000e+00 : f32
    %23 = vector.broadcast %cst_7 : f32 to vector<64x128xf32>
    %24 = arith.cmpf oge, %6, %23 : vector<64x128xf32>
    %25 = arith.mulf %13, %22 : vector<64x128xf32>
    %26 = arith.select %24, %22, %25 : vector<64x128xi1>, vector<64x128xf32>
    %27 = arith.subf %26, %9 : vector<64x128xf32>
    %28 = math.absf %27 : vector<64x128xf32>
    %29 = math.sqrt %28 : vector<64x128xf32>
    %30 = arith.mulf %28, %29 : vector<64x128xf32>
    %31 = vector.shape_cast %19 : vector<64x128xf32> to vector<8x8x128xf32>
    %cst_8 = arith.constant dense<0.000000e+00> : vector<8x128xf32>
    %32 = vector.multi_reduction <add>, %31, %cst_8 [0] : vector<8x8x128xf32> to vector<8x128xf32>
    %33 = vector.shape_cast %30 : vector<64x128xf32> to vector<8x8x128xf32>
    %cst_9 = arith.constant dense<0.000000e+00> : vector<8x128xf32>
    %34 = vector.multi_reduction <add>, %33, %cst_9 [0] : vector<8x8x128xf32> to vector<8x128xf32>
    %35 = arith.mulf %26, %26 : vector<64x128xf32>
    %36 = vector.shape_cast %35 : vector<64x128xf32> to vector<8x8x128xf32>
    %cst_10 = arith.constant dense<0.000000e+00> : vector<8x128xf32>
    %37 = vector.multi_reduction <add>, %36, %cst_10 [0] : vector<8x8x128xf32> to vector<8x128xf32>
    %38 = arith.mulf %9, %9 : vector<64x128xf32>
    %39 = vector.shape_cast %38 : vector<64x128xf32> to vector<8x8x128xf32>
    %cst_11 = arith.constant dense<0.000000e+00> : vector<8x128xf32>
    %40 = vector.multi_reduction <add>, %39, %cst_11 [0] : vector<8x8x128xf32> to vector<8x128xf32>
    %41 = arith.addf %3, %32 : vector<8x128xf32>
    %42 = arith.addf %3, %34 : vector<8x128xf32>
    %43 = arith.addf %3, %37 : vector<8x128xf32>
    %44 = arith.addf %3, %40 : vector<8x128xf32>
    %c1_i32 = arith.constant 1 : i32
    %c64_i32_12 = arith.constant 64 : i32
    %45 = arith.muli %c1_i32, %c64_i32_12 : i32
    %46 = arith.index_cast %45 : i32 to index
    %c0_13 = arith.constant 0 : index
    %47 = vector.load %arg2[%46, %c0_13] : memref<512x128xf32, #tpu.memory_space<vmem>>, vector<64x128xf32>
    %c64_i32_14 = arith.constant 64 : i32
    %48 = arith.muli %c1_i32, %c64_i32_14 : i32
    %49 = arith.index_cast %48 : i32 to index
    %c0_15 = arith.constant 0 : index
    %50 = vector.load %arg3[%49, %c0_15] : memref<512x128xf32, #tpu.memory_space<vmem>>, vector<64x128xf32>
    %51 = math.absf %47 : vector<64x128xf32>
    %cst_16 = arith.constant 0.000000e+00 : f32
    %52 = vector.broadcast %cst_16 : f32 to vector<64x128xf32>
    %53 = arith.subf %52, %51 : vector<64x128xf32>
    %54 = math.exp %53 : vector<64x128xf32>
    %cst_17 = arith.constant 0.000000e+00 : f32
    %55 = vector.broadcast %cst_17 : f32 to vector<64x128xf32>
    %56 = arith.maximumf %47, %55 : vector<64x128xf32>
    %57 = arith.mulf %47, %50 : vector<64x128xf32>
    %58 = arith.subf %56, %57 : vector<64x128xf32>
    %59 = math.log1p %54 : vector<64x128xf32>
    %60 = arith.addf %58, %59 : vector<64x128xf32>
    %cst_18 = arith.constant 1.000000e+00 : f32
    %61 = vector.broadcast %cst_18 : f32 to vector<64x128xf32>
    %62 = arith.addf %61, %54 : vector<64x128xf32>
    %63 = tpu.reciprocal %62 {approx = true} : vector<64x128xf32> -> vector<64x128xf32>
    %cst_19 = arith.constant 0.000000e+00 : f32
    %64 = vector.broadcast %cst_19 : f32 to vector<64x128xf32>
    %65 = arith.cmpf oge, %47, %64 : vector<64x128xf32>
    %66 = arith.mulf %54, %63 : vector<64x128xf32>
    %67 = arith.select %65, %63, %66 : vector<64x128xi1>, vector<64x128xf32>
    %68 = arith.subf %67, %50 : vector<64x128xf32>
    %69 = math.absf %68 : vector<64x128xf32>
    %70 = math.sqrt %69 : vector<64x128xf32>
    %71 = arith.mulf %69, %70 : vector<64x128xf32>
    %72 = vector.shape_cast %60 : vector<64x128xf32> to vector<8x8x128xf32>
    %cst_20 = arith.constant dense<0.000000e+00> : vector<8x128xf32>
    %73 = vector.multi_reduction <add>, %72, %cst_20 [0] : vector<8x8x128xf32> to vector<8x128xf32>
    %74 = vector.shape_cast %71 : vector<64x128xf32> to vector<8x8x128xf32>
    %cst_21 = arith.constant dense<0.000000e+00> : vector<8x128xf32>
    %75 = vector.multi_reduction <add>, %74, %cst_21 [0] : vector<8x8x128xf32> to vector<8x128xf32>
    %76 = arith.mulf %67, %67 : vector<64x128xf32>
    %77 = vector.shape_cast %76 : vector<64x128xf32> to vector<8x8x128xf32>
    %cst_22 = arith.constant dense<0.000000e+00> : vector<8x128xf32>
    %78 = vector.multi_reduction <add>, %77, %cst_22 [0] : vector<8x8x128xf32> to vector<8x128xf32>
    %79 = arith.mulf %50, %50 : vector<64x128xf32>
    %80 = vector.shape_cast %79 : vector<64x128xf32> to vector<8x8x128xf32>
    %cst_23 = arith.constant dense<0.000000e+00> : vector<8x128xf32>
    %81 = vector.multi_reduction <add>, %80, %cst_23 [0] : vector<8x8x128xf32> to vector<8x128xf32>
    %82 = arith.addf %41, %73 : vector<8x128xf32>
    %83 = arith.addf %42, %75 : vector<8x128xf32>
    %84 = arith.addf %43, %78 : vector<8x128xf32>
    %85 = arith.addf %44, %81 : vector<8x128xf32>
    %c2_i32 = arith.constant 2 : i32
    %c64_i32_24 = arith.constant 64 : i32
    %86 = arith.muli %c2_i32, %c64_i32_24 : i32
    %87 = arith.index_cast %86 : i32 to index
    %c0_25 = arith.constant 0 : index
    %88 = vector.load %arg2[%87, %c0_25] : memref<512x128xf32, #tpu.memory_space<vmem>>, vector<64x128xf32>
    %c64_i32_26 = arith.constant 64 : i32
    %89 = arith.muli %c2_i32, %c64_i32_26 : i32
    %90 = arith.index_cast %89 : i32 to index
    %c0_27 = arith.constant 0 : index
    %91 = vector.load %arg3[%90, %c0_27] : memref<512x128xf32, #tpu.memory_space<vmem>>, vector<64x128xf32>
    %92 = math.absf %88 : vector<64x128xf32>
    %cst_28 = arith.constant 0.000000e+00 : f32
    %93 = vector.broadcast %cst_28 : f32 to vector<64x128xf32>
    %94 = arith.subf %93, %92 : vector<64x128xf32>
    %95 = math.exp %94 : vector<64x128xf32>
    %cst_29 = arith.constant 0.000000e+00 : f32
    %96 = vector.broadcast %cst_29 : f32 to vector<64x128xf32>
    %97 = arith.maximumf %88, %96 : vector<64x128xf32>
    %98 = arith.mulf %88, %91 : vector<64x128xf32>
    %99 = arith.subf %97, %98 : vector<64x128xf32>
    %100 = math.log1p %95 : vector<64x128xf32>
    %101 = arith.addf %99, %100 : vector<64x128xf32>
    %cst_30 = arith.constant 1.000000e+00 : f32
    %102 = vector.broadcast %cst_30 : f32 to vector<64x128xf32>
    %103 = arith.addf %102, %95 : vector<64x128xf32>
    %104 = tpu.reciprocal %103 {approx = true} : vector<64x128xf32> -> vector<64x128xf32>
    %cst_31 = arith.constant 0.000000e+00 : f32
    %105 = vector.broadcast %cst_31 : f32 to vector<64x128xf32>
    %106 = arith.cmpf oge, %88, %105 : vector<64x128xf32>
    %107 = arith.mulf %95, %104 : vector<64x128xf32>
    %108 = arith.select %106, %104, %107 : vector<64x128xi1>, vector<64x128xf32>
    %109 = arith.subf %108, %91 : vector<64x128xf32>
    %110 = math.absf %109 : vector<64x128xf32>
    %111 = math.sqrt %110 : vector<64x128xf32>
    %112 = arith.mulf %110, %111 : vector<64x128xf32>
    %113 = vector.shape_cast %101 : vector<64x128xf32> to vector<8x8x128xf32>
    %cst_32 = arith.constant dense<0.000000e+00> : vector<8x128xf32>
    %114 = vector.multi_reduction <add>, %113, %cst_32 [0] : vector<8x8x128xf32> to vector<8x128xf32>
    %115 = vector.shape_cast %112 : vector<64x128xf32> to vector<8x8x128xf32>
    %cst_33 = arith.constant dense<0.000000e+00> : vector<8x128xf32>
    %116 = vector.multi_reduction <add>, %115, %cst_33 [0] : vector<8x8x128xf32> to vector<8x128xf32>
    %117 = arith.mulf %108, %108 : vector<64x128xf32>
    %118 = vector.shape_cast %117 : vector<64x128xf32> to vector<8x8x128xf32>
    %cst_34 = arith.constant dense<0.000000e+00> : vector<8x128xf32>
    %119 = vector.multi_reduction <add>, %118, %cst_34 [0] : vector<8x8x128xf32> to vector<8x128xf32>
    %120 = arith.mulf %91, %91 : vector<64x128xf32>
    %121 = vector.shape_cast %120 : vector<64x128xf32> to vector<8x8x128xf32>
    %cst_35 = arith.constant dense<0.000000e+00> : vector<8x128xf32>
    %122 = vector.multi_reduction <add>, %121, %cst_35 [0] : vector<8x8x128xf32> to vector<8x128xf32>
    %123 = arith.addf %82, %114 : vector<8x128xf32>
    %124 = arith.addf %83, %116 : vector<8x128xf32>
    %125 = arith.addf %84, %119 : vector<8x128xf32>
    %126 = arith.addf %85, %122 : vector<8x128xf32>
    %c3_i32 = arith.constant 3 : i32
    %c64_i32_36 = arith.constant 64 : i32
    %127 = arith.muli %c3_i32, %c64_i32_36 : i32
    %128 = arith.index_cast %127 : i32 to index
    %c0_37 = arith.constant 0 : index
    %129 = vector.load %arg2[%128, %c0_37] : memref<512x128xf32, #tpu.memory_space<vmem>>, vector<64x128xf32>
    %c64_i32_38 = arith.constant 64 : i32
    %130 = arith.muli %c3_i32, %c64_i32_38 : i32
    %131 = arith.index_cast %130 : i32 to index
    %c0_39 = arith.constant 0 : index
    %132 = vector.load %arg3[%131, %c0_39] : memref<512x128xf32, #tpu.memory_space<vmem>>, vector<64x128xf32>
    %133 = math.absf %129 : vector<64x128xf32>
    %cst_40 = arith.constant 0.000000e+00 : f32
    %134 = vector.broadcast %cst_40 : f32 to vector<64x128xf32>
    %135 = arith.subf %134, %133 : vector<64x128xf32>
    %136 = math.exp %135 : vector<64x128xf32>
    %cst_41 = arith.constant 0.000000e+00 : f32
    %137 = vector.broadcast %cst_41 : f32 to vector<64x128xf32>
    %138 = arith.maximumf %129, %137 : vector<64x128xf32>
    %139 = arith.mulf %129, %132 : vector<64x128xf32>
    %140 = arith.subf %138, %139 : vector<64x128xf32>
    %141 = math.log1p %136 : vector<64x128xf32>
    %142 = arith.addf %140, %141 : vector<64x128xf32>
    %cst_42 = arith.constant 1.000000e+00 : f32
    %143 = vector.broadcast %cst_42 : f32 to vector<64x128xf32>
    %144 = arith.addf %143, %136 : vector<64x128xf32>
    %145 = tpu.reciprocal %144 {approx = true} : vector<64x128xf32> -> vector<64x128xf32>
    %cst_43 = arith.constant 0.000000e+00 : f32
    %146 = vector.broadcast %cst_43 : f32 to vector<64x128xf32>
    %147 = arith.cmpf oge, %129, %146 : vector<64x128xf32>
    %148 = arith.mulf %136, %145 : vector<64x128xf32>
    %149 = arith.select %147, %145, %148 : vector<64x128xi1>, vector<64x128xf32>
    %150 = arith.subf %149, %132 : vector<64x128xf32>
    %151 = math.absf %150 : vector<64x128xf32>
    %152 = math.sqrt %151 : vector<64x128xf32>
    %153 = arith.mulf %151, %152 : vector<64x128xf32>
    %154 = vector.shape_cast %142 : vector<64x128xf32> to vector<8x8x128xf32>
    %cst_44 = arith.constant dense<0.000000e+00> : vector<8x128xf32>
    %155 = vector.multi_reduction <add>, %154, %cst_44 [0] : vector<8x8x128xf32> to vector<8x128xf32>
    %156 = vector.shape_cast %153 : vector<64x128xf32> to vector<8x8x128xf32>
    %cst_45 = arith.constant dense<0.000000e+00> : vector<8x128xf32>
    %157 = vector.multi_reduction <add>, %156, %cst_45 [0] : vector<8x8x128xf32> to vector<8x128xf32>
    %158 = arith.mulf %149, %149 : vector<64x128xf32>
    %159 = vector.shape_cast %158 : vector<64x128xf32> to vector<8x8x128xf32>
    %cst_46 = arith.constant dense<0.000000e+00> : vector<8x128xf32>
    %160 = vector.multi_reduction <add>, %159, %cst_46 [0] : vector<8x8x128xf32> to vector<8x128xf32>
    %161 = arith.mulf %132, %132 : vector<64x128xf32>
    %162 = vector.shape_cast %161 : vector<64x128xf32> to vector<8x8x128xf32>
    %cst_47 = arith.constant dense<0.000000e+00> : vector<8x128xf32>
    %163 = vector.multi_reduction <add>, %162, %cst_47 [0] : vector<8x8x128xf32> to vector<8x128xf32>
    %164 = arith.addf %123, %155 : vector<8x128xf32>
    %165 = arith.addf %124, %157 : vector<8x128xf32>
    %166 = arith.addf %125, %160 : vector<8x128xf32>
    %167 = arith.addf %126, %163 : vector<8x128xf32>
    %c4_i32 = arith.constant 4 : i32
    %c64_i32_48 = arith.constant 64 : i32
    %168 = arith.muli %c4_i32, %c64_i32_48 : i32
    %169 = arith.index_cast %168 : i32 to index
    %c0_49 = arith.constant 0 : index
    %170 = vector.load %arg2[%169, %c0_49] : memref<512x128xf32, #tpu.memory_space<vmem>>, vector<64x128xf32>
    %c64_i32_50 = arith.constant 64 : i32
    %171 = arith.muli %c4_i32, %c64_i32_50 : i32
    %172 = arith.index_cast %171 : i32 to index
    %c0_51 = arith.constant 0 : index
    %173 = vector.load %arg3[%172, %c0_51] : memref<512x128xf32, #tpu.memory_space<vmem>>, vector<64x128xf32>
    %174 = math.absf %170 : vector<64x128xf32>
    %cst_52 = arith.constant 0.000000e+00 : f32
    %175 = vector.broadcast %cst_52 : f32 to vector<64x128xf32>
    %176 = arith.subf %175, %174 : vector<64x128xf32>
    %177 = math.exp %176 : vector<64x128xf32>
    %cst_53 = arith.constant 0.000000e+00 : f32
    %178 = vector.broadcast %cst_53 : f32 to vector<64x128xf32>
    %179 = arith.maximumf %170, %178 : vector<64x128xf32>
    %180 = arith.mulf %170, %173 : vector<64x128xf32>
    %181 = arith.subf %179, %180 : vector<64x128xf32>
    %182 = math.log1p %177 : vector<64x128xf32>
    %183 = arith.addf %181, %182 : vector<64x128xf32>
    %cst_54 = arith.constant 1.000000e+00 : f32
    %184 = vector.broadcast %cst_54 : f32 to vector<64x128xf32>
    %185 = arith.addf %184, %177 : vector<64x128xf32>
    %186 = tpu.reciprocal %185 {approx = true} : vector<64x128xf32> -> vector<64x128xf32>
    %cst_55 = arith.constant 0.000000e+00 : f32
    %187 = vector.broadcast %cst_55 : f32 to vector<64x128xf32>
    %188 = arith.cmpf oge, %170, %187 : vector<64x128xf32>
    %189 = arith.mulf %177, %186 : vector<64x128xf32>
    %190 = arith.select %188, %186, %189 : vector<64x128xi1>, vector<64x128xf32>
    %191 = arith.subf %190, %173 : vector<64x128xf32>
    %192 = math.absf %191 : vector<64x128xf32>
    %193 = math.sqrt %192 : vector<64x128xf32>
    %194 = arith.mulf %192, %193 : vector<64x128xf32>
    %195 = vector.shape_cast %183 : vector<64x128xf32> to vector<8x8x128xf32>
    %cst_56 = arith.constant dense<0.000000e+00> : vector<8x128xf32>
    %196 = vector.multi_reduction <add>, %195, %cst_56 [0] : vector<8x8x128xf32> to vector<8x128xf32>
    %197 = vector.shape_cast %194 : vector<64x128xf32> to vector<8x8x128xf32>
    %cst_57 = arith.constant dense<0.000000e+00> : vector<8x128xf32>
    %198 = vector.multi_reduction <add>, %197, %cst_57 [0] : vector<8x8x128xf32> to vector<8x128xf32>
    %199 = arith.mulf %190, %190 : vector<64x128xf32>
    %200 = vector.shape_cast %199 : vector<64x128xf32> to vector<8x8x128xf32>
    %cst_58 = arith.constant dense<0.000000e+00> : vector<8x128xf32>
    %201 = vector.multi_reduction <add>, %200, %cst_58 [0] : vector<8x8x128xf32> to vector<8x128xf32>
    %202 = arith.mulf %173, %173 : vector<64x128xf32>
    %203 = vector.shape_cast %202 : vector<64x128xf32> to vector<8x8x128xf32>
    %cst_59 = arith.constant dense<0.000000e+00> : vector<8x128xf32>
    %204 = vector.multi_reduction <add>, %203, %cst_59 [0] : vector<8x8x128xf32> to vector<8x128xf32>
    %205 = arith.addf %164, %196 : vector<8x128xf32>
    %206 = arith.addf %165, %198 : vector<8x128xf32>
    %207 = arith.addf %166, %201 : vector<8x128xf32>
    %208 = arith.addf %167, %204 : vector<8x128xf32>
    %c5_i32 = arith.constant 5 : i32
    %c64_i32_60 = arith.constant 64 : i32
    %209 = arith.muli %c5_i32, %c64_i32_60 : i32
    %210 = arith.index_cast %209 : i32 to index
    %c0_61 = arith.constant 0 : index
    %211 = vector.load %arg2[%210, %c0_61] : memref<512x128xf32, #tpu.memory_space<vmem>>, vector<64x128xf32>
    %c64_i32_62 = arith.constant 64 : i32
    %212 = arith.muli %c5_i32, %c64_i32_62 : i32
    %213 = arith.index_cast %212 : i32 to index
    %c0_63 = arith.constant 0 : index
    %214 = vector.load %arg3[%213, %c0_63] : memref<512x128xf32, #tpu.memory_space<vmem>>, vector<64x128xf32>
    %215 = math.absf %211 : vector<64x128xf32>
    %cst_64 = arith.constant 0.000000e+00 : f32
    %216 = vector.broadcast %cst_64 : f32 to vector<64x128xf32>
    %217 = arith.subf %216, %215 : vector<64x128xf32>
    %218 = math.exp %217 : vector<64x128xf32>
    %cst_65 = arith.constant 0.000000e+00 : f32
    %219 = vector.broadcast %cst_65 : f32 to vector<64x128xf32>
    %220 = arith.maximumf %211, %219 : vector<64x128xf32>
    %221 = arith.mulf %211, %214 : vector<64x128xf32>
    %222 = arith.subf %220, %221 : vector<64x128xf32>
    %223 = math.log1p %218 : vector<64x128xf32>
    %224 = arith.addf %222, %223 : vector<64x128xf32>
    %cst_66 = arith.constant 1.000000e+00 : f32
    %225 = vector.broadcast %cst_66 : f32 to vector<64x128xf32>
    %226 = arith.addf %225, %218 : vector<64x128xf32>
    %227 = tpu.reciprocal %226 {approx = true} : vector<64x128xf32> -> vector<64x128xf32>
    %cst_67 = arith.constant 0.000000e+00 : f32
    %228 = vector.broadcast %cst_67 : f32 to vector<64x128xf32>
    %229 = arith.cmpf oge, %211, %228 : vector<64x128xf32>
    %230 = arith.mulf %218, %227 : vector<64x128xf32>
    %231 = arith.select %229, %227, %230 : vector<64x128xi1>, vector<64x128xf32>
    %232 = arith.subf %231, %214 : vector<64x128xf32>
    %233 = math.absf %232 : vector<64x128xf32>
    %234 = math.sqrt %233 : vector<64x128xf32>
    %235 = arith.mulf %233, %234 : vector<64x128xf32>
    %236 = vector.shape_cast %224 : vector<64x128xf32> to vector<8x8x128xf32>
    %cst_68 = arith.constant dense<0.000000e+00> : vector<8x128xf32>
    %237 = vector.multi_reduction <add>, %236, %cst_68 [0] : vector<8x8x128xf32> to vector<8x128xf32>
    %238 = vector.shape_cast %235 : vector<64x128xf32> to vector<8x8x128xf32>
    %cst_69 = arith.constant dense<0.000000e+00> : vector<8x128xf32>
    %239 = vector.multi_reduction <add>, %238, %cst_69 [0] : vector<8x8x128xf32> to vector<8x128xf32>
    %240 = arith.mulf %231, %231 : vector<64x128xf32>
    %241 = vector.shape_cast %240 : vector<64x128xf32> to vector<8x8x128xf32>
    %cst_70 = arith.constant dense<0.000000e+00> : vector<8x128xf32>
    %242 = vector.multi_reduction <add>, %241, %cst_70 [0] : vector<8x8x128xf32> to vector<8x128xf32>
    %243 = arith.mulf %214, %214 : vector<64x128xf32>
    %244 = vector.shape_cast %243 : vector<64x128xf32> to vector<8x8x128xf32>
    %cst_71 = arith.constant dense<0.000000e+00> : vector<8x128xf32>
    %245 = vector.multi_reduction <add>, %244, %cst_71 [0] : vector<8x8x128xf32> to vector<8x128xf32>
    %246 = arith.addf %205, %237 : vector<8x128xf32>
    %247 = arith.addf %206, %239 : vector<8x128xf32>
    %248 = arith.addf %207, %242 : vector<8x128xf32>
    %249 = arith.addf %208, %245 : vector<8x128xf32>
    %c6_i32 = arith.constant 6 : i32
    %c64_i32_72 = arith.constant 64 : i32
    %250 = arith.muli %c6_i32, %c64_i32_72 : i32
    %251 = arith.index_cast %250 : i32 to index
    %c0_73 = arith.constant 0 : index
    %252 = vector.load %arg2[%251, %c0_73] : memref<512x128xf32, #tpu.memory_space<vmem>>, vector<64x128xf32>
    %c64_i32_74 = arith.constant 64 : i32
    %253 = arith.muli %c6_i32, %c64_i32_74 : i32
    %254 = arith.index_cast %253 : i32 to index
    %c0_75 = arith.constant 0 : index
    %255 = vector.load %arg3[%254, %c0_75] : memref<512x128xf32, #tpu.memory_space<vmem>>, vector<64x128xf32>
    %256 = math.absf %252 : vector<64x128xf32>
    %cst_76 = arith.constant 0.000000e+00 : f32
    %257 = vector.broadcast %cst_76 : f32 to vector<64x128xf32>
    %258 = arith.subf %257, %256 : vector<64x128xf32>
    %259 = math.exp %258 : vector<64x128xf32>
    %cst_77 = arith.constant 0.000000e+00 : f32
    %260 = vector.broadcast %cst_77 : f32 to vector<64x128xf32>
    %261 = arith.maximumf %252, %260 : vector<64x128xf32>
    %262 = arith.mulf %252, %255 : vector<64x128xf32>
    %263 = arith.subf %261, %262 : vector<64x128xf32>
    %264 = math.log1p %259 : vector<64x128xf32>
    %265 = arith.addf %263, %264 : vector<64x128xf32>
    %cst_78 = arith.constant 1.000000e+00 : f32
    %266 = vector.broadcast %cst_78 : f32 to vector<64x128xf32>
    %267 = arith.addf %266, %259 : vector<64x128xf32>
    %268 = tpu.reciprocal %267 {approx = true} : vector<64x128xf32> -> vector<64x128xf32>
    %cst_79 = arith.constant 0.000000e+00 : f32
    %269 = vector.broadcast %cst_79 : f32 to vector<64x128xf32>
    %270 = arith.cmpf oge, %252, %269 : vector<64x128xf32>
    %271 = arith.mulf %259, %268 : vector<64x128xf32>
    %272 = arith.select %270, %268, %271 : vector<64x128xi1>, vector<64x128xf32>
    %273 = arith.subf %272, %255 : vector<64x128xf32>
    %274 = math.absf %273 : vector<64x128xf32>
    %275 = math.sqrt %274 : vector<64x128xf32>
    %276 = arith.mulf %274, %275 : vector<64x128xf32>
    %277 = vector.shape_cast %265 : vector<64x128xf32> to vector<8x8x128xf32>
    %cst_80 = arith.constant dense<0.000000e+00> : vector<8x128xf32>
    %278 = vector.multi_reduction <add>, %277, %cst_80 [0] : vector<8x8x128xf32> to vector<8x128xf32>
    %279 = vector.shape_cast %276 : vector<64x128xf32> to vector<8x8x128xf32>
    %cst_81 = arith.constant dense<0.000000e+00> : vector<8x128xf32>
    %280 = vector.multi_reduction <add>, %279, %cst_81 [0] : vector<8x8x128xf32> to vector<8x128xf32>
    %281 = arith.mulf %272, %272 : vector<64x128xf32>
    %282 = vector.shape_cast %281 : vector<64x128xf32> to vector<8x8x128xf32>
    %cst_82 = arith.constant dense<0.000000e+00> : vector<8x128xf32>
    %283 = vector.multi_reduction <add>, %282, %cst_82 [0] : vector<8x8x128xf32> to vector<8x128xf32>
    %284 = arith.mulf %255, %255 : vector<64x128xf32>
    %285 = vector.shape_cast %284 : vector<64x128xf32> to vector<8x8x128xf32>
    %cst_83 = arith.constant dense<0.000000e+00> : vector<8x128xf32>
    %286 = vector.multi_reduction <add>, %285, %cst_83 [0] : vector<8x8x128xf32> to vector<8x128xf32>
    %287 = arith.addf %246, %278 : vector<8x128xf32>
    %288 = arith.addf %247, %280 : vector<8x128xf32>
    %289 = arith.addf %248, %283 : vector<8x128xf32>
    %290 = arith.addf %249, %286 : vector<8x128xf32>
    %c7_i32 = arith.constant 7 : i32
    %c64_i32_84 = arith.constant 64 : i32
    %291 = arith.muli %c7_i32, %c64_i32_84 : i32
    %292 = arith.index_cast %291 : i32 to index
    %c0_85 = arith.constant 0 : index
    %293 = vector.load %arg2[%292, %c0_85] : memref<512x128xf32, #tpu.memory_space<vmem>>, vector<64x128xf32>
    %c64_i32_86 = arith.constant 64 : i32
    %294 = arith.muli %c7_i32, %c64_i32_86 : i32
    %295 = arith.index_cast %294 : i32 to index
    %c0_87 = arith.constant 0 : index
    %296 = vector.load %arg3[%295, %c0_87] : memref<512x128xf32, #tpu.memory_space<vmem>>, vector<64x128xf32>
    %297 = math.absf %293 : vector<64x128xf32>
    %cst_88 = arith.constant 0.000000e+00 : f32
    %298 = vector.broadcast %cst_88 : f32 to vector<64x128xf32>
    %299 = arith.subf %298, %297 : vector<64x128xf32>
    %300 = math.exp %299 : vector<64x128xf32>
    %cst_89 = arith.constant 0.000000e+00 : f32
    %301 = vector.broadcast %cst_89 : f32 to vector<64x128xf32>
    %302 = arith.maximumf %293, %301 : vector<64x128xf32>
    %303 = arith.mulf %293, %296 : vector<64x128xf32>
    %304 = arith.subf %302, %303 : vector<64x128xf32>
    %305 = math.log1p %300 : vector<64x128xf32>
    %306 = arith.addf %304, %305 : vector<64x128xf32>
    %cst_90 = arith.constant 1.000000e+00 : f32
    %307 = vector.broadcast %cst_90 : f32 to vector<64x128xf32>
    %308 = arith.addf %307, %300 : vector<64x128xf32>
    %309 = tpu.reciprocal %308 {approx = true} : vector<64x128xf32> -> vector<64x128xf32>
    %cst_91 = arith.constant 0.000000e+00 : f32
    %310 = vector.broadcast %cst_91 : f32 to vector<64x128xf32>
    %311 = arith.cmpf oge, %293, %310 : vector<64x128xf32>
    %312 = arith.mulf %300, %309 : vector<64x128xf32>
    %313 = arith.select %311, %309, %312 : vector<64x128xi1>, vector<64x128xf32>
    %314 = arith.subf %313, %296 : vector<64x128xf32>
    %315 = math.absf %314 : vector<64x128xf32>
    %316 = math.sqrt %315 : vector<64x128xf32>
    %317 = arith.mulf %315, %316 : vector<64x128xf32>
    %318 = vector.shape_cast %306 : vector<64x128xf32> to vector<8x8x128xf32>
    %cst_92 = arith.constant dense<0.000000e+00> : vector<8x128xf32>
    %319 = vector.multi_reduction <add>, %318, %cst_92 [0] : vector<8x8x128xf32> to vector<8x128xf32>
    %320 = vector.shape_cast %317 : vector<64x128xf32> to vector<8x8x128xf32>
    %cst_93 = arith.constant dense<0.000000e+00> : vector<8x128xf32>
    %321 = vector.multi_reduction <add>, %320, %cst_93 [0] : vector<8x8x128xf32> to vector<8x128xf32>
    %322 = arith.mulf %313, %313 : vector<64x128xf32>
    %323 = vector.shape_cast %322 : vector<64x128xf32> to vector<8x8x128xf32>
    %cst_94 = arith.constant dense<0.000000e+00> : vector<8x128xf32>
    %324 = vector.multi_reduction <add>, %323, %cst_94 [0] : vector<8x8x128xf32> to vector<8x128xf32>
    %325 = arith.mulf %296, %296 : vector<64x128xf32>
    %326 = vector.shape_cast %325 : vector<64x128xf32> to vector<8x8x128xf32>
    %cst_95 = arith.constant dense<0.000000e+00> : vector<8x128xf32>
    %327 = vector.multi_reduction <add>, %326, %cst_95 [0] : vector<8x8x128xf32> to vector<8x128xf32>
    %328 = arith.addf %287, %319 : vector<8x128xf32>
    %329 = arith.addf %288, %321 : vector<8x128xf32>
    %330 = arith.addf %289, %324 : vector<8x128xf32>
    %331 = arith.addf %290, %327 : vector<8x128xf32>
    %c8_i32 = arith.constant 8 : i32
    %c0_96 = arith.constant 0 : index
    %c0_97 = arith.constant 0 : index
    %332 = vector.load %arg4[%c0_96, %c0_97] : memref<32x128xf32, #tpu.memory_space<vmem>>, vector<8x128xf32>
    %333 = arith.addf %332, %328 : vector<8x128xf32>
    %c0_98 = arith.constant 0 : index
    %c0_99 = arith.constant 0 : index
    %334 = vector.load %arg4[%c0_98, %c0_99] : memref<32x128xf32, #tpu.memory_space<vmem>>, vector<8x128xf32>
    tpu.vector_store %arg4[%c0_98, %c0_99], %333 {strides = array<i32>} : memref<32x128xf32, #tpu.memory_space<vmem>>, vector<8x128xf32>,
    %c8 = arith.constant 8 : index
    %c0_100 = arith.constant 0 : index
    %335 = vector.load %arg4[%c8, %c0_100] : memref<32x128xf32, #tpu.memory_space<vmem>>, vector<8x128xf32>
    %336 = arith.addf %335, %329 : vector<8x128xf32>
    %c8_101 = arith.constant 8 : index
    %c0_102 = arith.constant 0 : index
    %337 = vector.load %arg4[%c8_101, %c0_102] : memref<32x128xf32, #tpu.memory_space<vmem>>, vector<8x128xf32>
    tpu.vector_store %arg4[%c8_101, %c0_102], %336 {strides = array<i32>} : memref<32x128xf32, #tpu.memory_space<vmem>>, vector<8x128xf32>,
    %c16 = arith.constant 16 : index
    %c0_103 = arith.constant 0 : index
    %338 = vector.load %arg4[%c16, %c0_103] : memref<32x128xf32, #tpu.memory_space<vmem>>, vector<8x128xf32>
    %339 = arith.addf %338, %330 : vector<8x128xf32>
    %c16_104 = arith.constant 16 : index
    %c0_105 = arith.constant 0 : index
    %340 = vector.load %arg4[%c16_104, %c0_105] : memref<32x128xf32, #tpu.memory_space<vmem>>, vector<8x128xf32>
    tpu.vector_store %arg4[%c16_104, %c0_105], %339 {strides = array<i32>} : memref<32x128xf32, #tpu.memory_space<vmem>>, vector<8x128xf32>,
    %c24 = arith.constant 24 : index
    %c0_106 = arith.constant 0 : index
    %341 = vector.load %arg4[%c24, %c0_106] : memref<32x128xf32, #tpu.memory_space<vmem>>, vector<8x128xf32>
    %342 = arith.addf %341, %331 : vector<8x128xf32>
    %c24_107 = arith.constant 24 : index
    %c0_108 = arith.constant 0 : index
    %343 = vector.load %arg4[%c24_107, %c0_108] : memref<32x128xf32, #tpu.memory_space<vmem>>, vector<8x128xf32>
    tpu.vector_store %arg4[%c24_107, %c0_108], %342 {strides = array<i32>} : memref<32x128xf32, #tpu.memory_space<vmem>>, vector<8x128xf32>,
    return
  }
  func.func @transform_0(%arg0: i32, %arg1: i32) -> (i32, i32) {
    %c1_i32 = arith.constant 1 : i32
    %0 = arith.muli %arg0, %c1_i32 : i32
    %1 = arith.addi %0, %arg1 : i32
    %c0_i32 = arith.constant 0 : i32
    %c0_i32_0 = arith.constant 0 : i32
    return %1, %c0_i32 : i32, i32
  }
  func.func @transform_1(%arg0: i32, %arg1: i32) -> (i32, i32) {
    %c1_i32 = arith.constant 1 : i32
    %0 = arith.muli %arg0, %c1_i32 : i32
    %1 = arith.addi %0, %arg1 : i32
    %c0_i32 = arith.constant 0 : i32
    %c0_i32_0 = arith.constant 0 : i32
    return %1, %c0_i32 : i32, i32
  }
  func.func @transform_2(%arg0: i32, %arg1: i32) -> (i32, i32) {
    %c0_i32 = arith.constant 0 : i32
    %c0_i32_0 = arith.constant 0 : i32
    return %arg0, %c0_i32 : i32, i32
  }
}

</mosaic_0001>

<llo_original>
// kernel: tpu_custom_call.1
$region0: #{tpu_custom_call.1}
  #allocation0 [shape = 'u32[]', space=smem, size = 0x4, offset = 0x4, fixed_abs, tag = 'smem constant byte address 0x4 - core index']
  #allocation1 [shape = 'u32[144,128]{1,0:T(1,128)}', space=vmem, size = 0x12000, scoped, tag = 'internal scratch']
  %s0 = inlined_call_operand.hbm [shape: f32[529,128], index: 0, kind: input, shape index: {}]
  %s1 = inlined_call_operand.hbm [shape: f32[529,128], index: 1, kind: input, shape index: {}]
  %s2 = inlined_call_operand.hbm [shape: f32[32,128], index: 2, kind: output, shape index: {}]
  %s3 = sld [smem:[#allocation0]]
  $region30: #{tpu_custom_call.1} parent=0
    _
  %s5 = ssub.s32 1, %s3
  %s6 = scalar_select 0, %s5, %s3
  $region1: #{tpu_custom_call.1} parent=0
    #allocation2 [shape = 'u8[262144]{0}', space=vmem, size = 0x40000, scoped, tag = 'input window, operand 0, single buffered']
    #allocation3 [shape = 's32[1]{0}', space=sflag, size = 0x4, scoped, tag = 'scoped memory for tpu_custom_call.1']
    #allocation4 [shape = 's32[1]{0}', space=sflag, size = 0x4, scoped, tag = 'scoped memory for tpu_custom_call.1']
    #allocation5 [shape = 'u8[262144]{0}', space=vmem, size = 0x40000, scoped, tag = 'input window, operand 1, single buffered']
    #allocation6 [shape = 's32[1]{0}', space=sflag, size = 0x4, scoped, tag = 'scoped memory for tpu_custom_call.1']
    #allocation7 [shape = 'u8[16384]{0}', space=vmem, size = 0x4000, scoped, tag = 'output window, operand 0, single buffered']
    %7 = vsyncpa [#allocation3], 0
    %8 = vsyncpa [#allocation6], 0
    %9 = vsyncpa [#allocation4], 0
    // Predicated region
    $region2: #{tpu_custom_call.1} parent=1 // pred_check
      _
    $region3: #{tpu_custom_call.1} parent=1 // pred_check_branch
      %11 = sbr.rel (0) target = $region5
    $region4: #{tpu_custom_call.1} parent=1 // pred_region
      %s12 = sadd.s32 0, 0
      %s13 = smul.u32 64, %s12
      %s14 = ssub.s32 67, %s13
      %p15 = scmp.lt.s32.totalorder %s14, 64
      %s16 = scalar_select %p15, %s14, 64
      %s17 = smul.u32 128, %s16
      %s19 = ssub.s32 8192, %s17
      %20 = vsyncadd [#allocation3], %s19
      %p21 = scmp.ne.s32.totalorder 0, %s17
      %s22 = smul.addr %s13, 128
      %s23 = scalar_lea.hbm %s0, %s22
      %s24 = smul.u32 8, %s16
      %s25 = sshll.u32 [#allocation2], 4
      %s26 = int_to_ptr.vmem [resolvable:$true] %s25
      %s27 = sshll.u32 %s24, 4
      %31 = dma.hbm_to_vmem [thread:$0]  (%p21), %s23, %s27, %s26, [#allocation3], 128, 128, 8
    $region5: #{tpu_custom_call.1} parent=1 // pred_fallthru
      _
    // Predicated region
    $region6: #{tpu_custom_call.1} parent=1 // pred_check
      _
    $region7: #{tpu_custom_call.1} parent=1 // pred_check_branch
      %33 = sbr.rel (0) target = $region9
    $region8: #{tpu_custom_call.1} parent=1 // pred_region
      %s34 = sadd.s32 0, 0
      %s35 = smul.u32 64, %s34
      %s36 = ssub.s32 67, %s35
      %p37 = scmp.lt.s32.totalorder %s36, 64
      %s38 = scalar_select %p37, %s36, 64
      %s39 = smul.u32 128, %s38
      %s41 = ssub.s32 8192, %s39
      %42 = vsyncadd [#allocation6], %s41
      %p43 = scmp.ne.s32.totalorder 0, %s39
      %s44 = smul.addr %s35, 128
      %s45 = scalar_lea.hbm %s1, %s44
      %s46 = smul.u32 8, %s38
      %s47 = sshll.u32 [#allocation5], 4
      %s48 = int_to_ptr.vmem [resolvable:$true] %s47
      %s49 = sshll.u32 %s46, 4
      %53 = dma.hbm_to_vmem [thread:$0]  (%p43), %s45, %s49, %s48, [#allocation6], 128, 128, 8
    $region9: #{tpu_custom_call.1} parent=1 // pred_fallthru
      _
    // Predicated region
    $region10: #{tpu_custom_call.1} parent=1 // pred_check
      _
    $region11: #{tpu_custom_call.1} parent=1 // pred_check_branch
      %55 = sbr.rel (0) target = $region13
    $region12: #{tpu_custom_call.1} parent=1 // pred_region
      %56 = dma.done [#allocation3], 8192
    $region13: #{tpu_custom_call.1} parent=1 // pred_fallthru
      _
    // Predicated region
    $region14: #{tpu_custom_call.1} parent=1 // pred_check
      _
    $region15: #{tpu_custom_call.1} parent=1 // pred_check_branch
      %58 = sbr.rel (0) target = $region17
    $region16: #{tpu_custom_call.1} parent=1 // pred_region
      %59 = dma.done [#allocation6], 8192
    $region17: #{tpu_custom_call.1} parent=1 // pred_fallthru
      _
    %s60 = sadd.s32 0, 0
    %s61 = smul.u32 64, %s60
    %s62 = ssub.s32 67, %s61
    %p63 = scmp.lt.s32.totalorder %s62, 64
    %s64 = scalar_select %p63, %s62, 64
    %s65 = smul.u32 128, %s64
    %s66 = sadd.s32 0, 0
    %s67 = smul.u32 64, %s66
    %s68 = ssub.s32 67, %s67
    %p69 = scmp.lt.s32.totalorder %s68, 64
    %s70 = scalar_select %p69, %s68, 64
    %s71 = smul.u32 128, %s70
    %p72 = scmp.eq.s32.totalorder 0, 0
    // Predicated region
    $region18: #{tpu_custom_call.1} parent=1 // pred_check
      %p73 = pneg %p72
    $region19: #{tpu_custom_call.1} parent=1 // pred_check_branch
      %75 = sbr.rel (%p73) target = $region21
    $region20: #{tpu_custom_call.1} parent=1 // pred_region
      %76 = vst [vmem:[#allocation7] sm:$0xff] 0.0
      %77 = vst [vmem:[#allocation7 + $0x8] sm:$0xff] 0.0
      %78 = vst [vmem:[#allocation7 + $0x10] sm:$0xff] 0.0
      %79 = vst [vmem:[#allocation7 + $0x18] sm:$0xff] 0.0
    $region21: #{tpu_custom_call.1} parent=1 // pred_fallthru
      _
    %v80 = vld [vmem:[#allocation2] sm:$0xff]
    %v81 = vld [vmem:[#allocation2 + $0x8] sm:$0xff]
    %v82 = vld [vmem:[#allocation2 + $0x10] sm:$0xff]
    %v83 = vld [vmem:[#allocation2 + $0x18] sm:$0xff]
    %v84 = vld [vmem:[#allocation2 + $0x20] sm:$0xff]
    %v85 = vld [vmem:[#allocation2 + $0x28] sm:$0xff]
    %v86 = vld [vmem:[#allocation2 + $0x30] sm:$0xff]
    %v87 = vld [vmem:[#allocation2 + $0x38] sm:$0xff]
    %v88 = vld [vmem:[#allocation5] sm:$0xff]
    %v89 = vld [vmem:[#allocation5 + $0x8] sm:$0xff]
    %v90 = vld [vmem:[#allocation5 + $0x10] sm:$0xff]
    %v91 = vld [vmem:[#allocation5 + $0x18] sm:$0xff]
    %v92 = vld [vmem:[#allocation5 + $0x20] sm:$0xff]
    %v93 = vld [vmem:[#allocation5 + $0x28] sm:$0xff]
    %v94 = vld [vmem:[#allocation5 + $0x30] sm:$0xff]
    %v95 = vld [vmem:[#allocation5 + $0x38] sm:$0xff]
    %v96 = vand.u32 2147483647, %v80
    %v97 = vand.u32 2147483647, %v81
    %v98 = vand.u32 2147483647, %v82
    %v99 = vand.u32 2147483647, %v83
    %v100 = vand.u32 2147483647, %v84
    %v101 = vand.u32 2147483647, %v85
    %v102 = vand.u32 2147483647, %v86
    %v103 = vand.u32 2147483647, %v87
    %v104 = vsub.f32 0.0, %v96
    %v105 = vsub.f32 0.0, %v97
    %v106 = vsub.f32 0.0, %v98
    %v107 = vsub.f32 0.0, %v99
    %v108 = vsub.f32 0.0, %v100
    %v109 = vsub.f32 0.0, %v101
    %v110 = vsub.f32 0.0, %v102
    %v111 = vsub.f32 0.0, %v103
    %v112 = vmul.f32 %v104, 1.442695
    %v113 = vpow.pop %v112
    %v114 = vmul.f32 %v105, 1.442695
    %v115 = vpow.pop %v114
    %v116 = vmul.f32 %v106, 1.442695
    %v117 = vpow.pop %v116
    %v118 = vmul.f32 %v107, 1.442695
    %v119 = vpow.pop %v118
    %v120 = vmul.f32 %v108, 1.442695
    %v121 = vpow.pop %v120
    %v122 = vmul.f32 %v109, 1.442695
    %v123 = vpow.pop %v122
    %v124 = vmul.f32 %v110, 1.442695
    %v125 = vpow.pop %v124
    %v126 = vmul.f32 %v111, 1.442695
    %v127 = vpow.pop %v126
    %v128 = vmax.f32 %v80, 0.0
    %v129 = vmax.f32 %v81, 0.0
    %v130 = vmax.f32 %v82, 0.0
    %v131 = vmax.f32 %v83, 0.0
    %v132 = vmax.f32 %v84, 0.0
    %v133 = vmax.f32 %v85, 0.0
    %v134 = vmax.f32 %v86, 0.0
    %v135 = vmax.f32 %v87, 0.0
    %v136 = vmul.f32 %v80, %v88
    %v137 = vmul.f32 %v81, %v89
    %v138 = vmul.f32 %v82, %v90
    %v139 = vmul.f32 %v83, %v91
    %v140 = vmul.f32 %v84, %v92
    %v141 = vmul.f32 %v85, %v93
    %v142 = vmul.f32 %v86, %v94
    %v143 = vmul.f32 %v87, %v95
    %v144 = vsub.f32 %v128, %v136
    %v145 = vsub.f32 %v129, %v137
    %v146 = vsub.f32 %v130, %v138
    %v147 = vsub.f32 %v131, %v139
    %v148 = vsub.f32 %v132, %v140
    %v149 = vsub.f32 %v133, %v141
    %v150 = vsub.f32 %v134, %v142
    %v151 = vsub.f32 %v135, %v143
    %v152 = vadd.f32 %v113, 1.0
    %v153 = vlog2.pop %v152
    %v154 = vmul.f32 %v153, 0.6931472
    %v155 = vmul.f32 -0.5, %v113
    %v156 = vadd.f32 %v155, 1.0
    %v157 = vmul.f32 %v156, %v113
    %v158 = vand.u32 2147483647, %v113
    %vm159 = vcmp.lt.f32.partialorder %v158, 0.0004427343
    %v160 = vsel %vm159, %v157, %v154
    %v161 = vadd.f32 %v115, 1.0
    %v162 = vlog2.pop %v161
    %v163 = vmul.f32 %v162, 0.6931472
    %v164 = vmul.f32 -0.5, %v115
    %v165 = vadd.f32 %v164, 1.0
    %v166 = vmul.f32 %v165, %v115
    %v167 = vand.u32 2147483647, %v115
    %vm168 = vcmp.lt.f32.partialorder %v167, 0.0004427343
    %v169 = vsel %vm168, %v166, %v163
    %v170 = vadd.f32 %v117, 1.0
    %v171 = vlog2.pop %v170
    %v172 = vmul.f32 %v171, 0.6931472
    %v173 = vmul.f32 -0.5, %v117
    %v174 = vadd.f32 %v173, 1.0
    %v175 = vmul.f32 %v174, %v117
    %v176 = vand.u32 2147483647, %v117
    %vm177 = vcmp.lt.f32.partialorder %v176, 0.0004427343
    %v178 = vsel %vm177, %v175, %v172
    %v179 = vadd.f32 %v119, 1.0
    %v180 = vlog2.pop %v179
    %v181 = vmul.f32 %v180, 0.6931472
    %v182 = vmul.f32 -0.5, %v119
    %v183 = vadd.f32 %v182, 1.0
    %v184 = vmul.f32 %v183, %v119
    %v185 = vand.u32 2147483647, %v119
    %vm186 = vcmp.lt.f32.partialorder %v185, 0.0004427343
    %v187 = vsel %vm186, %v184, %v181
    %v188 = vadd.f32 %v121, 1.0
    %v189 = vlog2.pop %v188
    %v190 = vmul.f32 %v189, 0.6931472
    %v191 = vmul.f32 -0.5, %v121
    %v192 = vadd.f32 %v191, 1.0
    %v193 = vmul.f32 %v192, %v121
    %v194 = vand.u32 2147483647, %v121
    %vm195 = vcmp.lt.f32.partialorder %v194, 0.0004427343
    %v196 = vsel %vm195, %v193, %v190
    %v197 = vadd.f32 %v123, 1.0
    %v198 = vlog2.pop %v197
    %v199 = vmul.f32 %v198, 0.6931472
    %v200 = vmul.f32 -0.5, %v123
    %v201 = vadd.f32 %v200, 1.0
    %v202 = vmul.f32 %v201, %v123
    %v203 = vand.u32 2147483647, %v123
    %vm204 = vcmp.lt.f32.partialorder %v203, 0.0004427343
    %v205 = vsel %vm204, %v202, %v199
    %v206 = vadd.f32 %v125, 1.0
    %v207 = vlog2.pop %v206
    %v208 = vmul.f32 %v207, 0.6931472
    %v209 = vmul.f32 -0.5, %v125
    %v210 = vadd.f32 %v209, 1.0
    %v211 = vmul.f32 %v210, %v125
    %v212 = vand.u32 2147483647, %v125
    %vm213 = vcmp.lt.f32.partialorder %v212, 0.0004427343
    %v214 = vsel %vm213, %v211, %v208
    %v215 = vadd.f32 %v127, 1.0
    %v216 = vlog2.pop %v215
    %v217 = vmul.f32 %v216, 0.6931472
    %v218 = vmul.f32 -0.5, %v127
    %v219 = vadd.f32 %v218, 1.0
    %v220 = vmul.f32 %v219, %v127
    %v221 = vand.u32 2147483647, %v127
    %vm222 = vcmp.lt.f32.partialorder %v221, 0.0004427343
    %v223 = vsel %vm222, %v220, %v217
    %v224 = vadd.f32 %v144, %v160
    %v225 = vadd.f32 %v145, %v169
    %v226 = vadd.f32 %v146, %v178
    %v227 = vadd.f32 %v147, %v187
    %v228 = vadd.f32 %v148, %v196
    %v229 = vadd.f32 %v149, %v205
    %v230 = vadd.f32 %v150, %v214
    %v231 = vadd.f32 %v151, %v223
    %v232 = vadd.f32 %v113, 1.0
    %v233 = vadd.f32 %v115, 1.0
    %v234 = vadd.f32 %v117, 1.0
    %v235 = vadd.f32 %v119, 1.0
    %v236 = vadd.f32 %v121, 1.0
    %v237 = vadd.f32 %v123, 1.0
    %v238 = vadd.f32 %v125, 1.0
    %v239 = vadd.f32 %v127, 1.0
    %v240 = vrcp.pop %v232
    %v241 = vrcp.pop %v233
    %v242 = vrcp.pop %v234
    %v243 = vrcp.pop %v235
    %v244 = vrcp.pop %v236
    %v245 = vrcp.pop %v237
    %v246 = vrcp.pop %v238
    %v247 = vrcp.pop %v239
    %vm248 = vcmp.ge.f32.partialorder %v80, 0.0
    %vm249 = vcmp.ge.f32.partialorder %v81, 0.0
    %vm250 = vcmp.ge.f32.partialorder %v82, 0.0
    %vm251 = vcmp.ge.f32.partialorder %v83, 0.0
    %vm252 = vcmp.ge.f32.partialorder %v84, 0.0
    %vm253 = vcmp.ge.f32.partialorder %v85, 0.0
    %vm254 = vcmp.ge.f32.partialorder %v86, 0.0
    %vm255 = vcmp.ge.f32.partialorder %v87, 0.0
    %v256 = vmul.f32 %v113, %v240
    %v257 = vmul.f32 %v115, %v241
    %v258 = vmul.f32 %v117, %v242
    %v259 = vmul.f32 %v119, %v243
    %v260 = vmul.f32 %v121, %v244
    %v261 = vmul.f32 %v123, %v245
    %v262 = vmul.f32 %v125, %v246
    %v263 = vmul.f32 %v127, %v247
    %v264 = vsel %vm248, %v240, %v256
    %v265 = vsel %vm249, %v241, %v257
    %v266 = vsel %vm250, %v242, %v258
    %v267 = vsel %vm251, %v243, %v259
    %v268 = vsel %vm252, %v244, %v260
    %v269 = vsel %vm253, %v245, %v261
    %v270 = vsel %vm254, %v246, %v262
    %v271 = vsel %vm255, %v247, %v263
    %v272 = vsub.f32 %v264, %v88
    %v273 = vsub.f32 %v265, %v89
    %v274 = vsub.f32 %v266, %v90
    %v275 = vsub.f32 %v267, %v91
    %v276 = vsub.f32 %v268, %v92
    %v277 = vsub.f32 %v269, %v93
    %v278 = vsub.f32 %v270, %v94
    %v279 = vsub.f32 %v271, %v95
    %v280 = vand.u32 2147483647, %v272
    %v281 = vand.u32 2147483647, %v273
    %v282 = vand.u32 2147483647, %v274
    %v283 = vand.u32 2147483647, %v275
    %v284 = vand.u32 2147483647, %v276
    %v285 = vand.u32 2147483647, %v277
    %v286 = vand.u32 2147483647, %v278
    %v287 = vand.u32 2147483647, %v279
    %v288 = vrsqrt.pop %v280
    %v289 = vmul.f32 %v280, %v288
    %vm290 = vcmp.eq.f32.partialorder %v280, inf
    %v291 = vsel %vm290, %v280, %v289
    %vm292 = vcmp.eq.f32.partialorder %v280, 0.0
    %v293 = vand.u32 %v280, 2147483648
    %v294 = vsel %vm292, %v293, %v291
    %v295 = vrsqrt.pop %v281
    %v296 = vmul.f32 %v281, %v295
    %vm297 = vcmp.eq.f32.partialorder %v281, inf
    %v298 = vsel %vm297, %v281, %v296
    %vm299 = vcmp.eq.f32.partialorder %v281, 0.0
    %v300 = vand.u32 %v281, 2147483648
    %v301 = vsel %vm299, %v300, %v298
    %v302 = vrsqrt.pop %v282
    %v303 = vmul.f32 %v282, %v302
    %vm304 = vcmp.eq.f32.partialorder %v282, inf
    %v305 = vsel %vm304, %v282, %v303
    %vm306 = vcmp.eq.f32.partialorder %v282, 0.0
    %v307 = vand.u32 %v282, 2147483648
    %v308 = vsel %vm306, %v307, %v305
    %v309 = vrsqrt.pop %v283
    %v310 = vmul.f32 %v283, %v309
    %vm311 = vcmp.eq.f32.partialorder %v283, inf
    %v312 = vsel %vm311, %v283, %v310
    %vm313 = vcmp.eq.f32.partialorder %v283, 0.0
    %v314 = vand.u32 %v283, 2147483648
    %v315 = vsel %vm313, %v314, %v312
    %v316 = vrsqrt.pop %v284
    %v317 = vmul.f32 %v284, %v316
    %vm318 = vcmp.eq.f32.partialorder %v284, inf
    %v319 = vsel %vm318, %v284, %v317
    %vm320 = vcmp.eq.f32.partialorder %v284, 0.0
    %v321 = vand.u32 %v284, 2147483648
    %v322 = vsel %vm320, %v321, %v319
    %v323 = vrsqrt.pop %v285
    %v324 = vmul.f32 %v285, %v323
    %vm325 = vcmp.eq.f32.partialorder %v285, inf
    %v326 = vsel %vm325, %v285, %v324
    %vm327 = vcmp.eq.f32.partialorder %v285, 0.0
    %v328 = vand.u32 %v285, 2147483648
    %v329 = vsel %vm327, %v328, %v326
    %v330 = vrsqrt.pop %v286
    %v331 = vmul.f32 %v286, %v330
    %vm332 = vcmp.eq.f32.partialorder %v286, inf
    %v333 = vsel %vm332, %v286, %v331
    %vm334 = vcmp.eq.f32.partialorder %v286, 0.0
    %v335 = vand.u32 %v286, 2147483648
    %v336 = vsel %vm334, %v335, %v333
    %v337 = vrsqrt.pop %v287
    %v338 = vmul.f32 %v287, %v337
    %vm339 = vcmp.eq.f32.partialorder %v287, inf
    %v340 = vsel %vm339, %v287, %v338
    %vm341 = vcmp.eq.f32.partialorder %v287, 0.0
    %v342 = vand.u32 %v287, 2147483648
    %v343 = vsel %vm341, %v342, %v340
    %v344 = vmul.f32 %v280, %v294
    %v345 = vmul.f32 %v281, %v301
    %v346 = vmul.f32 %v282, %v308
    %v347 = vmul.f32 %v283, %v315
    %v348 = vmul.f32 %v284, %v322
    %v349 = vmul.f32 %v285, %v329
    %v350 = vmul.f32 %v286, %v336
    %v351 = vmul.f32 %v287, %v343
    %v352 = vadd.f32 %v224, %v225
    %v353 = vadd.f32 %v352, %v226
    %v354 = vadd.f32 %v353, %v227
    %v355 = vadd.f32 %v354, %v228
    %v356 = vadd.f32 %v355, %v229
    %v357 = vadd.f32 %v356, %v230
    %v358 = vadd.f32 %v357, %v231
    %v359 = vadd.f32 %v344, %v345
    %v360 = vadd.f32 %v359, %v346
    %v361 = vadd.f32 %v360, %v347
    %v362 = vadd.f32 %v361, %v348
    %v363 = vadd.f32 %v362, %v349
    %v364 = vadd.f32 %v363, %v350
    %v365 = vadd.f32 %v364, %v351
    %v366 = vmul.f32 %v264, %v264
    %v367 = vmul.f32 %v265, %v265
    %v368 = vmul.f32 %v266, %v266
    %v369 = vmul.f32 %v267, %v267
    %v370 = vmul.f32 %v268, %v268
    %v371 = vmul.f32 %v269, %v269
    %v372 = vmul.f32 %v270, %v270
    %v373 = vmul.f32 %v271, %v271
    %v374 = vadd.f32 %v366, %v367
    %v375 = vadd.f32 %v374, %v368
    %v376 = vadd.f32 %v375, %v369
    %v377 = vadd.f32 %v376, %v370
    %v378 = vadd.f32 %v377, %v371
    %v379 = vadd.f32 %v378, %v372
    %v380 = vadd.f32 %v379, %v373
    %v381 = vmul.f32 %v88, %v88
    %v382 = vmul.f32 %v89, %v89
    %v383 = vmul.f32 %v90, %v90
    %v384 = vmul.f32 %v91, %v91
    %v385 = vmul.f32 %v92, %v92
    %v386 = vmul.f32 %v93, %v93
    %v387 = vmul.f32 %v94, %v94
    %v388 = vmul.f32 %v95, %v95
    %v389 = vadd.f32 %v381, %v382
    %v390 = vadd.f32 %v389, %v383
    %v391 = vadd.f32 %v390, %v384
    %v392 = vadd.f32 %v391, %v385
    %v393 = vadd.f32 %v392, %v386
    %v394 = vadd.f32 %v393, %v387
    %v395 = vadd.f32 %v394, %v388
    %v396 = vadd.f32 %v358, 0.0
    %v397 = vadd.f32 %v365, 0.0
    %v398 = vadd.f32 %v380, 0.0
    %v399 = vadd.f32 %v395, 0.0
    %v400 = vld [vmem:[#allocation2 + $0x40] sm:$0xff]
    %v401 = vld [vmem:[#allocation2 + $0x48] sm:$0xff]
    %v402 = vld [vmem:[#allocation2 + $0x50] sm:$0xff]
    %v403 = vld [vmem:[#allocation2 + $0x58] sm:$0xff]
    %v404 = vld [vmem:[#allocation2 + $0x60] sm:$0xff]
    %v405 = vld [vmem:[#allocation2 + $0x68] sm:$0xff]
    %v406 = vld [vmem:[#allocation2 + $0x70] sm:$0xff]
    %v407 = vld [vmem:[#allocation2 + $0x78] sm:$0xff]
    %v408 = vld [vmem:[#allocation5 + $0x40] sm:$0xff]
    %v409 = vld [vmem:[#allocation5 + $0x48] sm:$0xff]
    %v410 = vld [vmem:[#allocation5 + $0x50] sm:$0xff]
    %v411 = vld [vmem:[#allocation5 + $0x58] sm:$0xff]
    %v412 = vld [vmem:[#allocation5 + $0x60] sm:$0xff]
    %v413 = vld [vmem:[#allocation5 + $0x68] sm:$0xff]
    %v414 = vld [vmem:[#allocation5 + $0x70] sm:$0xff]
    %v415 = vld [vmem:[#allocation5 + $0x78] sm:$0xff]
    %v416 = vand.u32 2147483647, %v400
    %v417 = vand.u32 2147483647, %v401
    %v418 = vand.u32 2147483647, %v402
    %v419 = vand.u32 2147483647, %v403
    %v420 = vand.u32 2147483647, %v404
    %v421 = vand.u32 2147483647, %v405
    %v422 = vand.u32 2147483647, %v406
    %v423 = vand.u32 2147483647, %v407
    %v424 = vsub.f32 0.0, %v416
    %v425 = vsub.f32 0.0, %v417
    %v426 = vsub.f32 0.0, %v418
    %v427 = vsub.f32 0.0, %v419
    %v428 = vsub.f32 0.0, %v420
    %v429 = vsub.f32 0.0, %v421
    %v430 = vsub.f32 0.0, %v422
    %v431 = vsub.f32 0.0, %v423
    %v432 = vmul.f32 %v424, 1.442695
    %v433 = vpow.pop %v432
    %v434 = vmul.f32 %v425, 1.442695
    %v435 = vpow.pop %v434
    %v436 = vmul.f32 %v426, 1.442695
    %v437 = vpow.pop %v436
    %v438 = vmul.f32 %v427, 1.442695
    %v439 = vpow.pop %v438
    %v440 = vmul.f32 %v428, 1.442695
    %v441 = vpow.pop %v440
    %v442 = vmul.f32 %v429, 1.442695
    %v443 = vpow.pop %v442
    %v444 = vmul.f32 %v430, 1.442695
    %v445 = vpow.pop %v444
    %v446 = vmul.f32 %v431, 1.442695
    %v447 = vpow.pop %v446
    %v448 = vmax.f32 %v400, 0.0
    %v449 = vmax.f32 %v401, 0.0
    %v450 = vmax.f32 %v402, 0.0
    %v451 = vmax.f32 %v403, 0.0
    %v452 = vmax.f32 %v404, 0.0
    %v453 = vmax.f32 %v405, 0.0
    %v454 = vmax.f32 %v406, 0.0
    %v455 = vmax.f32 %v407, 0.0
    %v456 = vmul.f32 %v400, %v408
    %v457 = vmul.f32 %v401, %v409
    %v458 = vmul.f32 %v402, %v410
    %v459 = vmul.f32 %v403, %v411
    %v460 = vmul.f32 %v404, %v412
    %v461 = vmul.f32 %v405, %v413
    %v462 = vmul.f32 %v406, %v414
    %v463 = vmul.f32 %v407, %v415
    %v464 = vsub.f32 %v448, %v456
    %v465 = vsub.f32 %v449, %v457
    %v466 = vsub.f32 %v450, %v458
    %v467 = vsub.f32 %v451, %v459
    %v468 = vsub.f32 %v452, %v460
    %v469 = vsub.f32 %v453, %v461
    %v470 = vsub.f32 %v454, %v462
    %v471 = vsub.f32 %v455, %v463
    %v472 = vadd.f32 %v433, 1.0
    %v473 = vlog2.pop %v472
    %v474 = vmul.f32 %v473, 0.6931472
    %v475 = vmul.f32 -0.5, %v433
    %v476 = vadd.f32 %v475, 1.0
    %v477 = vmul.f32 %v476, %v433
    %v478 = vand.u32 2147483647, %v433
    %vm479 = vcmp.lt.f32.partialorder %v478, 0.0004427343
    %v480 = vsel %vm479, %v477, %v474
    %v481 = vadd.f32 %v435, 1.0
    %v482 = vlog2.pop %v481
    %v483 = vmul.f32 %v482, 0.6931472
    %v484 = vmul.f32 -0.5, %v435
    %v485 = vadd.f32 %v484, 1.0
    %v486 = vmul.f32 %v485, %v435
    %v487 = vand.u32 2147483647, %v435
    %vm488 = vcmp.lt.f32.partialorder %v487, 0.0004427343
    %v489 = vsel %vm488, %v486, %v483
    %v490 = vadd.f32 %v437, 1.0
    %v491 = vlog2.pop %v490
    %v492 = vmul.f32 %v491, 0.6931472
    %v493 = vmul.f32 -0.5, %v437
    %v494 = vadd.f32 %v493, 1.0
    %v495 = vmul.f32 %v494, %v437
    %v496 = vand.u32 2147483647, %v437
    %vm497 = vcmp.lt.f32.partialorder %v496, 0.0004427343
    %v498 = vsel %vm497, %v495, %v492
    %v499 = vadd.f32 %v439, 1.0
    %v500 = vlog2.pop %v499
    %v501 = vmul.f32 %v500, 0.6931472
    %v502 = vmul.f32 -0.5, %v439
    %v503 = vadd.f32 %v502, 1.0
    %v504 = vmul.f32 %v503, %v439
    %v505 = vand.u32 2147483647, %v439
    %vm506 = vcmp.lt.f32.partialorder %v505, 0.0004427343
    %v507 = vsel %vm506, %v504, %v501
    %v508 = vadd.f32 %v441, 1.0
    %v509 = vlog2.pop %v508
    %v510 = vmul.f32 %v509, 0.6931472
    %v511 = vmul.f32 -0.5, %v441
    %v512 = vadd.f32 %v511, 1.0
    %v513 = vmul.f32 %v512, %v441
    %v514 = vand.u32 2147483647, %v441
    %vm515 = vcmp.lt.f32.partialorder %v514, 0.0004427343
    %v516 = vsel %vm515, %v513, %v510
    %v517 = vadd.f32 %v443, 1.0
    %v518 = vlog2.pop %v517
    %v519 = vmul.f32 %v518, 0.6931472
    %v520 = vmul.f32 -0.5, %v443
    %v521 = vadd.f32 %v520, 1.0
    %v522 = vmul.f32 %v521, %v443
    %v523 = vand.u32 2147483647, %v443
    %vm524 = vcmp.lt.f32.partialorder %v523, 0.0004427343
    %v525 = vsel %vm524, %v522, %v519
    %v526 = vadd.f32 %v445, 1.0
    %v527 = vlog2.pop %v526
    %v528 = vmul.f32 %v527, 0.6931472
    %v529 = vmul.f32 -0.5, %v445
    %v530 = vadd.f32 %v529, 1.0
    %v531 = vmul.f32 %v530, %v445
    %v532 = vand.u32 2147483647, %v445
    %vm533 = vcmp.lt.f32.partialorder %v532, 0.0004427343
    %v534 = vsel %vm533, %v531, %v528
    %v535 = vadd.f32 %v447, 1.0
    %v536 = vlog2.pop %v535
    %v537 = vmul.f32 %v536, 0.6931472
    %v538 = vmul.f32 -0.5, %v447
    %v539 = vadd.f32 %v538, 1.0
    %v540 = vmul.f32 %v539, %v447
    %v541 = vand.u32 2147483647, %v447
    %vm542 = vcmp.lt.f32.partialorder %v541, 0.0004427343
    %v543 = vsel %vm542, %v540, %v537
    %v544 = vadd.f32 %v464, %v480
    %v545 = vadd.f32 %v465, %v489
    %v546 = vadd.f32 %v466, %v498
    %v547 = vadd.f32 %v467, %v507
    %v548 = vadd.f32 %v468, %v516
    %v549 = vadd.f32 %v469, %v525
    %v550 = vadd.f32 %v470, %v534
    %v551 = vadd.f32 %v471, %v543
    %v552 = vadd.f32 %v433, 1.0
    %v553 = vadd.f32 %v435, 1.0
    %v554 = vadd.f32 %v437, 1.0
    %v555 = vadd.f32 %v439, 1.0
    %v556 = vadd.f32 %v441, 1.0
    %v557 = vadd.f32 %v443, 1.0
    %v558 = vadd.f32 %v445, 1.0
    %v559 = vadd.f32 %v447, 1.0
    %v560 = vrcp.pop %v552
    %v561 = vrcp.pop %v553
    %v562 = vrcp.pop %v554
    %v563 = vrcp.pop %v555
    %v564 = vrcp.pop %v556
    %v565 = vrcp.pop %v557
    %v566 = vrcp.pop %v558
    %v567 = vrcp.pop %v559
    %vm568 = vcmp.ge.f32.partialorder %v400, 0.0
    %vm569 = vcmp.ge.f32.partialorder %v401, 0.0
    %vm570 = vcmp.ge.f32.partialorder %v402, 0.0
    %vm571 = vcmp.ge.f32.partialorder %v403, 0.0
    %vm572 = vcmp.ge.f32.partialorder %v404, 0.0
    %vm573 = vcmp.ge.f32.partialorder %v405, 0.0
    %vm574 = vcmp.ge.f32.partialorder %v406, 0.0
    %vm575 = vcmp.ge.f32.partialorder %v407, 0.0
    %v576 = vmul.f32 %v433, %v560
    %v577 = vmul.f32 %v435, %v561
    %v578 = vmul.f32 %v437, %v562
    %v579 = vmul.f32 %v439, %v563
    %v580 = vmul.f32 %v441, %v564
    %v581 = vmul.f32 %v443, %v565
    %v582 = vmul.f32 %v445, %v566
    %v583 = vmul.f32 %v447, %v567
    %v584 = vsel %vm568, %v560, %v576
    %v585 = vsel %vm569, %v561, %v577
    %v586 = vsel %vm570, %v562, %v578
    %v587 = vsel %vm571, %v563, %v579
    %v588 = vsel %vm572, %v564, %v580
    %v589 = vsel %vm573, %v565, %v581
    %v590 = vsel %vm574, %v566, %v582
    %v591 = vsel %vm575, %v567, %v583
    %v592 = vsub.f32 %v584, %v408
    %v593 = vsub.f32 %v585, %v409
    %v594 = vsub.f32 %v586, %v410
    %v595 = vsub.f32 %v587, %v411
    %v596 = vsub.f32 %v588, %v412
    %v597 = vsub.f32 %v589, %v413
    %v598 = vsub.f32 %v590, %v414
    %v599 = vsub.f32 %v591, %v415
    %v600 = vand.u32 2147483647, %v592
    %v601 = vand.u32 2147483647, %v593
    %v602 = vand.u32 2147483647, %v594
    %v603 = vand.u32 2147483647, %v595
    %v604 = vand.u32 2147483647, %v596
    %v605 = vand.u32 2147483647, %v597
    %v606 = vand.u32 2147483647, %v598
    %v607 = vand.u32 2147483647, %v599
    %v608 = vrsqrt.pop %v600
    %v609 = vmul.f32 %v600, %v608
    %vm610 = vcmp.eq.f32.partialorder %v600, inf
    %v611 = vsel %vm610, %v600, %v609
    %vm612 = vcmp.eq.f32.partialorder %v600, 0.0
    %v613 = vand.u32 %v600, 2147483648
    %v614 = vsel %vm612, %v613, %v611
    %v615 = vrsqrt.pop %v601
    %v616 = vmul.f32 %v601, %v615
    %vm617 = vcmp.eq.f32.partialorder %v601, inf
    %v618 = vsel %vm617, %v601, %v616
    %vm619 = vcmp.eq.f32.partialorder %v601, 0.0
    %v620 = vand.u32 %v601, 2147483648
    %v621 = vsel %vm619, %v620, %v618
    %v622 = vrsqrt.pop %v602
    %v623 = vmul.f32 %v602, %v622
    %vm624 = vcmp.eq.f32.partialorder %v602, inf
    %v625 = vsel %vm624, %v602, %v623
    %vm626 = vcmp.eq.f32.partialorder %v602, 0.0
    %v627 = vand.u32 %v602, 2147483648
    %v628 = vsel %vm626, %v627, %v625
    %v629 = vrsqrt.pop %v603
    %v630 = vmul.f32 %v603, %v629
    %vm631 = vcmp.eq.f32.partialorder %v603, inf
    %v632 = vsel %vm631, %v603, %v630
    %vm633 = vcmp.eq.f32.partialorder %v603, 0.0
    %v634 = vand.u32 %v603, 2147483648
    %v635 = vsel %vm633, %v634, %v632
    %v636 = vrsqrt.pop %v604
    %v637 = vmul.f32 %v604, %v636
    %vm638 = vcmp.eq.f32.partialorder %v604, inf
    %v639 = vsel %vm638, %v604, %v637
    %vm640 = vcmp.eq.f32.partialorder %v604, 0.0
    %v641 = vand.u32 %v604, 2147483648
    %v642 = vsel %vm640, %v641, %v639
    %v643 = vrsqrt.pop %v605
    %v644 = vmul.f32 %v605, %v643
    %vm645 = vcmp.eq.f32.partialorder %v605, inf
    %v646 = vsel %vm645, %v605, %v644
    %vm647 = vcmp.eq.f32.partialorder %v605, 0.0
    %v648 = vand.u32 %v605, 2147483648
    %v649 = vsel %vm647, %v648, %v646
    %v650 = vrsqrt.pop %v606
    %v651 = vmul.f32 %v606, %v650
    %vm652 = vcmp.eq.f32.partialorder %v606, inf
    %v653 = vsel %vm652, %v606, %v651
    %vm654 = vcmp.eq.f32.partialorder %v606, 0.0
    %v655 = vand.u32 %v606, 2147483648
    %v656 = vsel %vm654, %v655, %v653
    %v657 = vrsqrt.pop %v607
    %v658 = vmul.f32 %v607, %v657
    %vm659 = vcmp.eq.f32.partialorder %v607, inf
    %v660 = vsel %vm659, %v607, %v658
    %vm661 = vcmp.eq.f32.partialorder %v607, 0.0
    %v662 = vand.u32 %v607, 2147483648
    %v663 = vsel %vm661, %v662, %v660
    %v664 = vmul.f32 %v600, %v614
    %v665 = vmul.f32 %v601, %v621
    %v666 = vmul.f32 %v602, %v628
    %v667 = vmul.f32 %v603, %v635
    %v668 = vmul.f32 %v604, %v642
    %v669 = vmul.f32 %v605, %v649
    %v670 = vmul.f32 %v606, %v656
    %v671 = vmul.f32 %v607, %v663
    %v672 = vadd.f32 %v544, %v545
    %v673 = vadd.f32 %v672, %v546
    %v674 = vadd.f32 %v673, %v547
    %v675 = vadd.f32 %v674, %v548
    %v676 = vadd.f32 %v675, %v549
    %v677 = vadd.f32 %v676, %v550
    %v678 = vadd.f32 %v677, %v551
    %v679 = vadd.f32 %v664, %v665
    %v680 = vadd.f32 %v679, %v666
    %v681 = vadd.f32 %v680, %v667
    %v682 = vadd.f32 %v681, %v668
    %v683 = vadd.f32 %v682, %v669
    %v684 = vadd.f32 %v683, %v670
    %v685 = vadd.f32 %v684, %v671
    %v686 = vmul.f32 %v584, %v584
    %v687 = vmul.f32 %v585, %v585
    %v688 = vmul.f32 %v586, %v586
    %v689 = vmul.f32 %v587, %v587
    %v690 = vmul.f32 %v588, %v588
    %v691 = vmul.f32 %v589, %v589
    %v692 = vmul.f32 %v590, %v590
    %v693 = vmul.f32 %v591, %v591
    %v694 = vadd.f32 %v686, %v687
    %v695 = vadd.f32 %v694, %v688
    %v696 = vadd.f32 %v695, %v689
    %v697 = vadd.f32 %v696, %v690
    %v698 = vadd.f32 %v697, %v691
    %v699 = vadd.f32 %v698, %v692
    %v700 = vadd.f32 %v699, %v693
    %v701 = vmul.f32 %v408, %v408
    %v702 = vmul.f32 %v409, %v409
    %v703 = vmul.f32 %v410, %v410
    %v704 = vmul.f32 %v411, %v411
    %v705 = vmul.f32 %v412, %v412
    %v706 = vmul.f32 %v413, %v413
    %v707 = vmul.f32 %v414, %v414
    %v708 = vmul.f32 %v415, %v415
    %v709 = vadd.f32 %v701, %v702
    %v710 = vadd.f32 %v709, %v703
    %v711 = vadd.f32 %v710, %v704
    %v712 = vadd.f32 %v711, %v705
    %v713 = vadd.f32 %v712, %v706
    %v714 = vadd.f32 %v713, %v707
    %v715 = vadd.f32 %v714, %v708
    %v716 = vadd.f32 %v396, %v678
    %v717 = vadd.f32 %v397, %v685
    %v718 = vadd.f32 %v398, %v700
    %v719 = vadd.f32 %v399, %v715
    %v720 = vld [vmem:[#allocation2 + $0x80] sm:$0xff]
    %v721 = vld [vmem:[#allocation2 + $0x88] sm:$0xff]
    %v722 = vld [vmem:[#allocation2 + $0x90] sm:$0xff]
    %v723 = vld [vmem:[#allocation2 + $0x98] sm:$0xff]
    %v724 = vld [vmem:[#allocation2 + $0xa0] sm:$0xff]
    %v725 = vld [vmem:[#allocation2 + $0xa8] sm:$0xff]
    %v726 = vld [vmem:[#allocation2 + $0xb0] sm:$0xff]
    %v727 = vld [vmem:[#allocation2 + $0xb8] sm:$0xff]
    %v728 = vld [vmem:[#allocation5 + $0x80] sm:$0xff]
    %v729 = vld [vmem:[#allocation5 + $0x88] sm:$0xff]
    %v730 = vld [vmem:[#allocation5 + $0x90] sm:$0xff]
    %v731 = vld [vmem:[#allocation5 + $0x98] sm:$0xff]
    %v732 = vld [vmem:[#allocation5 + $0xa0] sm:$0xff]
    %v733 = vld [vmem:[#allocation5 + $0xa8] sm:$0xff]
    %v734 = vld [vmem:[#allocation5 + $0xb0] sm:$0xff]
    %v735 = vld [vmem:[#allocation5 + $0xb8] sm:$0xff]
    %v736 = vand.u32 2147483647, %v720
    %v737 = vand.u32 2147483647, %v721
    %v738 = vand.u32 2147483647, %v722
    %v739 = vand.u32 2147483647, %v723
    %v740 = vand.u32 2147483647, %v724
    %v741 = vand.u32 2147483647, %v725
    %v742 = vand.u32 2147483647, %v726
    %v743 = vand.u32 2147483647, %v727
    %v744 = vsub.f32 0.0, %v736
    %v745 = vsub.f32 0.0, %v737
    %v746 = vsub.f32 0.0, %v738
    %v747 = vsub.f32 0.0, %v739
    %v748 = vsub.f32 0.0, %v740
    %v749 = vsub.f32 0.0, %v741
    %v750 = vsub.f32 0.0, %v742
    %v751 = vsub.f32 0.0, %v743
    %v752 = vmul.f32 %v744, 1.442695
    %v753 = vpow.pop %v752
    %v754 = vmul.f32 %v745, 1.442695
    %v755 = vpow.pop %v754
    %v756 = vmul.f32 %v746, 1.442695
    %v757 = vpow.pop %v756
    %v758 = vmul.f32 %v747, 1.442695
    %v759 = vpow.pop %v758
    %v760 = vmul.f32 %v748, 1.442695
    %v761 = vpow.pop %v760
    %v762 = vmul.f32 %v749, 1.442695
    %v763 = vpow.pop %v762
    %v764 = vmul.f32 %v750, 1.442695
    %v765 = vpow.pop %v764
    %v766 = vmul.f32 %v751, 1.442695
    %v767 = vpow.pop %v766
    %v768 = vmax.f32 %v720, 0.0
    %v769 = vmax.f32 %v721, 0.0
    %v770 = vmax.f32 %v722, 0.0
    %v771 = vmax.f32 %v723, 0.0
    %v772 = vmax.f32 %v724, 0.0
    %v773 = vmax.f32 %v725, 0.0
    %v774 = vmax.f32 %v726, 0.0
    %v775 = vmax.f32 %v727, 0.0
    %v776 = vmul.f32 %v720, %v728
    %v777 = vmul.f32 %v721, %v729
    %v778 = vmul.f32 %v722, %v730
    %v779 = vmul.f32 %v723, %v731
    %v780 = vmul.f32 %v724, %v732
    %v781 = vmul.f32 %v725, %v733
    %v782 = vmul.f32 %v726, %v734
    %v783 = vmul.f32 %v727, %v735
    %v784 = vsub.f32 %v768, %v776
    %v785 = vsub.f32 %v769, %v777
    %v786 = vsub.f32 %v770, %v778
    %v787 = vsub.f32 %v771, %v779
    %v788 = vsub.f32 %v772, %v780
    %v789 = vsub.f32 %v773, %v781
    %v790 = vsub.f32 %v774, %v782
    %v791 = vsub.f32 %v775, %v783
    %v792 = vadd.f32 %v753, 1.0
    %v793 = vlog2.pop %v792
    %v794 = vmul.f32 %v793, 0.6931472
    %v795 = vmul.f32 -0.5, %v753
    %v796 = vadd.f32 %v795, 1.0
    %v797 = vmul.f32 %v796, %v753
    %v798 = vand.u32 2147483647, %v753
    %vm799 = vcmp.lt.f32.partialorder %v798, 0.0004427343
    %v800 = vsel %vm799, %v797, %v794
    %v801 = vadd.f32 %v755, 1.0
    %v802 = vlog2.pop %v801
    %v803 = vmul.f32 %v802, 0.6931472
    %v804 = vmul.f32 -0.5, %v755
    %v805 = vadd.f32 %v804, 1.0
    %v806 = vmul.f32 %v805, %v755
    %v807 = vand.u32 2147483647, %v755
    %vm808 = vcmp.lt.f32.partialorder %v807, 0.0004427343
    %v809 = vsel %vm808, %v806, %v803
    %v810 = vadd.f32 %v757, 1.0
    %v811 = vlog2.pop %v810
    %v812 = vmul.f32 %v811, 0.6931472
    %v813 = vmul.f32 -0.5, %v757
    %v814 = vadd.f32 %v813, 1.0
    %v815 = vmul.f32 %v814, %v757
    %v816 = vand.u32 2147483647, %v757
    %vm817 = vcmp.lt.f32.partialorder %v816, 0.0004427343
    %v818 = vsel %vm817, %v815, %v812
    %v819 = vadd.f32 %v759, 1.0
    %v820 = vlog2.pop %v819
    %v821 = vmul.f32 %v820, 0.6931472
    %v822 = vmul.f32 -0.5, %v759
    %v823 = vadd.f32 %v822, 1.0
    %v824 = vmul.f32 %v823, %v759
    %v825 = vand.u32 2147483647, %v759
    %vm826 = vcmp.lt.f32.partialorder %v825, 0.0004427343
    %v827 = vsel %vm826, %v824, %v821
    %v828 = vadd.f32 %v761, 1.0
    %v829 = vlog2.pop %v828
    %v830 = vmul.f32 %v829, 0.6931472
    %v831 = vmul.f32 -0.5, %v761
    %v832 = vadd.f32 %v831, 1.0
    %v833 = vmul.f32 %v832, %v761
    %v834 = vand.u32 2147483647, %v761
    %vm835 = vcmp.lt.f32.partialorder %v834, 0.0004427343
    %v836 = vsel %vm835, %v833, %v830
    %v837 = vadd.f32 %v763, 1.0
    %v838 = vlog2.pop %v837
    %v839 = vmul.f32 %v838, 0.6931472
    %v840 = vmul.f32 -0.5, %v763
    %v841 = vadd.f32 %v840, 1.0
    %v842 = vmul.f32 %v841, %v763
    %v843 = vand.u32 2147483647, %v763
    %vm844 = vcmp.lt.f32.partialorder %v843, 0.0004427343
    %v845 = vsel %vm844, %v842, %v839
    %v846 = vadd.f32 %v765, 1.0
    %v847 = vlog2.pop %v846
    %v848 = vmul.f32 %v847, 0.6931472
    %v849 = vmul.f32 -0.5, %v765
    %v850 = vadd.f32 %v849, 1.0
    %v851 = vmul.f32 %v850, %v765
    %v852 = vand.u32 2147483647, %v765
    %vm853 = vcmp.lt.f32.partialorder %v852, 0.0004427343
    %v854 = vsel %vm853, %v851, %v848
    %v855 = vadd.f32 %v767, 1.0
    %v856 = vlog2.pop %v855
    %v857 = vmul.f32 %v856, 0.6931472
    %v858 = vmul.f32 -0.5, %v767
    %v859 = vadd.f32 %v858, 1.0
    %v860 = vmul.f32 %v859, %v767
    %v861 = vand.u32 2147483647, %v767
    %vm862 = vcmp.lt.f32.partialorder %v861, 0.0004427343
    %v863 = vsel %vm862, %v860, %v857
    %v864 = vadd.f32 %v784, %v800
    %v865 = vadd.f32 %v785, %v809
    %v866 = vadd.f32 %v786, %v818
    %v867 = vadd.f32 %v787, %v827
    %v868 = vadd.f32 %v788, %v836
    %v869 = vadd.f32 %v789, %v845
    %v870 = vadd.f32 %v790, %v854
    %v871 = vadd.f32 %v791, %v863
    %v872 = vadd.f32 %v753, 1.0
    %v873 = vadd.f32 %v755, 1.0
    %v874 = vadd.f32 %v757, 1.0
    %v875 = vadd.f32 %v759, 1.0
    %v876 = vadd.f32 %v761, 1.0
    %v877 = vadd.f32 %v763, 1.0
    %v878 = vadd.f32 %v765, 1.0
    %v879 = vadd.f32 %v767, 1.0
    %v880 = vrcp.pop %v872
    %v881 = vrcp.pop %v873
    %v882 = vrcp.pop %v874
    %v883 = vrcp.pop %v875
    %v884 = vrcp.pop %v876
    %v885 = vrcp.pop %v877
    %v886 = vrcp.pop %v878
    %v887 = vrcp.pop %v879
    %vm888 = vcmp.ge.f32.partialorder %v720, 0.0
    %vm889 = vcmp.ge.f32.partialorder %v721, 0.0
    %vm890 = vcmp.ge.f32.partialorder %v722, 0.0
    %vm891 = vcmp.ge.f32.partialorder %v723, 0.0
    %vm892 = vcmp.ge.f32.partialorder %v724, 0.0
    %vm893 = vcmp.ge.f32.partialorder %v725, 0.0
    %vm894 = vcmp.ge.f32.partialorder %v726, 0.0
    %vm895 = vcmp.ge.f32.partialorder %v727, 0.0
    %v896 = vmul.f32 %v753, %v880
    %v897 = vmul.f32 %v755, %v881
    %v898 = vmul.f32 %v757, %v882
    %v899 = vmul.f32 %v759, %v883
    %v900 = vmul.f32 %v761, %v884
    %v901 = vmul.f32 %v763, %v885
    %v902 = vmul.f32 %v765, %v886
    %v903 = vmul.f32 %v767, %v887
    %v904 = vsel %vm888, %v880, %v896
    %v905 = vsel %vm889, %v881, %v897
    %v906 = vsel %vm890, %v882, %v898
    %v907 = vsel %vm891, %v883, %v899
    %v908 = vsel %vm892, %v884, %v900
    %v909 = vsel %vm893, %v885, %v901
    %v910 = vsel %vm894, %v886, %v902
    %v911 = vsel %vm895, %v887, %v903
    %v912 = vsub.f32 %v904, %v728
    %v913 = vsub.f32 %v905, %v729
    %v914 = vsub.f32 %v906, %v730
    %v915 = vsub.f32 %v907, %v731
    %v916 = vsub.f32 %v908, %v732
    %v917 = vsub.f32 %v909, %v733
    %v918 = vsub.f32 %v910, %v734
    %v919 = vsub.f32 %v911, %v735
    %v920 = vand.u32 2147483647, %v912
    %v921 = vand.u32 2147483647, %v913
    %v922 = vand.u32 2147483647, %v914
    %v923 = vand.u32 2147483647, %v915
    %v924 = vand.u32 2147483647, %v916
    %v925 = vand.u32 2147483647, %v917
    %v926 = vand.u32 2147483647, %v918
    %v927 = vand.u32 2147483647, %v919
    %v928 = vrsqrt.pop %v920
    %v929 = vmul.f32 %v920, %v928
    %vm930 = vcmp.eq.f32.partialorder %v920, inf
    %v931 = vsel %vm930, %v920, %v929
    %vm932 = vcmp.eq.f32.partialorder %v920, 0.0
    %v933 = vand.u32 %v920, 2147483648
    %v934 = vsel %vm932, %v933, %v931
    %v935 = vrsqrt.pop %v921
    %v936 = vmul.f32 %v921, %v935
    %vm937 = vcmp.eq.f32.partialorder %v921, inf
    %v938 = vsel %vm937, %v921, %v936
    %vm939 = vcmp.eq.f32.partialorder %v921, 0.0
    %v940 = vand.u32 %v921, 2147483648
    %v941 = vsel %vm939, %v940, %v938
    %v942 = vrsqrt.pop %v922
    %v943 = vmul.f32 %v922, %v942
    %vm944 = vcmp.eq.f32.partialorder %v922, inf
    %v945 = vsel %vm944, %v922, %v943
    %vm946 = vcmp.eq.f32.partialorder %v922, 0.0
    %v947 = vand.u32 %v922, 2147483648
    %v948 = vsel %vm946, %v947, %v945
    %v949 = vrsqrt.pop %v923
    %v950 = vmul.f32 %v923, %v949
    %vm951 = vcmp.eq.f32.partialorder %v923, inf
    %v952 = vsel %vm951, %v923, %v950
    %vm953 = vcmp.eq.f32.partialorder %v923, 0.0
    %v954 = vand.u32 %v923, 2147483648
    %v955 = vsel %vm953, %v954, %v952
    %v956 = vrsqrt.pop %v924
    %v957 = vmul.f32 %v924, %v956
    %vm958 = vcmp.eq.f32.partialorder %v924, inf
    %v959 = vsel %vm958, %v924, %v957
    %vm960 = vcmp.eq.f32.partialorder %v924, 0.0
    %v961 = vand.u32 %v924, 2147483648
    %v962 = vsel %vm960, %v961, %v959
    %v963 = vrsqrt.pop %v925
    %v964 = vmul.f32 %v925, %v963
    %vm965 = vcmp.eq.f32.partialorder %v925, inf
    %v966 = vsel %vm965, %v925, %v964
    %vm967 = vcmp.eq.f32.partialorder %v925, 0.0
    %v968 = vand.u32 %v925, 2147483648
    %v969 = vsel %vm967, %v968, %v966
    %v970 = vrsqrt.pop %v926
    %v971 = vmul.f32 %v926, %v970
    %vm972 = vcmp.eq.f32.partialorder %v926, inf
    %v973 = vsel %vm972, %v926, %v971
    %vm974 = vcmp.eq.f32.partialorder %v926, 0.0
    %v975 = vand.u32 %v926, 2147483648
    %v976 = vsel %vm974, %v975, %v973
    %v977 = vrsqrt.pop %v927
    %v978 = vmul.f32 %v927, %v977
    %vm979 = vcmp.eq.f32.partialorder %v927, inf
    %v980 = vsel %vm979, %v927, %v978
    %vm981 = vcmp.eq.f32.partialorder %v927, 0.0
    %v982 = vand.u32 %v927, 2147483648
    %v983 = vsel %vm981, %v982, %v980
    %v984 = vmul.f32 %v920, %v934
    %v985 = vmul.f32 %v921, %v941
    %v986 = vmul.f32 %v922, %v948
    %v987 = vmul.f32 %v923, %v955
    %v988 = vmul.f32 %v924, %v962
    %v989 = vmul.f32 %v925, %v969
    %v990 = vmul.f32 %v926, %v976
    %v991 = vmul.f32 %v927, %v983
    %v992 = vadd.f32 %v864, %v865
    %v993 = vadd.f32 %v992, %v866
    %v994 = vadd.f32 %v993, %v867
    %v995 = vadd.f32 %v994, %v868
    %v996 = vadd.f32 %v995, %v869
    %v997 = vadd.f32 %v996, %v870
    %v998 = vadd.f32 %v997, %v871
    %v999 = vadd.f32 %v984, %v985
    %v1000 = vadd.f32 %v999, %v986
    %v1001 = vadd.f32 %v1000, %v987
    %v1002 = vadd.f32 %v1001, %v988
    %v1003 = vadd.f32 %v1002, %v989
    %v1004 = vadd.f32 %v1003, %v990
    %v1005 = vadd.f32 %v1004, %v991
    %v1006 = vmul.f32 %v904, %v904
    %v1007 = vmul.f32 %v905, %v905
    %v1008 = vmul.f32 %v906, %v906
    %v1009 = vmul.f32 %v907, %v907
    %v1010 = vmul.f32 %v908, %v908
    %v1011 = vmul.f32 %v909, %v909
    %v1012 = vmul.f32 %v910, %v910
    %v1013 = vmul.f32 %v911, %v911
    %v1014 = vadd.f32 %v1006, %v1007
    %v1015 = vadd.f32 %v1014, %v1008
    %v1016 = vadd.f32 %v1015, %v1009
    %v1017 = vadd.f32 %v1016, %v1010
    %v1018 = vadd.f32 %v1017, %v1011
    %v1019 = vadd.f32 %v1018, %v1012
    %v1020 = vadd.f32 %v1019, %v1013
    %v1021 = vmul.f32 %v728, %v728
    %v1022 = vmul.f32 %v729, %v729
    %v1023 = vmul.f32 %v730, %v730
    %v1024 = vmul.f32 %v731, %v731
    %v1025 = vmul.f32 %v732, %v732
    %v1026 = vmul.f32 %v733, %v733
    %v1027 = vmul.f32 %v734, %v734
    %v1028 = vmul.f32 %v735, %v735
    %v1029 = vadd.f32 %v1021, %v1022
    %v1030 = vadd.f32 %v1029, %v1023
    %v1031 = vadd.f32 %v1030, %v1024
    %v1032 = vadd.f32 %v1031, %v1025
    %v1033 = vadd.f32 %v1032, %v1026
    %v1034 = vadd.f32 %v1033, %v1027
    %v1035 = vadd.f32 %v1034, %v1028
    %v1036 = vadd.f32 %v716, %v998
    %v1037 = vadd.f32 %v717, %v1005
    %v1038 = vadd.f32 %v718, %v1020
    %v1039 = vadd.f32 %v719, %v1035
    %v1040 = vld [vmem:[#allocation2 + $0xc0] sm:$0xff]
    %v1041 = vld [vmem:[#allocation2 + $0xc8] sm:$0xff]
    %v1042 = vld [vmem:[#allocation2 + $0xd0] sm:$0xff]
    %v1043 = vld [vmem:[#allocation2 + $0xd8] sm:$0xff]
    %v1044 = vld [vmem:[#allocation2 + $0xe0] sm:$0xff]
    %v1045 = vld [vmem:[#allocation2 + $0xe8] sm:$0xff]
    %v1046 = vld [vmem:[#allocation2 + $0xf0] sm:$0xff]
    %v1047 = vld [vmem:[#allocation2 + $0xf8] sm:$0xff]
    %v1048 = vld [vmem:[#allocation5 + $0xc0] sm:$0xff]
    %v1049 = vld [vmem:[#allocation5 + $0xc8] sm:$0xff]
    %v1050 = vld [vmem:[#allocation5 + $0xd0] sm:$0xff]
    %v1051 = vld [vmem:[#allocation5 + $0xd8] sm:$0xff]
    %v1052 = vld [vmem:[#allocation5 + $0xe0] sm:$0xff]
    %v1053 = vld [vmem:[#allocation5 + $0xe8] sm:$0xff]
    %v1054 = vld [vmem:[#allocation5 + $0xf0] sm:$0xff]
    %v1055 = vld [vmem:[#allocation5 + $0xf8] sm:$0xff]
    %v1056 = vand.u32 2147483647, %v1040
    %v1057 = vand.u32 2147483647, %v1041
    %v1058 = vand.u32 2147483647, %v1042
    %v1059 = vand.u32 2147483647, %v1043
    %v1060 = vand.u32 2147483647, %v1044
    %v1061 = vand.u32 2147483647, %v1045
    %v1062 = vand.u32 2147483647, %v1046
    %v1063 = vand.u32 2147483647, %v1047
    %v1064 = vsub.f32 0.0, %v1056
    %v1065 = vsub.f32 0.0, %v1057
    %v1066 = vsub.f32 0.0, %v1058
    %v1067 = vsub.f32 0.0, %v1059
    %v1068 = vsub.f32 0.0, %v1060
    %v1069 = vsub.f32 0.0, %v1061
    %v1070 = vsub.f32 0.0, %v1062
    %v1071 = vsub.f32 0.0, %v1063
    %v1072 = vmul.f32 %v1064, 1.442695
    %v1073 = vpow.pop %v1072
    %v1074 = vmul.f32 %v1065, 1.442695
    %v1075 = vpow.pop %v1074
    %v1076 = vmul.f32 %v1066, 1.442695
    %v1077 = vpow.pop %v1076
    %v1078 = vmul.f32 %v1067, 1.442695
    %v1079 = vpow.pop %v1078
    %v1080 = vmul.f32 %v1068, 1.442695
    %v1081 = vpow.pop %v1080
    %v1082 = vmul.f32 %v1069, 1.442695
    %v1083 = vpow.pop %v1082
    %v1084 = vmul.f32 %v1070, 1.442695
    %v1085 = vpow.pop %v1084
    %v1086 = vmul.f32 %v1071, 1.442695
    %v1087 = vpow.pop %v1086
    %v1088 = vmax.f32 %v1040, 0.0
    %v1089 = vmax.f32 %v1041, 0.0
    %v1090 = vmax.f32 %v1042, 0.0
    %v1091 = vmax.f32 %v1043, 0.0
    %v1092 = vmax.f32 %v1044, 0.0
    %v1093 = vmax.f32 %v1045, 0.0
    %v1094 = vmax.f32 %v1046, 0.0
    %v1095 = vmax.f32 %v1047, 0.0
    %v1096 = vmul.f32 %v1040, %v1048
    %v1097 = vmul.f32 %v1041, %v1049
    %v1098 = vmul.f32 %v1042, %v1050
    %v1099 = vmul.f32 %v1043, %v1051
    %v1100 = vmul.f32 %v1044, %v1052
    %v1101 = vmul.f32 %v1045, %v1053
    %v1102 = vmul.f32 %v1046, %v1054
    %v1103 = vmul.f32 %v1047, %v1055
    %v1104 = vsub.f32 %v1088, %v1096
    %v1105 = vsub.f32 %v1089, %v1097
    %v1106 = vsub.f32 %v1090, %v1098
    %v1107 = vsub.f32 %v1091, %v1099
    %v1108 = vsub.f32 %v1092, %v1100
    %v1109 = vsub.f32 %v1093, %v1101
    %v1110 = vsub.f32 %v1094, %v1102
    %v1111 = vsub.f32 %v1095, %v1103
    %v1112 = vadd.f32 %v1073, 1.0
    %v1113 = vlog2.pop %v1112
    %v1114 = vmul.f32 %v1113, 0.6931472
    %v1115 = vmul.f32 -0.5, %v1073
    %v1116 = vadd.f32 %v1115, 1.0
    %v1117 = vmul.f32 %v1116, %v1073
    %v1118 = vand.u32 2147483647, %v1073
    %vm1119 = vcmp.lt.f32.partialorder %v1118, 0.0004427343
    %v1120 = vsel %vm1119, %v1117, %v1114
    %v1121 = vadd.f32 %v1075, 1.0
    %v1122 = vlog2.pop %v1121
    %v1123 = vmul.f32 %v1122, 0.6931472
    %v1124 = vmul.f32 -0.5, %v1075
    %v1125 = vadd.f32 %v1124, 1.0
    %v1126 = vmul.f32 %v1125, %v1075
    %v1127 = vand.u32 2147483647, %v1075
    %vm1128 = vcmp.lt.f32.partialorder %v1127, 0.0004427343
    %v1129 = vsel %vm1128, %v1126, %v1123
    %v1130 = vadd.f32 %v1077, 1.0
    %v1131 = vlog2.pop %v1130
    %v1132 = vmul.f32 %v1131, 0.6931472
    %v1133 = vmul.f32 -0.5, %v1077
    %v1134 = vadd.f32 %v1133, 1.0
    %v1135 = vmul.f32 %v1134, %v1077
    %v1136 = vand.u32 2147483647, %v1077
    %vm1137 = vcmp.lt.f32.partialorder %v1136, 0.0004427343
    %v1138 = vsel %vm1137, %v1135, %v1132
    %v1139 = vadd.f32 %v1079, 1.0
    %v1140 = vlog2.pop %v1139
    %v1141 = vmul.f32 %v1140, 0.6931472
    %v1142 = vmul.f32 -0.5, %v1079
    %v1143 = vadd.f32 %v1142, 1.0
    %v1144 = vmul.f32 %v1143, %v1079
    %v1145 = vand.u32 2147483647, %v1079
    %vm1146 = vcmp.lt.f32.partialorder %v1145, 0.0004427343
    %v1147 = vsel %vm1146, %v1144, %v1141
    %v1148 = vadd.f32 %v1081, 1.0
    %v1149 = vlog2.pop %v1148
    %v1150 = vmul.f32 %v1149, 0.6931472
    %v1151 = vmul.f32 -0.5, %v1081
    %v1152 = vadd.f32 %v1151, 1.0
    %v1153 = vmul.f32 %v1152, %v1081
    %v1154 = vand.u32 2147483647, %v1081
    %vm1155 = vcmp.lt.f32.partialorder %v1154, 0.0004427343
    %v1156 = vsel %vm1155, %v1153, %v1150
    %v1157 = vadd.f32 %v1083, 1.0
    %v1158 = vlog2.pop %v1157
    %v1159 = vmul.f32 %v1158, 0.6931472
    %v1160 = vmul.f32 -0.5, %v1083
    %v1161 = vadd.f32 %v1160, 1.0
    %v1162 = vmul.f32 %v1161, %v1083
    %v1163 = vand.u32 2147483647, %v1083
    %vm1164 = vcmp.lt.f32.partialorder %v1163, 0.0004427343
    %v1165 = vsel %vm1164, %v1162, %v1159
    %v1166 = vadd.f32 %v1085, 1.0
    %v1167 = vlog2.pop %v1166
    %v1168 = vmul.f32 %v1167, 0.6931472
    %v1169 = vmul.f32 -0.5, %v1085
    %v1170 = vadd.f32 %v1169, 1.0
    %v1171 = vmul.f32 %v1170, %v1085
    %v1172 = vand.u32 2147483647, %v1085
    %vm1173 = vcmp.lt.f32.partialorder %v1172, 0.0004427343
    %v1174 = vsel %vm1173, %v1171, %v1168
    %v1175 = vadd.f32 %v1087, 1.0
    %v1176 = vlog2.pop %v1175
    %v1177 = vmul.f32 %v1176, 0.6931472
    %v1178 = vmul.f32 -0.5, %v1087
    %v1179 = vadd.f32 %v1178, 1.0
    %v1180 = vmul.f32 %v1179, %v1087
    %v1181 = vand.u32 2147483647, %v1087
    %vm1182 = vcmp.lt.f32.partialorder %v1181, 0.0004427343
    %v1183 = vsel %vm1182, %v1180, %v1177
    %v1184 = vadd.f32 %v1104, %v1120
    %v1185 = vadd.f32 %v1105, %v1129
    %v1186 = vadd.f32 %v1106, %v1138
    %v1187 = vadd.f32 %v1107, %v1147
    %v1188 = vadd.f32 %v1108, %v1156
    %v1189 = vadd.f32 %v1109, %v1165
    %v1190 = vadd.f32 %v1110, %v1174
    %v1191 = vadd.f32 %v1111, %v1183
    %v1192 = vadd.f32 %v1073, 1.0
    %v1193 = vadd.f32 %v1075, 1.0
    %v1194 = vadd.f32 %v1077, 1.0
    %v1195 = vadd.f32 %v1079, 1.0
    %v1196 = vadd.f32 %v1081, 1.0
    %v1197 = vadd.f32 %v1083, 1.0
    %v1198 = vadd.f32 %v1085, 1.0
    %v1199 = vadd.f32 %v1087, 1.0
    %v1200 = vrcp.pop %v1192
    %v1201 = vrcp.pop %v1193
    %v1202 = vrcp.pop %v1194
    %v1203 = vrcp.pop %v1195
    %v1204 = vrcp.pop %v1196
    %v1205 = vrcp.pop %v1197
    %v1206 = vrcp.pop %v1198
    %v1207 = vrcp.pop %v1199
    %vm1208 = vcmp.ge.f32.partialorder %v1040, 0.0
    %vm1209 = vcmp.ge.f32.partialorder %v1041, 0.0
    %vm1210 = vcmp.ge.f32.partialorder %v1042, 0.0
    %vm1211 = vcmp.ge.f32.partialorder %v1043, 0.0
    %vm1212 = vcmp.ge.f32.partialorder %v1044, 0.0
    %vm1213 = vcmp.ge.f32.partialorder %v1045, 0.0
    %vm1214 = vcmp.ge.f32.partialorder %v1046, 0.0
    %vm1215 = vcmp.ge.f32.partialorder %v1047, 0.0
    %v1216 = vmul.f32 %v1073, %v1200
    %v1217 = vmul.f32 %v1075, %v1201
    %v1218 = vmul.f32 %v1077, %v1202
    %v1219 = vmul.f32 %v1079, %v1203
    %v1220 = vmul.f32 %v1081, %v1204
    %v1221 = vmul.f32 %v1083, %v1205
    %v1222 = vmul.f32 %v1085, %v1206
    %v1223 = vmul.f32 %v1087, %v1207
    %v1224 = vsel %vm1208, %v1200, %v1216
    %v1225 = vsel %vm1209, %v1201, %v1217
    %v1226 = vsel %vm1210, %v1202, %v1218
    %v1227 = vsel %vm1211, %v1203, %v1219
    %v1228 = vsel %vm1212, %v1204, %v1220
    %v1229 = vsel %vm1213, %v1205, %v1221
    %v1230 = vsel %vm1214, %v1206, %v1222
    %v1231 = vsel %vm1215, %v1207, %v1223
    %v1232 = vsub.f32 %v1224, %v1048
    %v1233 = vsub.f32 %v1225, %v1049
    %v1234 = vsub.f32 %v1226, %v1050
    %v1235 = vsub.f32 %v1227, %v1051
    %v1236 = vsub.f32 %v1228, %v1052
    %v1237 = vsub.f32 %v1229, %v1053
    %v1238 = vsub.f32 %v1230, %v1054
    %v1239 = vsub.f32 %v1231, %v1055
    %v1240 = vand.u32 2147483647, %v1232
    %v1241 = vand.u32 2147483647, %v1233
    %v1242 = vand.u32 2147483647, %v1234
    %v1243 = vand.u32 2147483647, %v1235
    %v1244 = vand.u32 2147483647, %v1236
    %v1245 = vand.u32 2147483647, %v1237
    %v1246 = vand.u32 2147483647, %v1238
    %v1247 = vand.u32 2147483647, %v1239
    %v1248 = vrsqrt.pop %v1240
    %v1249 = vmul.f32 %v1240, %v1248
    %vm1250 = vcmp.eq.f32.partialorder %v1240, inf
    %v1251 = vsel %vm1250, %v1240, %v1249
    %vm1252 = vcmp.eq.f32.partialorder %v1240, 0.0
    %v1253 = vand.u32 %v1240, 2147483648
    %v1254 = vsel %vm1252, %v1253, %v1251
    %v1255 = vrsqrt.pop %v1241
    %v1256 = vmul.f32 %v1241, %v1255
    %vm1257 = vcmp.eq.f32.partialorder %v1241, inf
    %v1258 = vsel %vm1257, %v1241, %v1256
    %vm1259 = vcmp.eq.f32.partialorder %v1241, 0.0
    %v1260 = vand.u32 %v1241, 2147483648
    %v1261 = vsel %vm1259, %v1260, %v1258
    %v1262 = vrsqrt.pop %v1242
    %v1263 = vmul.f32 %v1242, %v1262
    %vm1264 = vcmp.eq.f32.partialorder %v1242, inf
    %v1265 = vsel %vm1264, %v1242, %v1263
    %vm1266 = vcmp.eq.f32.partialorder %v1242, 0.0
    %v1267 = vand.u32 %v1242, 2147483648
    %v1268 = vsel %vm1266, %v1267, %v1265
    %v1269 = vrsqrt.pop %v1243
    %v1270 = vmul.f32 %v1243, %v1269
    %vm1271 = vcmp.eq.f32.partialorder %v1243, inf
    %v1272 = vsel %vm1271, %v1243, %v1270
    %vm1273 = vcmp.eq.f32.partialorder %v1243, 0.0
    %v1274 = vand.u32 %v1243, 2147483648
    %v1275 = vsel %vm1273, %v1274, %v1272
    %v1276 = vrsqrt.pop %v1244
    %v1277 = vmul.f32 %v1244, %v1276
    %vm1278 = vcmp.eq.f32.partialorder %v1244, inf
    %v1279 = vsel %vm1278, %v1244, %v1277
    %vm1280 = vcmp.eq.f32.partialorder %v1244, 0.0
    %v1281 = vand.u32 %v1244, 2147483648
    %v1282 = vsel %vm1280, %v1281, %v1279
    %v1283 = vrsqrt.pop %v1245
    %v1284 = vmul.f32 %v1245, %v1283
    %vm1285 = vcmp.eq.f32.partialorder %v1245, inf
    %v1286 = vsel %vm1285, %v1245, %v1284
    %vm1287 = vcmp.eq.f32.partialorder %v1245, 0.0
    %v1288 = vand.u32 %v1245, 2147483648
    %v1289 = vsel %vm1287, %v1288, %v1286
    %v1290 = vrsqrt.pop %v1246
    %v1291 = vmul.f32 %v1246, %v1290
    %vm1292 = vcmp.eq.f32.partialorder %v1246, inf
    %v1293 = vsel %vm1292, %v1246, %v1291
    %vm1294 = vcmp.eq.f32.partialorder %v1246, 0.0
    %v1295 = vand.u32 %v1246, 2147483648
    %v1296 = vsel %vm1294, %v1295, %v1293
    %v1297 = vrsqrt.pop %v1247
    %v1298 = vmul.f32 %v1247, %v1297
    %vm1299 = vcmp.eq.f32.partialorder %v1247, inf
    %v1300 = vsel %vm1299, %v1247, %v1298
    %vm1301 = vcmp.eq.f32.partialorder %v1247, 0.0
    %v1302 = vand.u32 %v1247, 2147483648
    %v1303 = vsel %vm1301, %v1302, %v1300
    %v1304 = vmul.f32 %v1240, %v1254
    %v1305 = vmul.f32 %v1241, %v1261
    %v1306 = vmul.f32 %v1242, %v1268
    %v1307 = vmul.f32 %v1243, %v1275
    %v1308 = vmul.f32 %v1244, %v1282
    %v1309 = vmul.f32 %v1245, %v1289
    %v1310 = vmul.f32 %v1246, %v1296
    %v1311 = vmul.f32 %v1247, %v1303
    %v1312 = vadd.f32 %v1184, %v1185
    %v1313 = vadd.f32 %v1312, %v1186
    %v1314 = vadd.f32 %v1313, %v1187
    %v1315 = vadd.f32 %v1314, %v1188
    %v1316 = vadd.f32 %v1315, %v1189
    %v1317 = vadd.f32 %v1316, %v1190
    %v1318 = vadd.f32 %v1317, %v1191
    %v1319 = vadd.f32 %v1304, %v1305
    %v1320 = vadd.f32 %v1319, %v1306
    %v1321 = vadd.f32 %v1320, %v1307
    %v1322 = vadd.f32 %v1321, %v1308
    %v1323 = vadd.f32 %v1322, %v1309
    %v1324 = vadd.f32 %v1323, %v1310
    %v1325 = vadd.f32 %v1324, %v1311
    %v1326 = vmul.f32 %v1224, %v1224
    %v1327 = vmul.f32 %v1225, %v1225
    %v1328 = vmul.f32 %v1226, %v1226
    %v1329 = vmul.f32 %v1227, %v1227
    %v1330 = vmul.f32 %v1228, %v1228
    %v1331 = vmul.f32 %v1229, %v1229
    %v1332 = vmul.f32 %v1230, %v1230
    %v1333 = vmul.f32 %v1231, %v1231
    %v1334 = vadd.f32 %v1326, %v1327
    %v1335 = vadd.f32 %v1334, %v1328
    %v1336 = vadd.f32 %v1335, %v1329
    %v1337 = vadd.f32 %v1336, %v1330
    %v1338 = vadd.f32 %v1337, %v1331
    %v1339 = vadd.f32 %v1338, %v1332
    %v1340 = vadd.f32 %v1339, %v1333
    %v1341 = vmul.f32 %v1048, %v1048
    %v1342 = vmul.f32 %v1049, %v1049
    %v1343 = vmul.f32 %v1050, %v1050
    %v1344 = vmul.f32 %v1051, %v1051
    %v1345 = vmul.f32 %v1052, %v1052
    %v1346 = vmul.f32 %v1053, %v1053
    %v1347 = vmul.f32 %v1054, %v1054
    %v1348 = vmul.f32 %v1055, %v1055
    %v1349 = vadd.f32 %v1341, %v1342
    %v1350 = vadd.f32 %v1349, %v1343
    %v1351 = vadd.f32 %v1350, %v1344
    %v1352 = vadd.f32 %v1351, %v1345
    %v1353 = vadd.f32 %v1352, %v1346
    %v1354 = vadd.f32 %v1353, %v1347
    %v1355 = vadd.f32 %v1354, %v1348
    %v1356 = vadd.f32 %v1036, %v1318
    %v1357 = vadd.f32 %v1037, %v1325
    %v1358 = vadd.f32 %v1038, %v1340
    %v1359 = vadd.f32 %v1039, %v1355
    %v1360 = vld [vmem:[#allocation2 + $0x100] sm:$0xff]
    %v1361 = vld [vmem:[#allocation2 + $0x108] sm:$0xff]
    %v1362 = vld [vmem:[#allocation2 + $0x110] sm:$0xff]
    %v1363 = vld [vmem:[#allocation2 + $0x118] sm:$0xff]
    %v1364 = vld [vmem:[#allocation2 + $0x120] sm:$0xff]
    %v1365 = vld [vmem:[#allocation2 + $0x128] sm:$0xff]
    %v1366 = vld [vmem:[#allocation2 + $0x130] sm:$0xff]
    %v1367 = vld [vmem:[#allocation2 + $0x138] sm:$0xff]
    %v1368 = vld [vmem:[#allocation5 + $0x100] sm:$0xff]
    %v1369 = vld [vmem:[#allocation5 + $0x108] sm:$0xff]
    %v1370 = vld [vmem:[#allocation5 + $0x110] sm:$0xff]
    %v1371 = vld [vmem:[#allocation5 + $0x118] sm:$0xff]
    %v1372 = vld [vmem:[#allocation5 + $0x120] sm:$0xff]
    %v1373 = vld [vmem:[#allocation5 + $0x128] sm:$0xff]
    %v1374 = vld [vmem:[#allocation5 + $0x130] sm:$0xff]
    %v1375 = vld [vmem:[#allocation5 + $0x138] sm:$0xff]
    %v1376 = vand.u32 2147483647, %v1360
    %v1377 = vand.u32 2147483647, %v1361
    %v1378 = vand.u32 2147483647, %v1362
    %v1379 = vand.u32 2147483647, %v1363
    %v1380 = vand.u32 2147483647, %v1364
    %v1381 = vand.u32 2147483647, %v1365
    %v1382 = vand.u32 2147483647, %v1366
    %v1383 = vand.u32 2147483647, %v1367
    %v1384 = vsub.f32 0.0, %v1376
    %v1385 = vsub.f32 0.0, %v1377
    %v1386 = vsub.f32 0.0, %v1378
    %v1387 = vsub.f32 0.0, %v1379
    %v1388 = vsub.f32 0.0, %v1380
    %v1389 = vsub.f32 0.0, %v1381
    %v1390 = vsub.f32 0.0, %v1382
    %v1391 = vsub.f32 0.0, %v1383
    %v1392 = vmul.f32 %v1384, 1.442695
    %v1393 = vpow.pop %v1392
    %v1394 = vmul.f32 %v1385, 1.442695
    %v1395 = vpow.pop %v1394
    %v1396 = vmul.f32 %v1386, 1.442695
    %v1397 = vpow.pop %v1396
    %v1398 = vmul.f32 %v1387, 1.442695
    %v1399 = vpow.pop %v1398
    %v1400 = vmul.f32 %v1388, 1.442695
    %v1401 = vpow.pop %v1400
    %v1402 = vmul.f32 %v1389, 1.442695
    %v1403 = vpow.pop %v1402
    %v1404 = vmul.f32 %v1390, 1.442695
    %v1405 = vpow.pop %v1404
    %v1406 = vmul.f32 %v1391, 1.442695
    %v1407 = vpow.pop %v1406
    %v1408 = vmax.f32 %v1360, 0.0
    %v1409 = vmax.f32 %v1361, 0.0
    %v1410 = vmax.f32 %v1362, 0.0
    %v1411 = vmax.f32 %v1363, 0.0
    %v1412 = vmax.f32 %v1364, 0.0
    %v1413 = vmax.f32 %v1365, 0.0
    %v1414 = vmax.f32 %v1366, 0.0
    %v1415 = vmax.f32 %v1367, 0.0
    %v1416 = vmul.f32 %v1360, %v1368
    %v1417 = vmul.f32 %v1361, %v1369
    %v1418 = vmul.f32 %v1362, %v1370
    %v1419 = vmul.f32 %v1363, %v1371
    %v1420 = vmul.f32 %v1364, %v1372
    %v1421 = vmul.f32 %v1365, %v1373
    %v1422 = vmul.f32 %v1366, %v1374
    %v1423 = vmul.f32 %v1367, %v1375
    %v1424 = vsub.f32 %v1408, %v1416
    %v1425 = vsub.f32 %v1409, %v1417
    %v1426 = vsub.f32 %v1410, %v1418
    %v1427 = vsub.f32 %v1411, %v1419
    %v1428 = vsub.f32 %v1412, %v1420
    %v1429 = vsub.f32 %v1413, %v1421
    %v1430 = vsub.f32 %v1414, %v1422
    %v1431 = vsub.f32 %v1415, %v1423
    %v1432 = vadd.f32 %v1393, 1.0
    %v1433 = vlog2.pop %v1432
    %v1434 = vmul.f32 %v1433, 0.6931472
    %v1435 = vmul.f32 -0.5, %v1393
    %v1436 = vadd.f32 %v1435, 1.0
    %v1437 = vmul.f32 %v1436, %v1393
    %v1438 = vand.u32 2147483647, %v1393
    %vm1439 = vcmp.lt.f32.partialorder %v1438, 0.0004427343
    %v1440 = vsel %vm1439, %v1437, %v1434
    %v1441 = vadd.f32 %v1395, 1.0
    %v1442 = vlog2.pop %v1441
    %v1443 = vmul.f32 %v1442, 0.6931472
    %v1444 = vmul.f32 -0.5, %v1395
    %v1445 = vadd.f32 %v1444, 1.0
    %v1446 = vmul.f32 %v1445, %v1395
    %v1447 = vand.u32 2147483647, %v1395
    %vm1448 = vcmp.lt.f32.partialorder %v1447, 0.0004427343
    %v1449 = vsel %vm1448, %v1446, %v1443
    %v1450 = vadd.f32 %v1397, 1.0
    %v1451 = vlog2.pop %v1450
    %v1452 = vmul.f32 %v1451, 0.6931472
    %v1453 = vmul.f32 -0.5, %v1397
    %v1454 = vadd.f32 %v1453, 1.0
    %v1455 = vmul.f32 %v1454, %v1397
    %v1456 = vand.u32 2147483647, %v1397
    %vm1457 = vcmp.lt.f32.partialorder %v1456, 0.0004427343
    %v1458 = vsel %vm1457, %v1455, %v1452
    %v1459 = vadd.f32 %v1399, 1.0
    %v1460 = vlog2.pop %v1459
    %v1461 = vmul.f32 %v1460, 0.6931472
    %v1462 = vmul.f32 -0.5, %v1399
    %v1463 = vadd.f32 %v1462, 1.0
    %v1464 = vmul.f32 %v1463, %v1399
    %v1465 = vand.u32 2147483647, %v1399
    %vm1466 = vcmp.lt.f32.partialorder %v1465, 0.0004427343
    %v1467 = vsel %vm1466, %v1464, %v1461
    %v1468 = vadd.f32 %v1401, 1.0
    %v1469 = vlog2.pop %v1468
    %v1470 = vmul.f32 %v1469, 0.6931472
    %v1471 = vmul.f32 -0.5, %v1401
    %v1472 = vadd.f32 %v1471, 1.0
    %v1473 = vmul.f32 %v1472, %v1401
    %v1474 = vand.u32 2147483647, %v1401
    %vm1475 = vcmp.lt.f32.partialorder %v1474, 0.0004427343
    %v1476 = vsel %vm1475, %v1473, %v1470
    %v1477 = vadd.f32 %v1403, 1.0
    %v1478 = vlog2.pop %v1477
    %v1479 = vmul.f32 %v1478, 0.6931472
    %v1480 = vmul.f32 -0.5, %v1403
    %v1481 = vadd.f32 %v1480, 1.0
    %v1482 = vmul.f32 %v1481, %v1403
    %v1483 = vand.u32 2147483647, %v1403
    %vm1484 = vcmp.lt.f32.partialorder %v1483, 0.0004427343
    %v1485 = vsel %vm1484, %v1482, %v1479
    %v1486 = vadd.f32 %v1405, 1.0
    %v1487 = vlog2.pop %v1486
    %v1488 = vmul.f32 %v1487, 0.6931472
    %v1489 = vmul.f32 -0.5, %v1405
    %v1490 = vadd.f32 %v1489, 1.0
    %v1491 = vmul.f32 %v1490, %v1405
    %v1492 = vand.u32 2147483647, %v1405
    %vm1493 = vcmp.lt.f32.partialorder %v1492, 0.0004427343
    %v1494 = vsel %vm1493, %v1491, %v1488
    %v1495 = vadd.f32 %v1407, 1.0
    %v1496 = vlog2.pop %v1495
    %v1497 = vmul.f32 %v1496, 0.6931472
    %v1498 = vmul.f32 -0.5, %v1407
    %v1499 = vadd.f32 %v1498, 1.0
    %v1500 = vmul.f32 %v1499, %v1407
    %v1501 = vand.u32 2147483647, %v1407
    %vm1502 = vcmp.lt.f32.partialorder %v1501, 0.0004427343
    %v1503 = vsel %vm1502, %v1500, %v1497
    %v1504 = vadd.f32 %v1424, %v1440
    %v1505 = vadd.f32 %v1425, %v1449
    %v1506 = vadd.f32 %v1426, %v1458
    %v1507 = vadd.f32 %v1427, %v1467
    %v1508 = vadd.f32 %v1428, %v1476
    %v1509 = vadd.f32 %v1429, %v1485
    %v1510 = vadd.f32 %v1430, %v1494
    %v1511 = vadd.f32 %v1431, %v1503
    %v1512 = vadd.f32 %v1393, 1.0
    %v1513 = vadd.f32 %v1395, 1.0
    %v1514 = vadd.f32 %v1397, 1.0
    %v1515 = vadd.f32 %v1399, 1.0
    %v1516 = vadd.f32 %v1401, 1.0
    %v1517 = vadd.f32 %v1403, 1.0
    %v1518 = vadd.f32 %v1405, 1.0
    %v1519 = vadd.f32 %v1407, 1.0
    %v1520 = vrcp.pop %v1512
    %v1521 = vrcp.pop %v1513
    %v1522 = vrcp.pop %v1514
    %v1523 = vrcp.pop %v1515
    %v1524 = vrcp.pop %v1516
    %v1525 = vrcp.pop %v1517
    %v1526 = vrcp.pop %v1518
    %v1527 = vrcp.pop %v1519
    %vm1528 = vcmp.ge.f32.partialorder %v1360, 0.0
    %vm1529 = vcmp.ge.f32.partialorder %v1361, 0.0
    %vm1530 = vcmp.ge.f32.partialorder %v1362, 0.0
    %vm1531 = vcmp.ge.f32.partialorder %v1363, 0.0
    %vm1532 = vcmp.ge.f32.partialorder %v1364, 0.0
    %vm1533 = vcmp.ge.f32.partialorder %v1365, 0.0
    %vm1534 = vcmp.ge.f32.partialorder %v1366, 0.0
    %vm1535 = vcmp.ge.f32.partialorder %v1367, 0.0
    %v1536 = vmul.f32 %v1393, %v1520
    %v1537 = vmul.f32 %v1395, %v1521
    %v1538 = vmul.f32 %v1397, %v1522
    %v1539 = vmul.f32 %v1399, %v1523
    %v1540 = vmul.f32 %v1401, %v1524
    %v1541 = vmul.f32 %v1403, %v1525
    %v1542 = vmul.f32 %v1405, %v1526
    %v1543 = vmul.f32 %v1407, %v1527
    %v1544 = vsel %vm1528, %v1520, %v1536
    %v1545 = vsel %vm1529, %v1521, %v1537
    %v1546 = vsel %vm1530, %v1522, %v1538
    %v1547 = vsel %vm1531, %v1523, %v1539
    %v1548 = vsel %vm1532, %v1524, %v1540
    %v1549 = vsel %vm1533, %v1525, %v1541
    %v1550 = vsel %vm1534, %v1526, %v1542
    %v1551 = vsel %vm1535, %v1527, %v1543
    %v1552 = vsub.f32 %v1544, %v1368
    %v1553 = vsub.f32 %v1545, %v1369
    %v1554 = vsub.f32 %v1546, %v1370
    %v1555 = vsub.f32 %v1547, %v1371
    %v1556 = vsub.f32 %v1548, %v1372
    %v1557 = vsub.f32 %v1549, %v1373
    %v1558 = vsub.f32 %v1550, %v1374
    %v1559 = vsub.f32 %v1551, %v1375
    %v1560 = vand.u32 2147483647, %v1552
    %v1561 = vand.u32 2147483647, %v1553
    %v1562 = vand.u32 2147483647, %v1554
    %v1563 = vand.u32 2147483647, %v1555
    %v1564 = vand.u32 2147483647, %v1556
    %v1565 = vand.u32 2147483647, %v1557
    %v1566 = vand.u32 2147483647, %v1558
    %v1567 = vand.u32 2147483647, %v1559
    %v1568 = vrsqrt.pop %v1560
    %v1569 = vmul.f32 %v1560, %v1568
    %vm1570 = vcmp.eq.f32.partialorder %v1560, inf
    %v1571 = vsel %vm1570, %v1560, %v1569
    %vm1572 = vcmp.eq.f32.partialorder %v1560, 0.0
    %v1573 = vand.u32 %v1560, 2147483648
    %v1574 = vsel %vm1572, %v1573, %v1571
    %v1575 = vrsqrt.pop %v1561
    %v1576 = vmul.f32 %v1561, %v1575
    %vm1577 = vcmp.eq.f32.partialorder %v1561, inf
    %v1578 = vsel %vm1577, %v1561, %v1576
    %vm1579 = vcmp.eq.f32.partialorder %v1561, 0.0
    %v1580 = vand.u32 %v1561, 2147483648
    %v1581 = vsel %vm1579, %v1580, %v1578
    %v1582 = vrsqrt.pop %v1562
    %v1583 = vmul.f32 %v1562, %v1582
    %vm1584 = vcmp.eq.f32.partialorder %v1562, inf
    %v1585 = vsel %vm1584, %v1562, %v1583
    %vm1586 = vcmp.eq.f32.partialorder %v1562, 0.0
    %v1587 = vand.u32 %v1562, 2147483648
    %v1588 = vsel %vm1586, %v1587, %v1585
    %v1589 = vrsqrt.pop %v1563
    %v1590 = vmul.f32 %v1563, %v1589
    %vm1591 = vcmp.eq.f32.partialorder %v1563, inf
    %v1592 = vsel %vm1591, %v1563, %v1590
    %vm1593 = vcmp.eq.f32.partialorder %v1563, 0.0
    %v1594 = vand.u32 %v1563, 2147483648
    %v1595 = vsel %vm1593, %v1594, %v1592
    %v1596 = vrsqrt.pop %v1564
    %v1597 = vmul.f32 %v1564, %v1596
    %vm1598 = vcmp.eq.f32.partialorder %v1564, inf
    %v1599 = vsel %vm1598, %v1564, %v1597
    %vm1600 = vcmp.eq.f32.partialorder %v1564, 0.0
    %v1601 = vand.u32 %v1564, 2147483648
    %v1602 = vsel %vm1600, %v1601, %v1599
    %v1603 = vrsqrt.pop %v1565
    %v1604 = vmul.f32 %v1565, %v1603
    %vm1605 = vcmp.eq.f32.partialorder %v1565, inf
    %v1606 = vsel %vm1605, %v1565, %v1604
    %vm1607 = vcmp.eq.f32.partialorder %v1565, 0.0
    %v1608 = vand.u32 %v1565, 2147483648
    %v1609 = vsel %vm1607, %v1608, %v1606
    %v1610 = vrsqrt.pop %v1566
    %v1611 = vmul.f32 %v1566, %v1610
    %vm1612 = vcmp.eq.f32.partialorder %v1566, inf
    %v1613 = vsel %vm1612, %v1566, %v1611
    %vm1614 = vcmp.eq.f32.partialorder %v1566, 0.0
    %v1615 = vand.u32 %v1566, 2147483648
    %v1616 = vsel %vm1614, %v1615, %v1613
    %v1617 = vrsqrt.pop %v1567
    %v1618 = vmul.f32 %v1567, %v1617
    %vm1619 = vcmp.eq.f32.partialorder %v1567, inf
    %v1620 = vsel %vm1619, %v1567, %v1618
    %vm1621 = vcmp.eq.f32.partialorder %v1567, 0.0
    %v1622 = vand.u32 %v1567, 2147483648
    %v1623 = vsel %vm1621, %v1622, %v1620
    %v1624 = vmul.f32 %v1560, %v1574
    %v1625 = vmul.f32 %v1561, %v1581
    %v1626 = vmul.f32 %v1562, %v1588
    %v1627 = vmul.f32 %v1563, %v1595
    %v1628 = vmul.f32 %v1564, %v1602
    %v1629 = vmul.f32 %v1565, %v1609
    %v1630 = vmul.f32 %v1566, %v1616
    %v1631 = vmul.f32 %v1567, %v1623
    %v1632 = vadd.f32 %v1504, %v1505
    %v1633 = vadd.f32 %v1632, %v1506
    %v1634 = vadd.f32 %v1633, %v1507
    %v1635 = vadd.f32 %v1634, %v1508
    %v1636 = vadd.f32 %v1635, %v1509
    %v1637 = vadd.f32 %v1636, %v1510
    %v1638 = vadd.f32 %v1637, %v1511
    %v1639 = vadd.f32 %v1624, %v1625
    %v1640 = vadd.f32 %v1639, %v1626
    %v1641 = vadd.f32 %v1640, %v1627
    %v1642 = vadd.f32 %v1641, %v1628
    %v1643 = vadd.f32 %v1642, %v1629
    %v1644 = vadd.f32 %v1643, %v1630
    %v1645 = vadd.f32 %v1644, %v1631
    %v1646 = vmul.f32 %v1544, %v1544
    %v1647 = vmul.f32 %v1545, %v1545
    %v1648 = vmul.f32 %v1546, %v1546
    %v1649 = vmul.f32 %v1547, %v1547
    %v1650 = vmul.f32 %v1548, %v1548
    %v1651 = vmul.f32 %v1549, %v1549
    %v1652 = vmul.f32 %v1550, %v1550
    %v1653 = vmul.f32 %v1551, %v1551
    %v1654 = vadd.f32 %v1646, %v1647
    %v1655 = vadd.f32 %v1654, %v1648
    %v1656 = vadd.f32 %v1655, %v1649
    %v1657 = vadd.f32 %v1656, %v1650
    %v1658 = vadd.f32 %v1657, %v1651
    %v1659 = vadd.f32 %v1658, %v1652
    %v1660 = vadd.f32 %v1659, %v1653
    %v1661 = vmul.f32 %v1368, %v1368
    %v1662 = vmul.f32 %v1369, %v1369
    %v1663 = vmul.f32 %v1370, %v1370
    %v1664 = vmul.f32 %v1371, %v1371
    %v1665 = vmul.f32 %v1372, %v1372
    %v1666 = vmul.f32 %v1373, %v1373
    %v1667 = vmul.f32 %v1374, %v1374
    %v1668 = vmul.f32 %v1375, %v1375
    %v1669 = vadd.f32 %v1661, %v1662
    %v1670 = vadd.f32 %v1669, %v1663
    %v1671 = vadd.f32 %v1670, %v1664
    %v1672 = vadd.f32 %v1671, %v1665
    %v1673 = vadd.f32 %v1672, %v1666
    %v1674 = vadd.f32 %v1673, %v1667
    %v1675 = vadd.f32 %v1674, %v1668
    %v1676 = vadd.f32 %v1356, %v1638
    %v1677 = vadd.f32 %v1357, %v1645
    %v1678 = vadd.f32 %v1358, %v1660
    %v1679 = vadd.f32 %v1359, %v1675
    %v1680 = vld [vmem:[#allocation2 + $0x140] sm:$0xff]
    %v1681 = vld [vmem:[#allocation2 + $0x148] sm:$0xff]
    %v1682 = vld [vmem:[#allocation2 + $0x150] sm:$0xff]
    %v1683 = vld [vmem:[#allocation2 + $0x158] sm:$0xff]
    %v1684 = vld [vmem:[#allocation2 + $0x160] sm:$0xff]
    %v1685 = vld [vmem:[#allocation2 + $0x168] sm:$0xff]
    %v1686 = vld [vmem:[#allocation2 + $0x170] sm:$0xff]
    %v1687 = vld [vmem:[#allocation2 + $0x178] sm:$0xff]
    %v1688 = vld [vmem:[#allocation5 + $0x140] sm:$0xff]
    %v1689 = vld [vmem:[#allocation5 + $0x148] sm:$0xff]
    %v1690 = vld [vmem:[#allocation5 + $0x150] sm:$0xff]
    %v1691 = vld [vmem:[#allocation5 + $0x158] sm:$0xff]
    %v1692 = vld [vmem:[#allocation5 + $0x160] sm:$0xff]
    %v1693 = vld [vmem:[#allocation5 + $0x168] sm:$0xff]
    %v1694 = vld [vmem:[#allocation5 + $0x170] sm:$0xff]
    %v1695 = vld [vmem:[#allocation5 + $0x178] sm:$0xff]
    %v1696 = vand.u32 2147483647, %v1680
    %v1697 = vand.u32 2147483647, %v1681
    %v1698 = vand.u32 2147483647, %v1682
    %v1699 = vand.u32 2147483647, %v1683
    %v1700 = vand.u32 2147483647, %v1684
    %v1701 = vand.u32 2147483647, %v1685
    %v1702 = vand.u32 2147483647, %v1686
    %v1703 = vand.u32 2147483647, %v1687
    %v1704 = vsub.f32 0.0, %v1696
    %v1705 = vsub.f32 0.0, %v1697
    %v1706 = vsub.f32 0.0, %v1698
    %v1707 = vsub.f32 0.0, %v1699
    %v1708 = vsub.f32 0.0, %v1700
    %v1709 = vsub.f32 0.0, %v1701
    %v1710 = vsub.f32 0.0, %v1702
    %v1711 = vsub.f32 0.0, %v1703
    %v1712 = vmul.f32 %v1704, 1.442695
    %v1713 = vpow.pop %v1712
    %v1714 = vmul.f32 %v1705, 1.442695
    %v1715 = vpow.pop %v1714
    %v1716 = vmul.f32 %v1706, 1.442695
    %v1717 = vpow.pop %v1716
    %v1718 = vmul.f32 %v1707, 1.442695
    %v1719 = vpow.pop %v1718
    %v1720 = vmul.f32 %v1708, 1.442695
    %v1721 = vpow.pop %v1720
    %v1722 = vmul.f32 %v1709, 1.442695
    %v1723 = vpow.pop %v1722
    %v1724 = vmul.f32 %v1710, 1.442695
    %v1725 = vpow.pop %v1724
    %v1726 = vmul.f32 %v1711, 1.442695
    %v1727 = vpow.pop %v1726
    %v1728 = vmax.f32 %v1680, 0.0
    %v1729 = vmax.f32 %v1681, 0.0
    %v1730 = vmax.f32 %v1682, 0.0
    %v1731 = vmax.f32 %v1683, 0.0
    %v1732 = vmax.f32 %v1684, 0.0
    %v1733 = vmax.f32 %v1685, 0.0
    %v1734 = vmax.f32 %v1686, 0.0
    %v1735 = vmax.f32 %v1687, 0.0
    %v1736 = vmul.f32 %v1680, %v1688
    %v1737 = vmul.f32 %v1681, %v1689
    %v1738 = vmul.f32 %v1682, %v1690
    %v1739 = vmul.f32 %v1683, %v1691
    %v1740 = vmul.f32 %v1684, %v1692
    %v1741 = vmul.f32 %v1685, %v1693
    %v1742 = vmul.f32 %v1686, %v1694
    %v1743 = vmul.f32 %v1687, %v1695
    %v1744 = vsub.f32 %v1728, %v1736
    %v1745 = vsub.f32 %v1729, %v1737
    %v1746 = vsub.f32 %v1730, %v1738
    %v1747 = vsub.f32 %v1731, %v1739
    %v1748 = vsub.f32 %v1732, %v1740
    %v1749 = vsub.f32 %v1733, %v1741
    %v1750 = vsub.f32 %v1734, %v1742
    %v1751 = vsub.f32 %v1735, %v1743
    %v1752 = vadd.f32 %v1713, 1.0
    %v1753 = vlog2.pop %v1752
    %v1754 = vmul.f32 %v1753, 0.6931472
    %v1755 = vmul.f32 -0.5, %v1713
    %v1756 = vadd.f32 %v1755, 1.0
    %v1757 = vmul.f32 %v1756, %v1713
    %v1758 = vand.u32 2147483647, %v1713
    %vm1759 = vcmp.lt.f32.partialorder %v1758, 0.0004427343
    %v1760 = vsel %vm1759, %v1757, %v1754
    %v1761 = vadd.f32 %v1715, 1.0
    %v1762 = vlog2.pop %v1761
    %v1763 = vmul.f32 %v1762, 0.6931472
    %v1764 = vmul.f32 -0.5, %v1715
    %v1765 = vadd.f32 %v1764, 1.0
    %v1766 = vmul.f32 %v1765, %v1715
    %v1767 = vand.u32 2147483647, %v1715
    %vm1768 = vcmp.lt.f32.partialorder %v1767, 0.0004427343
    %v1769 = vsel %vm1768, %v1766, %v1763
    %v1770 = vadd.f32 %v1717, 1.0
    %v1771 = vlog2.pop %v1770
    %v1772 = vmul.f32 %v1771, 0.6931472
    %v1773 = vmul.f32 -0.5, %v1717
    %v1774 = vadd.f32 %v1773, 1.0
    %v1775 = vmul.f32 %v1774, %v1717
    %v1776 = vand.u32 2147483647, %v1717
    %vm1777 = vcmp.lt.f32.partialorder %v1776, 0.0004427343
    %v1778 = vsel %vm1777, %v1775, %v1772
    %v1779 = vadd.f32 %v1719, 1.0
    %v1780 = vlog2.pop %v1779
    %v1781 = vmul.f32 %v1780, 0.6931472
    %v1782 = vmul.f32 -0.5, %v1719
    %v1783 = vadd.f32 %v1782, 1.0
    %v1784 = vmul.f32 %v1783, %v1719
    %v1785 = vand.u32 2147483647, %v1719
    %vm1786 = vcmp.lt.f32.partialorder %v1785, 0.0004427343
    %v1787 = vsel %vm1786, %v1784, %v1781
    %v1788 = vadd.f32 %v1721, 1.0
    %v1789 = vlog2.pop %v1788
    %v1790 = vmul.f32 %v1789, 0.6931472
    %v1791 = vmul.f32 -0.5, %v1721
    %v1792 = vadd.f32 %v1791, 1.0
    %v1793 = vmul.f32 %v1792, %v1721
    %v1794 = vand.u32 2147483647, %v1721
    %vm1795 = vcmp.lt.f32.partialorder %v1794, 0.0004427343
    %v1796 = vsel %vm1795, %v1793, %v1790
    %v1797 = vadd.f32 %v1723, 1.0
    %v1798 = vlog2.pop %v1797
    %v1799 = vmul.f32 %v1798, 0.6931472
    %v1800 = vmul.f32 -0.5, %v1723
    %v1801 = vadd.f32 %v1800, 1.0
    %v1802 = vmul.f32 %v1801, %v1723
    %v1803 = vand.u32 2147483647, %v1723
    %vm1804 = vcmp.lt.f32.partialorder %v1803, 0.0004427343
    %v1805 = vsel %vm1804, %v1802, %v1799
    %v1806 = vadd.f32 %v1725, 1.0
    %v1807 = vlog2.pop %v1806
    %v1808 = vmul.f32 %v1807, 0.6931472
    %v1809 = vmul.f32 -0.5, %v1725
    %v1810 = vadd.f32 %v1809, 1.0
    %v1811 = vmul.f32 %v1810, %v1725
    %v1812 = vand.u32 2147483647, %v1725
    %vm1813 = vcmp.lt.f32.partialorder %v1812, 0.0004427343
    %v1814 = vsel %vm1813, %v1811, %v1808
    %v1815 = vadd.f32 %v1727, 1.0
    %v1816 = vlog2.pop %v1815
    %v1817 = vmul.f32 %v1816, 0.6931472
    %v1818 = vmul.f32 -0.5, %v1727
    %v1819 = vadd.f32 %v1818, 1.0
    %v1820 = vmul.f32 %v1819, %v1727
    %v1821 = vand.u32 2147483647, %v1727
    %vm1822 = vcmp.lt.f32.partialorder %v1821, 0.0004427343
    %v1823 = vsel %vm1822, %v1820, %v1817
    %v1824 = vadd.f32 %v1744, %v1760
    %v1825 = vadd.f32 %v1745, %v1769
    %v1826 = vadd.f32 %v1746, %v1778
    %v1827 = vadd.f32 %v1747, %v1787
    %v1828 = vadd.f32 %v1748, %v1796
    %v1829 = vadd.f32 %v1749, %v1805
    %v1830 = vadd.f32 %v1750, %v1814
    %v1831 = vadd.f32 %v1751, %v1823
    %v1832 = vadd.f32 %v1713, 1.0
    %v1833 = vadd.f32 %v1715, 1.0
    %v1834 = vadd.f32 %v1717, 1.0
    %v1835 = vadd.f32 %v1719, 1.0
    %v1836 = vadd.f32 %v1721, 1.0
    %v1837 = vadd.f32 %v1723, 1.0
    %v1838 = vadd.f32 %v1725, 1.0
    %v1839 = vadd.f32 %v1727, 1.0
    %v1840 = vrcp.pop %v1832
    %v1841 = vrcp.pop %v1833
    %v1842 = vrcp.pop %v1834
    %v1843 = vrcp.pop %v1835
    %v1844 = vrcp.pop %v1836
    %v1845 = vrcp.pop %v1837
    %v1846 = vrcp.pop %v1838
    %v1847 = vrcp.pop %v1839
    %vm1848 = vcmp.ge.f32.partialorder %v1680, 0.0
    %vm1849 = vcmp.ge.f32.partialorder %v1681, 0.0
    %vm1850 = vcmp.ge.f32.partialorder %v1682, 0.0
    %vm1851 = vcmp.ge.f32.partialorder %v1683, 0.0
    %vm1852 = vcmp.ge.f32.partialorder %v1684, 0.0
    %vm1853 = vcmp.ge.f32.partialorder %v1685, 0.0
    %vm1854 = vcmp.ge.f32.partialorder %v1686, 0.0
    %vm1855 = vcmp.ge.f32.partialorder %v1687, 0.0
    %v1856 = vmul.f32 %v1713, %v1840
    %v1857 = vmul.f32 %v1715, %v1841
    %v1858 = vmul.f32 %v1717, %v1842
    %v1859 = vmul.f32 %v1719, %v1843
    %v1860 = vmul.f32 %v1721, %v1844
    %v1861 = vmul.f32 %v1723, %v1845
    %v1862 = vmul.f32 %v1725, %v1846
    %v1863 = vmul.f32 %v1727, %v1847
    %v1864 = vsel %vm1848, %v1840, %v1856
    %v1865 = vsel %vm1849, %v1841, %v1857
    %v1866 = vsel %vm1850, %v1842, %v1858
    %v1867 = vsel %vm1851, %v1843, %v1859
    %v1868 = vsel %vm1852, %v1844, %v1860
    %v1869 = vsel %vm1853, %v1845, %v1861
    %v1870 = vsel %vm1854, %v1846, %v1862
    %v1871 = vsel %vm1855, %v1847, %v1863
    %v1872 = vsub.f32 %v1864, %v1688
    %v1873 = vsub.f32 %v1865, %v1689
    %v1874 = vsub.f32 %v1866, %v1690
    %v1875 = vsub.f32 %v1867, %v1691
    %v1876 = vsub.f32 %v1868, %v1692
    %v1877 = vsub.f32 %v1869, %v1693
    %v1878 = vsub.f32 %v1870, %v1694
    %v1879 = vsub.f32 %v1871, %v1695
    %v1880 = vand.u32 2147483647, %v1872
    %v1881 = vand.u32 2147483647, %v1873
    %v1882 = vand.u32 2147483647, %v1874
    %v1883 = vand.u32 2147483647, %v1875
    %v1884 = vand.u32 2147483647, %v1876
    %v1885 = vand.u32 2147483647, %v1877
    %v1886 = vand.u32 2147483647, %v1878
    %v1887 = vand.u32 2147483647, %v1879
    %v1888 = vrsqrt.pop %v1880
    %v1889 = vmul.f32 %v1880, %v1888
    %vm1890 = vcmp.eq.f32.partialorder %v1880, inf
    %v1891 = vsel %vm1890, %v1880, %v1889
    %vm1892 = vcmp.eq.f32.partialorder %v1880, 0.0
    %v1893 = vand.u32 %v1880, 2147483648
    %v1894 = vsel %vm1892, %v1893, %v1891
    %v1895 = vrsqrt.pop %v1881
    %v1896 = vmul.f32 %v1881, %v1895
    %vm1897 = vcmp.eq.f32.partialorder %v1881, inf
    %v1898 = vsel %vm1897, %v1881, %v1896
    %vm1899 = vcmp.eq.f32.partialorder %v1881, 0.0
    %v1900 = vand.u32 %v1881, 2147483648
    %v1901 = vsel %vm1899, %v1900, %v1898
    %v1902 = vrsqrt.pop %v1882
    %v1903 = vmul.f32 %v1882, %v1902
    %vm1904 = vcmp.eq.f32.partialorder %v1882, inf
    %v1905 = vsel %vm1904, %v1882, %v1903
    %vm1906 = vcmp.eq.f32.partialorder %v1882, 0.0
    %v1907 = vand.u32 %v1882, 2147483648
    %v1908 = vsel %vm1906, %v1907, %v1905
    %v1909 = vrsqrt.pop %v1883
    %v1910 = vmul.f32 %v1883, %v1909
    %vm1911 = vcmp.eq.f32.partialorder %v1883, inf
    %v1912 = vsel %vm1911, %v1883, %v1910
    %vm1913 = vcmp.eq.f32.partialorder %v1883, 0.0
    %v1914 = vand.u32 %v1883, 2147483648
    %v1915 = vsel %vm1913, %v1914, %v1912
    %v1916 = vrsqrt.pop %v1884
    %v1917 = vmul.f32 %v1884, %v1916
    %vm1918 = vcmp.eq.f32.partialorder %v1884, inf
    %v1919 = vsel %vm1918, %v1884, %v1917
    %vm1920 = vcmp.eq.f32.partialorder %v1884, 0.0
    %v1921 = vand.u32 %v1884, 2147483648
    %v1922 = vsel %vm1920, %v1921, %v1919
    %v1923 = vrsqrt.pop %v1885
    %v1924 = vmul.f32 %v1885, %v1923
    %vm1925 = vcmp.eq.f32.partialorder %v1885, inf
    %v1926 = vsel %vm1925, %v1885, %v1924
    %vm1927 = vcmp.eq.f32.partialorder %v1885, 0.0
    %v1928 = vand.u32 %v1885, 2147483648
    %v1929 = vsel %vm1927, %v1928, %v1926
    %v1930 = vrsqrt.pop %v1886
    %v1931 = vmul.f32 %v1886, %v1930
    %vm1932 = vcmp.eq.f32.partialorder %v1886, inf
    %v1933 = vsel %vm1932, %v1886, %v1931
    %vm1934 = vcmp.eq.f32.partialorder %v1886, 0.0
    %v1935 = vand.u32 %v1886, 2147483648
    %v1936 = vsel %vm1934, %v1935, %v1933
    %v1937 = vrsqrt.pop %v1887
    %v1938 = vmul.f32 %v1887, %v1937
    %vm1939 = vcmp.eq.f32.partialorder %v1887, inf
    %v1940 = vsel %vm1939, %v1887, %v1938
    %vm1941 = vcmp.eq.f32.partialorder %v1887, 0.0
    %v1942 = vand.u32 %v1887, 2147483648
    %v1943 = vsel %vm1941, %v1942, %v1940
    %v1944 = vmul.f32 %v1880, %v1894
    %v1945 = vmul.f32 %v1881, %v1901
    %v1946 = vmul.f32 %v1882, %v1908
    %v1947 = vmul.f32 %v1883, %v1915
    %v1948 = vmul.f32 %v1884, %v1922
    %v1949 = vmul.f32 %v1885, %v1929
    %v1950 = vmul.f32 %v1886, %v1936
    %v1951 = vmul.f32 %v1887, %v1943
    %v1952 = vadd.f32 %v1824, %v1825
    %v1953 = vadd.f32 %v1952, %v1826
    %v1954 = vadd.f32 %v1953, %v1827
    %v1955 = vadd.f32 %v1954, %v1828
    %v1956 = vadd.f32 %v1955, %v1829
    %v1957 = vadd.f32 %v1956, %v1830
    %v1958 = vadd.f32 %v1957, %v1831
    %v1959 = vadd.f32 %v1944, %v1945
    %v1960 = vadd.f32 %v1959, %v1946
    %v1961 = vadd.f32 %v1960, %v1947
    %v1962 = vadd.f32 %v1961, %v1948
    %v1963 = vadd.f32 %v1962, %v1949
    %v1964 = vadd.f32 %v1963, %v1950
    %v1965 = vadd.f32 %v1964, %v1951
    %v1966 = vmul.f32 %v1864, %v1864
    %v1967 = vmul.f32 %v1865, %v1865
    %v1968 = vmul.f32 %v1866, %v1866
    %v1969 = vmul.f32 %v1867, %v1867
    %v1970 = vmul.f32 %v1868, %v1868
    %v1971 = vmul.f32 %v1869, %v1869
    %v1972 = vmul.f32 %v1870, %v1870
    %v1973 = vmul.f32 %v1871, %v1871
    %v1974 = vadd.f32 %v1966, %v1967
    %v1975 = vadd.f32 %v1974, %v1968
    %v1976 = vadd.f32 %v1975, %v1969
    %v1977 = vadd.f32 %v1976, %v1970
    %v1978 = vadd.f32 %v1977, %v1971
    %v1979 = vadd.f32 %v1978, %v1972
    %v1980 = vadd.f32 %v1979, %v1973
    %v1981 = vmul.f32 %v1688, %v1688
    %v1982 = vmul.f32 %v1689, %v1689
    %v1983 = vmul.f32 %v1690, %v1690
    %v1984 = vmul.f32 %v1691, %v1691
    %v1985 = vmul.f32 %v1692, %v1692
    %v1986 = vmul.f32 %v1693, %v1693
    %v1987 = vmul.f32 %v1694, %v1694
    %v1988 = vmul.f32 %v1695, %v1695
    %v1989 = vadd.f32 %v1981, %v1982
    %v1990 = vadd.f32 %v1989, %v1983
    %v1991 = vadd.f32 %v1990, %v1984
    %v1992 = vadd.f32 %v1991, %v1985
    %v1993 = vadd.f32 %v1992, %v1986
    %v1994 = vadd.f32 %v1993, %v1987
    %v1995 = vadd.f32 %v1994, %v1988
    %v1996 = vadd.f32 %v1676, %v1958
    %v1997 = vadd.f32 %v1677, %v1965
    %v1998 = vadd.f32 %v1678, %v1980
    %v1999 = vadd.f32 %v1679, %v1995
    %v2000 = vld [vmem:[#allocation2 + $0x180] sm:$0xff]
    %v2001 = vld [vmem:[#allocation2 + $0x188] sm:$0xff]
    %v2002 = vld [vmem:[#allocation2 + $0x190] sm:$0xff]
    %v2003 = vld [vmem:[#allocation2 + $0x198] sm:$0xff]
    %v2004 = vld [vmem:[#allocation2 + $0x1a0] sm:$0xff]
    %v2005 = vld [vmem:[#allocation2 + $0x1a8] sm:$0xff]
    %v2006 = vld [vmem:[#allocation2 + $0x1b0] sm:$0xff]
    %v2007 = vld [vmem:[#allocation2 + $0x1b8] sm:$0xff]
    %v2008 = vld [vmem:[#allocation5 + $0x180] sm:$0xff]
    %v2009 = vld [vmem:[#allocation5 + $0x188] sm:$0xff]
    %v2010 = vld [vmem:[#allocation5 + $0x190] sm:$0xff]
    %v2011 = vld [vmem:[#allocation5 + $0x198] sm:$0xff]
    %v2012 = vld [vmem:[#allocation5 + $0x1a0] sm:$0xff]
    %v2013 = vld [vmem:[#allocation5 + $0x1a8] sm:$0xff]
    %v2014 = vld [vmem:[#allocation5 + $0x1b0] sm:$0xff]
    %v2015 = vld [vmem:[#allocation5 + $0x1b8] sm:$0xff]
    %v2016 = vand.u32 2147483647, %v2000
    %v2017 = vand.u32 2147483647, %v2001
    %v2018 = vand.u32 2147483647, %v2002
    %v2019 = vand.u32 2147483647, %v2003
    %v2020 = vand.u32 2147483647, %v2004
    %v2021 = vand.u32 2147483647, %v2005
    %v2022 = vand.u32 2147483647, %v2006
    %v2023 = vand.u32 2147483647, %v2007
    %v2024 = vsub.f32 0.0, %v2016
    %v2025 = vsub.f32 0.0, %v2017
    %v2026 = vsub.f32 0.0, %v2018
    %v2027 = vsub.f32 0.0, %v2019
    %v2028 = vsub.f32 0.0, %v2020
    %v2029 = vsub.f32 0.0, %v2021
    %v2030 = vsub.f32 0.0, %v2022
    %v2031 = vsub.f32 0.0, %v2023
    %v2032 = vmul.f32 %v2024, 1.442695
    %v2033 = vpow.pop %v2032
    %v2034 = vmul.f32 %v2025, 1.442695
    %v2035 = vpow.pop %v2034
    %v2036 = vmul.f32 %v2026, 1.442695
    %v2037 = vpow.pop %v2036
    %v2038 = vmul.f32 %v2027, 1.442695
    %v2039 = vpow.pop %v2038
    %v2040 = vmul.f32 %v2028, 1.442695
    %v2041 = vpow.pop %v2040
    %v2042 = vmul.f32 %v2029, 1.442695
    %v2043 = vpow.pop %v2042
    %v2044 = vmul.f32 %v2030, 1.442695
    %v2045 = vpow.pop %v2044
    %v2046 = vmul.f32 %v2031, 1.442695
    %v2047 = vpow.pop %v2046
    %v2048 = vmax.f32 %v2000, 0.0
    %v2049 = vmax.f32 %v2001, 0.0
    %v2050 = vmax.f32 %v2002, 0.0
    %v2051 = vmax.f32 %v2003, 0.0
    %v2052 = vmax.f32 %v2004, 0.0
    %v2053 = vmax.f32 %v2005, 0.0
    %v2054 = vmax.f32 %v2006, 0.0
    %v2055 = vmax.f32 %v2007, 0.0
    %v2056 = vmul.f32 %v2000, %v2008
    %v2057 = vmul.f32 %v2001, %v2009
    %v2058 = vmul.f32 %v2002, %v2010
    %v2059 = vmul.f32 %v2003, %v2011
    %v2060 = vmul.f32 %v2004, %v2012
    %v2061 = vmul.f32 %v2005, %v2013
    %v2062 = vmul.f32 %v2006, %v2014
    %v2063 = vmul.f32 %v2007, %v2015
    %v2064 = vsub.f32 %v2048, %v2056
    %v2065 = vsub.f32 %v2049, %v2057
    %v2066 = vsub.f32 %v2050, %v2058
    %v2067 = vsub.f32 %v2051, %v2059
    %v2068 = vsub.f32 %v2052, %v2060
    %v2069 = vsub.f32 %v2053, %v2061
    %v2070 = vsub.f32 %v2054, %v2062
    %v2071 = vsub.f32 %v2055, %v2063
    %v2072 = vadd.f32 %v2033, 1.0
    %v2073 = vlog2.pop %v2072
    %v2074 = vmul.f32 %v2073, 0.6931472
    %v2075 = vmul.f32 -0.5, %v2033
    %v2076 = vadd.f32 %v2075, 1.0
    %v2077 = vmul.f32 %v2076, %v2033
    %v2078 = vand.u32 2147483647, %v2033
    %vm2079 = vcmp.lt.f32.partialorder %v2078, 0.0004427343
    %v2080 = vsel %vm2079, %v2077, %v2074
    %v2081 = vadd.f32 %v2035, 1.0
    %v2082 = vlog2.pop %v2081
    %v2083 = vmul.f32 %v2082, 0.6931472
    %v2084 = vmul.f32 -0.5, %v2035
    %v2085 = vadd.f32 %v2084, 1.0
    %v2086 = vmul.f32 %v2085, %v2035
    %v2087 = vand.u32 2147483647, %v2035
    %vm2088 = vcmp.lt.f32.partialorder %v2087, 0.0004427343
    %v2089 = vsel %vm2088, %v2086, %v2083
    %v2090 = vadd.f32 %v2037, 1.0
    %v2091 = vlog2.pop %v2090
    %v2092 = vmul.f32 %v2091, 0.6931472
    %v2093 = vmul.f32 -0.5, %v2037
    %v2094 = vadd.f32 %v2093, 1.0
    %v2095 = vmul.f32 %v2094, %v2037
    %v2096 = vand.u32 2147483647, %v2037
    %vm2097 = vcmp.lt.f32.partialorder %v2096, 0.0004427343
    %v2098 = vsel %vm2097, %v2095, %v2092
    %v2099 = vadd.f32 %v2039, 1.0
    %v2100 = vlog2.pop %v2099
    %v2101 = vmul.f32 %v2100, 0.6931472
    %v2102 = vmul.f32 -0.5, %v2039
    %v2103 = vadd.f32 %v2102, 1.0
    %v2104 = vmul.f32 %v2103, %v2039
    %v2105 = vand.u32 2147483647, %v2039
    %vm2106 = vcmp.lt.f32.partialorder %v2105, 0.0004427343
    %v2107 = vsel %vm2106, %v2104, %v2101
    %v2108 = vadd.f32 %v2041, 1.0
    %v2109 = vlog2.pop %v2108
    %v2110 = vmul.f32 %v2109, 0.6931472
    %v2111 = vmul.f32 -0.5, %v2041
    %v2112 = vadd.f32 %v2111, 1.0
    %v2113 = vmul.f32 %v2112, %v2041
    %v2114 = vand.u32 2147483647, %v2041
    %vm2115 = vcmp.lt.f32.partialorder %v2114, 0.0004427343
    %v2116 = vsel %vm2115, %v2113, %v2110
    %v2117 = vadd.f32 %v2043, 1.0
    %v2118 = vlog2.pop %v2117
    %v2119 = vmul.f32 %v2118, 0.6931472
    %v2120 = vmul.f32 -0.5, %v2043
    %v2121 = vadd.f32 %v2120, 1.0
    %v2122 = vmul.f32 %v2121, %v2043
    %v2123 = vand.u32 2147483647, %v2043
    %vm2124 = vcmp.lt.f32.partialorder %v2123, 0.0004427343
    %v2125 = vsel %vm2124, %v2122, %v2119
    %v2126 = vadd.f32 %v2045, 1.0
    %v2127 = vlog2.pop %v2126
    %v2128 = vmul.f32 %v2127, 0.6931472
    %v2129 = vmul.f32 -0.5, %v2045
    %v2130 = vadd.f32 %v2129, 1.0
    %v2131 = vmul.f32 %v2130, %v2045
    %v2132 = vand.u32 2147483647, %v2045
    %vm2133 = vcmp.lt.f32.partialorder %v2132, 0.0004427343
    %v2134 = vsel %vm2133, %v2131, %v2128
    %v2135 = vadd.f32 %v2047, 1.0
    %v2136 = vlog2.pop %v2135
    %v2137 = vmul.f32 %v2136, 0.6931472
    %v2138 = vmul.f32 -0.5, %v2047
    %v2139 = vadd.f32 %v2138, 1.0
    %v2140 = vmul.f32 %v2139, %v2047
    %v2141 = vand.u32 2147483647, %v2047
    %vm2142 = vcmp.lt.f32.partialorder %v2141, 0.0004427343
    %v2143 = vsel %vm2142, %v2140, %v2137
    %v2144 = vadd.f32 %v2064, %v2080
    %v2145 = vadd.f32 %v2065, %v2089
    %v2146 = vadd.f32 %v2066, %v2098
    %v2147 = vadd.f32 %v2067, %v2107
    %v2148 = vadd.f32 %v2068, %v2116
    %v2149 = vadd.f32 %v2069, %v2125
    %v2150 = vadd.f32 %v2070, %v2134
    %v2151 = vadd.f32 %v2071, %v2143
    %v2152 = vadd.f32 %v2033, 1.0
    %v2153 = vadd.f32 %v2035, 1.0
    %v2154 = vadd.f32 %v2037, 1.0
    %v2155 = vadd.f32 %v2039, 1.0
    %v2156 = vadd.f32 %v2041, 1.0
    %v2157 = vadd.f32 %v2043, 1.0
    %v2158 = vadd.f32 %v2045, 1.0
    %v2159 = vadd.f32 %v2047, 1.0
    %v2160 = vrcp.pop %v2152
    %v2161 = vrcp.pop %v2153
    %v2162 = vrcp.pop %v2154
    %v2163 = vrcp.pop %v2155
    %v2164 = vrcp.pop %v2156
    %v2165 = vrcp.pop %v2157
    %v2166 = vrcp.pop %v2158
    %v2167 = vrcp.pop %v2159
    %vm2168 = vcmp.ge.f32.partialorder %v2000, 0.0
    %vm2169 = vcmp.ge.f32.partialorder %v2001, 0.0
    %vm2170 = vcmp.ge.f32.partialorder %v2002, 0.0
    %vm2171 = vcmp.ge.f32.partialorder %v2003, 0.0
    %vm2172 = vcmp.ge.f32.partialorder %v2004, 0.0
    %vm2173 = vcmp.ge.f32.partialorder %v2005, 0.0
    %vm2174 = vcmp.ge.f32.partialorder %v2006, 0.0
    %vm2175 = vcmp.ge.f32.partialorder %v2007, 0.0
    %v2176 = vmul.f32 %v2033, %v2160
    %v2177 = vmul.f32 %v2035, %v2161
    %v2178 = vmul.f32 %v2037, %v2162
    %v2179 = vmul.f32 %v2039, %v2163
    %v2180 = vmul.f32 %v2041, %v2164
    %v2181 = vmul.f32 %v2043, %v2165
    %v2182 = vmul.f32 %v2045, %v2166
    %v2183 = vmul.f32 %v2047, %v2167
    %v2184 = vsel %vm2168, %v2160, %v2176
    %v2185 = vsel %vm2169, %v2161, %v2177
    %v2186 = vsel %vm2170, %v2162, %v2178
    %v2187 = vsel %vm2171, %v2163, %v2179
    %v2188 = vsel %vm2172, %v2164, %v2180
    %v2189 = vsel %vm2173, %v2165, %v2181
    %v2190 = vsel %vm2174, %v2166, %v2182
    %v2191 = vsel %vm2175, %v2167, %v2183
    %v2192 = vsub.f32 %v2184, %v2008
    %v2193 = vsub.f32 %v2185, %v2009
    %v2194 = vsub.f32 %v2186, %v2010
    %v2195 = vsub.f32 %v2187, %v2011
    %v2196 = vsub.f32 %v2188, %v2012
    %v2197 = vsub.f32 %v2189, %v2013
    %v2198 = vsub.f32 %v2190, %v2014
    %v2199 = vsub.f32 %v2191, %v2015
    %v2200 = vand.u32 2147483647, %v2192
    %v2201 = vand.u32 2147483647, %v2193
    %v2202 = vand.u32 2147483647, %v2194
    %v2203 = vand.u32 2147483647, %v2195
    %v2204 = vand.u32 2147483647, %v2196
    %v2205 = vand.u32 2147483647, %v2197
    %v2206 = vand.u32 2147483647, %v2198
    %v2207 = vand.u32 2147483647, %v2199
    %v2208 = vrsqrt.pop %v2200
    %v2209 = vmul.f32 %v2200, %v2208
    %vm2210 = vcmp.eq.f32.partialorder %v2200, inf
    %v2211 = vsel %vm2210, %v2200, %v2209
    %vm2212 = vcmp.eq.f32.partialorder %v2200, 0.0
    %v2213 = vand.u32 %v2200, 2147483648
    %v2214 = vsel %vm2212, %v2213, %v2211
    %v2215 = vrsqrt.pop %v2201
    %v2216 = vmul.f32 %v2201, %v2215
    %vm2217 = vcmp.eq.f32.partialorder %v2201, inf
    %v2218 = vsel %vm2217, %v2201, %v2216
    %vm2219 = vcmp.eq.f32.partialorder %v2201, 0.0
    %v2220 = vand.u32 %v2201, 2147483648
    %v2221 = vsel %vm2219, %v2220, %v2218
    %v2222 = vrsqrt.pop %v2202
    %v2223 = vmul.f32 %v2202, %v2222
    %vm2224 = vcmp.eq.f32.partialorder %v2202, inf
    %v2225 = vsel %vm2224, %v2202, %v2223
    %vm2226 = vcmp.eq.f32.partialorder %v2202, 0.0
    %v2227 = vand.u32 %v2202, 2147483648
    %v2228 = vsel %vm2226, %v2227, %v2225
    %v2229 = vrsqrt.pop %v2203
    %v2230 = vmul.f32 %v2203, %v2229
    %vm2231 = vcmp.eq.f32.partialorder %v2203, inf
    %v2232 = vsel %vm2231, %v2203, %v2230
    %vm2233 = vcmp.eq.f32.partialorder %v2203, 0.0
    %v2234 = vand.u32 %v2203, 2147483648
    %v2235 = vsel %vm2233, %v2234, %v2232
    %v2236 = vrsqrt.pop %v2204
    %v2237 = vmul.f32 %v2204, %v2236
    %vm2238 = vcmp.eq.f32.partialorder %v2204, inf
    %v2239 = vsel %vm2238, %v2204, %v2237
    %vm2240 = vcmp.eq.f32.partialorder %v2204, 0.0
    %v2241 = vand.u32 %v2204, 2147483648
    %v2242 = vsel %vm2240, %v2241, %v2239
    %v2243 = vrsqrt.pop %v2205
    %v2244 = vmul.f32 %v2205, %v2243
    %vm2245 = vcmp.eq.f32.partialorder %v2205, inf
    %v2246 = vsel %vm2245, %v2205, %v2244
    %vm2247 = vcmp.eq.f32.partialorder %v2205, 0.0
    %v2248 = vand.u32 %v2205, 2147483648
    %v2249 = vsel %vm2247, %v2248, %v2246
    %v2250 = vrsqrt.pop %v2206
    %v2251 = vmul.f32 %v2206, %v2250
    %vm2252 = vcmp.eq.f32.partialorder %v2206, inf
    %v2253 = vsel %vm2252, %v2206, %v2251
    %vm2254 = vcmp.eq.f32.partialorder %v2206, 0.0
    %v2255 = vand.u32 %v2206, 2147483648
    %v2256 = vsel %vm2254, %v2255, %v2253
    %v2257 = vrsqrt.pop %v2207
    %v2258 = vmul.f32 %v2207, %v2257
    %vm2259 = vcmp.eq.f32.partialorder %v2207, inf
    %v2260 = vsel %vm2259, %v2207, %v2258
    %vm2261 = vcmp.eq.f32.partialorder %v2207, 0.0
    %v2262 = vand.u32 %v2207, 2147483648
    %v2263 = vsel %vm2261, %v2262, %v2260
    %v2264 = vmul.f32 %v2200, %v2214
    %v2265 = vmul.f32 %v2201, %v2221
    %v2266 = vmul.f32 %v2202, %v2228
    %v2267 = vmul.f32 %v2203, %v2235
    %v2268 = vmul.f32 %v2204, %v2242
    %v2269 = vmul.f32 %v2205, %v2249
    %v2270 = vmul.f32 %v2206, %v2256
    %v2271 = vmul.f32 %v2207, %v2263
    %v2272 = vadd.f32 %v2144, %v2145
    %v2273 = vadd.f32 %v2272, %v2146
    %v2274 = vadd.f32 %v2273, %v2147
    %v2275 = vadd.f32 %v2274, %v2148
    %v2276 = vadd.f32 %v2275, %v2149
    %v2277 = vadd.f32 %v2276, %v2150
    %v2278 = vadd.f32 %v2277, %v2151
    %v2279 = vadd.f32 %v2264, %v2265
    %v2280 = vadd.f32 %v2279, %v2266
    %v2281 = vadd.f32 %v2280, %v2267
    %v2282 = vadd.f32 %v2281, %v2268
    %v2283 = vadd.f32 %v2282, %v2269
    %v2284 = vadd.f32 %v2283, %v2270
    %v2285 = vadd.f32 %v2284, %v2271
    %v2286 = vmul.f32 %v2184, %v2184
    %v2287 = vmul.f32 %v2185, %v2185
    %v2288 = vmul.f32 %v2186, %v2186
    %v2289 = vmul.f32 %v2187, %v2187
    %v2290 = vmul.f32 %v2188, %v2188
    %v2291 = vmul.f32 %v2189, %v2189
    %v2292 = vmul.f32 %v2190, %v2190
    %v2293 = vmul.f32 %v2191, %v2191
    %v2294 = vadd.f32 %v2286, %v2287
    %v2295 = vadd.f32 %v2294, %v2288
    %v2296 = vadd.f32 %v2295, %v2289
    %v2297 = vadd.f32 %v2296, %v2290
    %v2298 = vadd.f32 %v2297, %v2291
    %v2299 = vadd.f32 %v2298, %v2292
    %v2300 = vadd.f32 %v2299, %v2293
    %v2301 = vmul.f32 %v2008, %v2008
    %v2302 = vmul.f32 %v2009, %v2009
    %v2303 = vmul.f32 %v2010, %v2010
    %v2304 = vmul.f32 %v2011, %v2011
    %v2305 = vmul.f32 %v2012, %v2012
    %v2306 = vmul.f32 %v2013, %v2013
    %v2307 = vmul.f32 %v2014, %v2014
    %v2308 = vmul.f32 %v2015, %v2015
    %v2309 = vadd.f32 %v2301, %v2302
    %v2310 = vadd.f32 %v2309, %v2303
    %v2311 = vadd.f32 %v2310, %v2304
    %v2312 = vadd.f32 %v2311, %v2305
    %v2313 = vadd.f32 %v2312, %v2306
    %v2314 = vadd.f32 %v2313, %v2307
    %v2315 = vadd.f32 %v2314, %v2308
    %v2316 = vadd.f32 %v1996, %v2278
    %v2317 = vadd.f32 %v1997, %v2285
    %v2318 = vadd.f32 %v1998, %v2300
    %v2319 = vadd.f32 %v1999, %v2315
    %v2320 = vld [vmem:[#allocation2 + $0x1c0] sm:$0xff]
    %v2321 = vld [vmem:[#allocation2 + $0x1c8] sm:$0xff]
    %v2322 = vld [vmem:[#allocation2 + $0x1d0] sm:$0xff]
    %v2323 = vld [vmem:[#allocation2 + $0x1d8] sm:$0xff]
    %v2324 = vld [vmem:[#allocation2 + $0x1e0] sm:$0xff]
    %v2325 = vld [vmem:[#allocation2 + $0x1e8] sm:$0xff]
    %v2326 = vld [vmem:[#allocation2 + $0x1f0] sm:$0xff]
    %v2327 = vld [vmem:[#allocation2 + $0x1f8] sm:$0xff]
    %v2328 = vld [vmem:[#allocation5 + $0x1c0] sm:$0xff]
    %v2329 = vld [vmem:[#allocation5 + $0x1c8] sm:$0xff]
    %v2330 = vld [vmem:[#allocation5 + $0x1d0] sm:$0xff]
    %v2331 = vld [vmem:[#allocation5 + $0x1d8] sm:$0xff]
    %v2332 = vld [vmem:[#allocation5 + $0x1e0] sm:$0xff]
    %v2333 = vld [vmem:[#allocation5 + $0x1e8] sm:$0xff]
    %v2334 = vld [vmem:[#allocation5 + $0x1f0] sm:$0xff]
    %v2335 = vld [vmem:[#allocation5 + $0x1f8] sm:$0xff]
    %v2336 = vand.u32 2147483647, %v2320
    %v2337 = vand.u32 2147483647, %v2321
    %v2338 = vand.u32 2147483647, %v2322
    %v2339 = vand.u32 2147483647, %v2323
    %v2340 = vand.u32 2147483647, %v2324
    %v2341 = vand.u32 2147483647, %v2325
    %v2342 = vand.u32 2147483647, %v2326
    %v2343 = vand.u32 2147483647, %v2327
    %v2344 = vsub.f32 0.0, %v2336
    %v2345 = vsub.f32 0.0, %v2337
    %v2346 = vsub.f32 0.0, %v2338
    %v2347 = vsub.f32 0.0, %v2339
    %v2348 = vsub.f32 0.0, %v2340
    %v2349 = vsub.f32 0.0, %v2341
    %v2350 = vsub.f32 0.0, %v2342
    %v2351 = vsub.f32 0.0, %v2343
    %v2352 = vmul.f32 %v2344, 1.442695
    %v2353 = vpow.pop %v2352
    %v2354 = vmul.f32 %v2345, 1.442695
    %v2355 = vpow.pop %v2354
    %v2356 = vmul.f32 %v2346, 1.442695
    %v2357 = vpow.pop %v2356
    %v2358 = vmul.f32 %v2347, 1.442695
    %v2359 = vpow.pop %v2358
    %v2360 = vmul.f32 %v2348, 1.442695
    %v2361 = vpow.pop %v2360
    %v2362 = vmul.f32 %v2349, 1.442695
    %v2363 = vpow.pop %v2362
    %v2364 = vmul.f32 %v2350, 1.442695
    %v2365 = vpow.pop %v2364
    %v2366 = vmul.f32 %v2351, 1.442695
    %v2367 = vpow.pop %v2366
    %v2368 = vmax.f32 %v2320, 0.0
    %v2369 = vmax.f32 %v2321, 0.0
    %v2370 = vmax.f32 %v2322, 0.0
    %v2371 = vmax.f32 %v2323, 0.0
    %v2372 = vmax.f32 %v2324, 0.0
    %v2373 = vmax.f32 %v2325, 0.0
    %v2374 = vmax.f32 %v2326, 0.0
    %v2375 = vmax.f32 %v2327, 0.0
    %v2376 = vmul.f32 %v2320, %v2328
    %v2377 = vmul.f32 %v2321, %v2329
    %v2378 = vmul.f32 %v2322, %v2330
    %v2379 = vmul.f32 %v2323, %v2331
    %v2380 = vmul.f32 %v2324, %v2332
    %v2381 = vmul.f32 %v2325, %v2333
    %v2382 = vmul.f32 %v2326, %v2334
    %v2383 = vmul.f32 %v2327, %v2335
    %v2384 = vsub.f32 %v2368, %v2376
    %v2385 = vsub.f32 %v2369, %v2377
    %v2386 = vsub.f32 %v2370, %v2378
    %v2387 = vsub.f32 %v2371, %v2379
    %v2388 = vsub.f32 %v2372, %v2380
    %v2389 = vsub.f32 %v2373, %v2381
    %v2390 = vsub.f32 %v2374, %v2382
    %v2391 = vsub.f32 %v2375, %v2383
    %v2392 = vadd.f32 %v2353, 1.0
    %v2393 = vlog2.pop %v2392
    %v2394 = vmul.f32 %v2393, 0.6931472
    %v2395 = vmul.f32 -0.5, %v2353
    %v2396 = vadd.f32 %v2395, 1.0
    %v2397 = vmul.f32 %v2396, %v2353
    %v2398 = vand.u32 2147483647, %v2353
    %vm2399 = vcmp.lt.f32.partialorder %v2398, 0.0004427343
    %v2400 = vsel %vm2399, %v2397, %v2394
    %v2401 = vadd.f32 %v2355, 1.0
    %v2402 = vlog2.pop %v2401
    %v2403 = vmul.f32 %v2402, 0.6931472
    %v2404 = vmul.f32 -0.5, %v2355
    %v2405 = vadd.f32 %v2404, 1.0
    %v2406 = vmul.f32 %v2405, %v2355
    %v2407 = vand.u32 2147483647, %v2355
    %vm2408 = vcmp.lt.f32.partialorder %v2407, 0.0004427343
    %v2409 = vsel %vm2408, %v2406, %v2403
    %v2410 = vadd.f32 %v2357, 1.0
    %v2411 = vlog2.pop %v2410
    %v2412 = vmul.f32 %v2411, 0.6931472
    %v2413 = vmul.f32 -0.5, %v2357
    %v2414 = vadd.f32 %v2413, 1.0
    %v2415 = vmul.f32 %v2414, %v2357
    %v2416 = vand.u32 2147483647, %v2357
    %vm2417 = vcmp.lt.f32.partialorder %v2416, 0.0004427343
    %v2418 = vsel %vm2417, %v2415, %v2412
    %v2419 = vadd.f32 %v2359, 1.0
    %v2420 = vlog2.pop %v2419
    %v2421 = vmul.f32 %v2420, 0.6931472
    %v2422 = vmul.f32 -0.5, %v2359
    %v2423 = vadd.f32 %v2422, 1.0
    %v2424 = vmul.f32 %v2423, %v2359
    %v2425 = vand.u32 2147483647, %v2359
    %vm2426 = vcmp.lt.f32.partialorder %v2425, 0.0004427343
    %v2427 = vsel %vm2426, %v2424, %v2421
    %v2428 = vadd.f32 %v2361, 1.0
    %v2429 = vlog2.pop %v2428
    %v2430 = vmul.f32 %v2429, 0.6931472
    %v2431 = vmul.f32 -0.5, %v2361
    %v2432 = vadd.f32 %v2431, 1.0
    %v2433 = vmul.f32 %v2432, %v2361
    %v2434 = vand.u32 2147483647, %v2361
    %vm2435 = vcmp.lt.f32.partialorder %v2434, 0.0004427343
    %v2436 = vsel %vm2435, %v2433, %v2430
    %v2437 = vadd.f32 %v2363, 1.0
    %v2438 = vlog2.pop %v2437
    %v2439 = vmul.f32 %v2438, 0.6931472
    %v2440 = vmul.f32 -0.5, %v2363
    %v2441 = vadd.f32 %v2440, 1.0
    %v2442 = vmul.f32 %v2441, %v2363
    %v2443 = vand.u32 2147483647, %v2363
    %vm2444 = vcmp.lt.f32.partialorder %v2443, 0.0004427343
    %v2445 = vsel %vm2444, %v2442, %v2439
    %v2446 = vadd.f32 %v2365, 1.0
    %v2447 = vlog2.pop %v2446
    %v2448 = vmul.f32 %v2447, 0.6931472
    %v2449 = vmul.f32 -0.5, %v2365
    %v2450 = vadd.f32 %v2449, 1.0
    %v2451 = vmul.f32 %v2450, %v2365
    %v2452 = vand.u32 2147483647, %v2365
    %vm2453 = vcmp.lt.f32.partialorder %v2452, 0.0004427343
    %v2454 = vsel %vm2453, %v2451, %v2448
    %v2455 = vadd.f32 %v2367, 1.0
    %v2456 = vlog2.pop %v2455
    %v2457 = vmul.f32 %v2456, 0.6931472
    %v2458 = vmul.f32 -0.5, %v2367
    %v2459 = vadd.f32 %v2458, 1.0
    %v2460 = vmul.f32 %v2459, %v2367
    %v2461 = vand.u32 2147483647, %v2367
    %vm2462 = vcmp.lt.f32.partialorder %v2461, 0.0004427343
    %v2463 = vsel %vm2462, %v2460, %v2457
    %v2464 = vadd.f32 %v2384, %v2400
    %v2465 = vadd.f32 %v2385, %v2409
    %v2466 = vadd.f32 %v2386, %v2418
    %v2467 = vadd.f32 %v2387, %v2427
    %v2468 = vadd.f32 %v2388, %v2436
    %v2469 = vadd.f32 %v2389, %v2445
    %v2470 = vadd.f32 %v2390, %v2454
    %v2471 = vadd.f32 %v2391, %v2463
    %v2472 = vadd.f32 %v2353, 1.0
    %v2473 = vadd.f32 %v2355, 1.0
    %v2474 = vadd.f32 %v2357, 1.0
    %v2475 = vadd.f32 %v2359, 1.0
    %v2476 = vadd.f32 %v2361, 1.0
    %v2477 = vadd.f32 %v2363, 1.0
    %v2478 = vadd.f32 %v2365, 1.0
    %v2479 = vadd.f32 %v2367, 1.0
    %v2480 = vrcp.pop %v2472
    %v2481 = vrcp.pop %v2473
    %v2482 = vrcp.pop %v2474
    %v2483 = vrcp.pop %v2475
    %v2484 = vrcp.pop %v2476
    %v2485 = vrcp.pop %v2477
    %v2486 = vrcp.pop %v2478
    %v2487 = vrcp.pop %v2479
    %vm2488 = vcmp.ge.f32.partialorder %v2320, 0.0
    %vm2489 = vcmp.ge.f32.partialorder %v2321, 0.0
    %vm2490 = vcmp.ge.f32.partialorder %v2322, 0.0
    %vm2491 = vcmp.ge.f32.partialorder %v2323, 0.0
    %vm2492 = vcmp.ge.f32.partialorder %v2324, 0.0
    %vm2493 = vcmp.ge.f32.partialorder %v2325, 0.0
    %vm2494 = vcmp.ge.f32.partialorder %v2326, 0.0
    %vm2495 = vcmp.ge.f32.partialorder %v2327, 0.0
    %v2496 = vmul.f32 %v2353, %v2480
    %v2497 = vmul.f32 %v2355, %v2481
    %v2498 = vmul.f32 %v2357, %v2482
    %v2499 = vmul.f32 %v2359, %v2483
    %v2500 = vmul.f32 %v2361, %v2484
    %v2501 = vmul.f32 %v2363, %v2485
    %v2502 = vmul.f32 %v2365, %v2486
    %v2503 = vmul.f32 %v2367, %v2487
    %v2504 = vsel %vm2488, %v2480, %v2496
    %v2505 = vsel %vm2489, %v2481, %v2497
    %v2506 = vsel %vm2490, %v2482, %v2498
    %v2507 = vsel %vm2491, %v2483, %v2499
    %v2508 = vsel %vm2492, %v2484, %v2500
    %v2509 = vsel %vm2493, %v2485, %v2501
    %v2510 = vsel %vm2494, %v2486, %v2502
    %v2511 = vsel %vm2495, %v2487, %v2503
    %v2512 = vsub.f32 %v2504, %v2328
    %v2513 = vsub.f32 %v2505, %v2329
    %v2514 = vsub.f32 %v2506, %v2330
    %v2515 = vsub.f32 %v2507, %v2331
    %v2516 = vsub.f32 %v2508, %v2332
    %v2517 = vsub.f32 %v2509, %v2333
    %v2518 = vsub.f32 %v2510, %v2334
    %v2519 = vsub.f32 %v2511, %v2335
    %v2520 = vand.u32 2147483647, %v2512
    %v2521 = vand.u32 2147483647, %v2513
    %v2522 = vand.u32 2147483647, %v2514
    %v2523 = vand.u32 2147483647, %v2515
    %v2524 = vand.u32 2147483647, %v2516
    %v2525 = vand.u32 2147483647, %v2517
    %v2526 = vand.u32 2147483647, %v2518
    %v2527 = vand.u32 2147483647, %v2519
    %v2528 = vrsqrt.pop %v2520
    %v2529 = vmul.f32 %v2520, %v2528
    %vm2530 = vcmp.eq.f32.partialorder %v2520, inf
    %v2531 = vsel %vm2530, %v2520, %v2529
    %vm2532 = vcmp.eq.f32.partialorder %v2520, 0.0
    %v2533 = vand.u32 %v2520, 2147483648
    %v2534 = vsel %vm2532, %v2533, %v2531
    %v2535 = vrsqrt.pop %v2521
    %v2536 = vmul.f32 %v2521, %v2535
    %vm2537 = vcmp.eq.f32.partialorder %v2521, inf
    %v2538 = vsel %vm2537, %v2521, %v2536
    %vm2539 = vcmp.eq.f32.partialorder %v2521, 0.0
    %v2540 = vand.u32 %v2521, 2147483648
    %v2541 = vsel %vm2539, %v2540, %v2538
    %v2542 = vrsqrt.pop %v2522
    %v2543 = vmul.f32 %v2522, %v2542
    %vm2544 = vcmp.eq.f32.partialorder %v2522, inf
    %v2545 = vsel %vm2544, %v2522, %v2543
    %vm2546 = vcmp.eq.f32.partialorder %v2522, 0.0
    %v2547 = vand.u32 %v2522, 2147483648
    %v2548 = vsel %vm2546, %v2547, %v2545
    %v2549 = vrsqrt.pop %v2523
    %v2550 = vmul.f32 %v2523, %v2549
    %vm2551 = vcmp.eq.f32.partialorder %v2523, inf
    %v2552 = vsel %vm2551, %v2523, %v2550
    %vm2553 = vcmp.eq.f32.partialorder %v2523, 0.0
    %v2554 = vand.u32 %v2523, 2147483648
    %v2555 = vsel %vm2553, %v2554, %v2552
    %v2556 = vrsqrt.pop %v2524
    %v2557 = vmul.f32 %v2524, %v2556
    %vm2558 = vcmp.eq.f32.partialorder %v2524, inf
    %v2559 = vsel %vm2558, %v2524, %v2557
    %vm2560 = vcmp.eq.f32.partialorder %v2524, 0.0
    %v2561 = vand.u32 %v2524, 2147483648
    %v2562 = vsel %vm2560, %v2561, %v2559
    %v2563 = vrsqrt.pop %v2525
    %v2564 = vmul.f32 %v2525, %v2563
    %vm2565 = vcmp.eq.f32.partialorder %v2525, inf
    %v2566 = vsel %vm2565, %v2525, %v2564
    %vm2567 = vcmp.eq.f32.partialorder %v2525, 0.0
    %v2568 = vand.u32 %v2525, 2147483648
    %v2569 = vsel %vm2567, %v2568, %v2566
    %v2570 = vrsqrt.pop %v2526
    %v2571 = vmul.f32 %v2526, %v2570
    %vm2572 = vcmp.eq.f32.partialorder %v2526, inf
    %v2573 = vsel %vm2572, %v2526, %v2571
    %vm2574 = vcmp.eq.f32.partialorder %v2526, 0.0
    %v2575 = vand.u32 %v2526, 2147483648
    %v2576 = vsel %vm2574, %v2575, %v2573
    %v2577 = vrsqrt.pop %v2527
    %v2578 = vmul.f32 %v2527, %v2577
    %vm2579 = vcmp.eq.f32.partialorder %v2527, inf
    %v2580 = vsel %vm2579, %v2527, %v2578
    %vm2581 = vcmp.eq.f32.partialorder %v2527, 0.0
    %v2582 = vand.u32 %v2527, 2147483648
    %v2583 = vsel %vm2581, %v2582, %v2580
    %v2584 = vmul.f32 %v2520, %v2534
    %v2585 = vmul.f32 %v2521, %v2541
    %v2586 = vmul.f32 %v2522, %v2548
    %v2587 = vmul.f32 %v2523, %v2555
    %v2588 = vmul.f32 %v2524, %v2562
    %v2589 = vmul.f32 %v2525, %v2569
    %v2590 = vmul.f32 %v2526, %v2576
    %v2591 = vmul.f32 %v2527, %v2583
    %v2592 = vadd.f32 %v2464, %v2465
    %v2593 = vadd.f32 %v2592, %v2466
    %v2594 = vadd.f32 %v2593, %v2467
    %v2595 = vadd.f32 %v2594, %v2468
    %v2596 = vadd.f32 %v2595, %v2469
    %v2597 = vadd.f32 %v2596, %v2470
    %v2598 = vadd.f32 %v2597, %v2471
    %v2599 = vadd.f32 %v2584, %v2585
    %v2600 = vadd.f32 %v2599, %v2586
    %v2601 = vadd.f32 %v2600, %v2587
    %v2602 = vadd.f32 %v2601, %v2588
    %v2603 = vadd.f32 %v2602, %v2589
    %v2604 = vadd.f32 %v2603, %v2590
    %v2605 = vadd.f32 %v2604, %v2591
    %v2606 = vmul.f32 %v2504, %v2504
    %v2607 = vmul.f32 %v2505, %v2505
    %v2608 = vmul.f32 %v2506, %v2506
    %v2609 = vmul.f32 %v2507, %v2507
    %v2610 = vmul.f32 %v2508, %v2508
    %v2611 = vmul.f32 %v2509, %v2509
    %v2612 = vmul.f32 %v2510, %v2510
    %v2613 = vmul.f32 %v2511, %v2511
    %v2614 = vadd.f32 %v2606, %v2607
    %v2615 = vadd.f32 %v2614, %v2608
    %v2616 = vadd.f32 %v2615, %v2609
    %v2617 = vadd.f32 %v2616, %v2610
    %v2618 = vadd.f32 %v2617, %v2611
    %v2619 = vadd.f32 %v2618, %v2612
    %v2620 = vadd.f32 %v2619, %v2613
    %v2621 = vmul.f32 %v2328, %v2328
    %v2622 = vmul.f32 %v2329, %v2329
    %v2623 = vmul.f32 %v2330, %v2330
    %v2624 = vmul.f32 %v2331, %v2331
    %v2625 = vmul.f32 %v2332, %v2332
    %v2626 = vmul.f32 %v2333, %v2333
    %v2627 = vmul.f32 %v2334, %v2334
    %v2628 = vmul.f32 %v2335, %v2335
    %v2629 = vadd.f32 %v2621, %v2622
    %v2630 = vadd.f32 %v2629, %v2623
    %v2631 = vadd.f32 %v2630, %v2624
    %v2632 = vadd.f32 %v2631, %v2625
    %v2633 = vadd.f32 %v2632, %v2626
    %v2634 = vadd.f32 %v2633, %v2627
    %v2635 = vadd.f32 %v2634, %v2628
    %v2636 = vadd.f32 %v2316, %v2598
    %v2637 = vadd.f32 %v2317, %v2605
    %v2638 = vadd.f32 %v2318, %v2620
    %v2639 = vadd.f32 %v2319, %v2635
    %v2640 = vld [vmem:[#allocation7] sm:$0xff]
    %v2641 = vadd.f32 %v2640, %v2636
    %2642 = vst [vmem:[#allocation7] sm:$0xff] %v2641
    %v2643 = vld [vmem:[#allocation7 + $0x8] sm:$0xff]
    %v2644 = vadd.f32 %v2643, %v2637
    %2645 = vst [vmem:[#allocation7 + $0x8] sm:$0xff] %v2644
    %v2646 = vld [vmem:[#allocation7 + $0x10] sm:$0xff]
    %v2647 = vadd.f32 %v2646, %v2638
    %2648 = vst [vmem:[#allocation7 + $0x10] sm:$0xff] %v2647
    %v2649 = vld [vmem:[#allocation7 + $0x18] sm:$0xff]
    %v2650 = vadd.f32 %v2649, %v2639
    %2651 = vst [vmem:[#allocation7 + $0x18] sm:$0xff] %v2650
    // Predicated region
    $region22: #{tpu_custom_call.1} parent=1 // pred_check
      _
    $region23: #{tpu_custom_call.1} parent=1 // pred_check_branch
      %2653 = sbr.rel (0) target = $region25
    $region24: #{tpu_custom_call.1} parent=1 // pred_region
      %s2655 = ssub.s32 512, 512
      %2656 = vsyncadd [#allocation4], %s2655
      %s2657 = sshll.u32 [#allocation7], 4
      %s2658 = int_to_ptr.vmem [resolvable:$true] %s2657
      %2663 = dma.vmem_to_hbm [thread:$0]  %s2658, 512, %s2, [#allocation4], 128, 128, 8
    $region25: #{tpu_custom_call.1} parent=1 // pred_fallthru
      _
    // Predicated region
    $region26: #{tpu_custom_call.1} parent=1 // pred_check
      _
    $region27: #{tpu_custom_call.1} parent=1 // pred_check_branch
      %2665 = sbr.rel (0) target = $region29
    $region28: #{tpu_custom_call.1} parent=1 // pred_region
      %2666 = dma.done [#allocation4], 512
    $region29: #{tpu_custom_call.1} parent=1 // pred_fallthru
      _
    %2667 = vsyncpa [#allocation3], 1
    %2668 = vsyncpa [#allocation6], 1
    %2669 = vsyncpa [#allocation4], 1

</llo_original>
